<compile_context>
chip_gen: v5e
topology: v5e:2x2
jax: 0.10.0
libtpu: 0.0.40
codegen_flags: <defaults>
</compile_context>

<pallas_src>
import jax
import jax.numpy as jnp
from jax import lax
from jax.experimental import pallas as pl
from jax.experimental.pallas import tpu as pltpu

H_REAL = 64      # GRU hidden_dim in the reference module
E_REAL = 64      # embedding_dim in the reference module
HP = 128         # hidden padded to one full 128-lane vreg block
EP = 128         # embedding padded to 128 lanes


# -----------------------------------------------------------------------------
# Single fused kernel: embedding -> masked GRU -> fc -> drug fusion MLP ->
# cell MLP -> linear1/linear2 bottleneck -> 8-way feature mix -> regression.
# -----------------------------------------------------------------------------
def deepkgi_kernel(seq_ref, len_ref, xg_ref, xc_ref,
                   emb_ref, wih_ref, whh_ref, bih_ref, bhh_ref,
                   fcw_ref, fcb_ref,
                   wf1g_ref, wf1s_ref, bf1_ref, wf2_ref, bf2_ref,
                   wc1_ref, bc1_ref, wc2_ref, bc2_ref,
                   wl1_ref, wl2_ref,
                   wr1_ref, br1_ref, wr2_ref, br2_ref, wr3_ref, br3_ref,
                   out_ref):
    f32 = jnp.float32
    relu = lambda v: jnp.maximum(v, 0.0)
    lrelu = lambda v: jnp.where(v > 0.0, v, 0.1 * v)     # nn.LeakyReLU(0.1)

    B = len_ref.shape[0]
    TB = seq_ref.shape[0]
    T = TB // B
    Hp = whh_ref.shape[0]
    vocab = emb_ref.shape[0]

    # ---- embedding lookup as one-hot @ table (gather-free, runs on MXU) ----
    ids = seq_ref[...]                                                  # [T*B,1]
    iota = lax.broadcasted_iota(jnp.int32, (TB, vocab), 1)
    onehot = (ids == iota).astype(f32)                                  # [T*B,V]
    emb_all = jnp.dot(onehot, emb_ref[...],
                      preferred_element_type=f32)                       # [T*B,EP]

    # ---- hoisted input projection: ONE matmul for all timesteps ----
    gi_all = (jnp.dot(emb_all, wih_ref[...], preferred_element_type=f32)
              + bih_ref[...])                                           # [T*B,3Hp]

    whh = whh_ref[...]
    bhh = bhh_ref[...]
    lengths = len_ref[...]                                              # [B,1]

    # ---- GRU recurrence, fully unrolled; only h @ whh is on the serial path ----
    h = jnp.zeros((B, Hp), f32)
    for t in range(T):                       # T is static -> full unroll
        gi = gi_all[t * B:(t + 1) * B, :]    # static sublane slice
        gh = jnp.dot(h, whh, preferred_element_type=f32) + bhh
        r = jax.nn.sigmoid(gi[:, 0:Hp] + gh[:, 0:Hp])
        z = jax.nn.sigmoid(gi[:, Hp:2 * Hp] + gh[:, Hp:2 * Hp])
        n = jnp.tanh(gi[:, 2 * Hp:3 * Hp] + r * gh[:, 2 * Hp:3 * Hp])
        h_new = (1.0 - z) * n + z * h
        # pack_padded_sequence semantics: hidden freezes once t >= length
        h = jnp.where(t < lengths, h_new, h)

    # ---- drug sequence fc (output lane-padded to 128; pad lanes are zero) ----
    xs = jnp.dot(h, fcw_ref[...], preferred_element_type=f32) + fcb_ref[...]

    # ---- drug_feature_fusion: cat([xg, xs]) @ W  ==  xg @ Wg + xs @ Ws ----
    h1 = relu(jnp.dot(xg_ref[...], wf1g_ref[...], preferred_element_type=f32)
              + jnp.dot(xs, wf1s_ref[...], preferred_element_type=f32)
              + bf1_ref[...])
    x_drug = relu(jnp.dot(h1, wf2_ref[...], preferred_element_type=f32)
                  + bf2_ref[...])                                       # [B,128]

    # ---- cell embedding MLP ----
    hc = relu(jnp.dot(xc_ref[...], wc1_ref[...], preferred_element_type=f32)
              + bc1_ref[...])
    x_cell = relu(jnp.dot(hc, wc2_ref[...], preferred_element_type=f32)
                  + bc2_ref[...])                                       # [B,128]

    # ---- bottleneck: linear1 (128->64), linear2 (64->128), no bias.
    #      x_mid is lane-padded 64->128 (pad cols/rows of wl1/wl2 are zero). ----
    x_mid = jnp.dot(x_drug, wl1_ref[...], preferred_element_type=f32)   # [B,128]
    x_ = jnp.dot(x_mid, wl2_ref[...], preferred_element_type=f32)       # [B,128]

    # ---- 8-way concat @ wr1 rewritten as 8 row-block matmuls accumulated
    #      into a single f32 accumulator (no VMEM concat copies). ----
    chunks = (x_cell * x_, x_cell + x_, x_, x_mid, x_drug, x_cell,
              x_cell + x_drug, x_cell * x_drug)
    acc = br1_ref[...]
    for i, c in enumerate(chunks):
        acc = acc + jnp.dot(c, wr1_ref[i], preferred_element_type=f32)

    # ---- regression MLP with LeakyReLU(0.1); dropout == identity ----
    r1 = lrelu(acc)
    r2 = lrelu(jnp.dot(r1, wr2_ref[...], preferred_element_type=f32)
               + br2_ref[...])
    out_ref[...] = (jnp.dot(r2, wr3_ref[...], preferred_element_type=f32)
                    + br3_ref[...])


def run_deepkgi(seq_tb, lengths, xg_pad, xc, p):
    B = lengths.shape[0]
    vmem = pl.BlockSpec(memory_space=pltpu.MemorySpace.VMEM)
    args = (seq_tb, lengths, xg_pad, xc,
            p["emb"], p["wih"], p["whh"], p["bih"], p["bhh"],
            p["fcw"], p["fcb"],
            p["wf1g"], p["wf1s"], p["bf1"], p["wf2"], p["bf2"],
            p["wc1"], p["bc1"], p["wc2"], p["bc2"],
            p["wl1"], p["wl2"],
            p["wr1"], p["br1"], p["wr2"], p["br2"], p["wr3"], p["br3"])
    return pl.pallas_call(
        deepkgi_kernel,
        out_shape=jax.ShapeDtypeStruct((B, 1), jnp.float32),
        in_specs=[vmem] * len(args),
        out_specs=vmem,
    )(*args)


# -----------------------------------------------------------------------------
# Parameter construction: real-width weights embedded in zero-padded,
# 128-lane-aligned containers (math identical to the unpadded model).
# -----------------------------------------------------------------------------
def make_params(key, vocab, dg_dim, dc_dim):
    ks = iter(jax.random.split(key, 48))
    rnd = lambda shape: 0.1 * jax.random.normal(next(ks), shape, jnp.float32)
    H, E = H_REAL, E_REAL
    dg_pad = -(-dg_dim // 128) * 128

    # embedding (padding_idx=0 row is zero), lane-padded E -> EP
    emb = jnp.zeros((vocab, EP), jnp.float32).at[:, :E].set(rnd((vocab, E)))
    emb = emb.at[0].set(0.0)

    # GRU weights, PyTorch gate order (r, z, n), pre-transposed for x @ W,
    # each gate stored in its own 128-lane block.
    def pad_gate_w(w_real, rows_real, rows_pad):
        w = jnp.zeros((rows_pad, 3 * HP), jnp.float32)
        for g in range(3):
            w = w.at[:rows_real, g * HP:g * HP + H].set(
                w_real[:, g * H:(g + 1) * H])
        return w

    def pad_gate_b(b_real):
        b = jnp.zeros((1, 3 * HP), jnp.float32)
        for g in range(3):
            b = b.at[:, g * HP:g * HP + H].set(b_real[:, g * H:(g + 1) * H])
        return b

    wih = pad_gate_w(rnd((E, 3 * H)), E, EP)
    whh = pad_gate_w(rnd((H, 3 * H)), H, HP)
    bih = pad_gate_b(rnd((1, 3 * H)))
    bhh = pad_gate_b(rnd((1, 3 * H)))

    # sequence-encoder fc: real [H,H] embedded in [HP,128]
    fcw = jnp.zeros((HP, 128), jnp.float32).at[:H, :H].set(rnd((H, H)))
    fcb = jnp.zeros((1, 128), jnp.float32).at[:, :H].set(rnd((1, H)))

    # drug_feature_fusion Linear(dg_dim + 64, 512) split into row blocks
    wf1g = jnp.zeros((dg_pad, 512), jnp.float32).at[:dg_dim].set(
        rnd((dg_dim, 512)))
    wf1s = jnp.zeros((128, 512), jnp.float32).at[:H].set(rnd((H, 512)))
    bf1 = rnd((1, 512))
    wf2, bf2 = rnd((512, 128)), rnd((1, 128))

    # cell_emb MLP
    wc1, bc1 = rnd((dc_dim, 512)), rnd((1, 512))
    wc2, bc2 = rnd((512, 128)), rnd((1, 128))

    # linear1 (128->64) / linear2 (64->128), no bias, padded to 128 lanes
    wl1 = jnp.zeros((128, 128), jnp.float32).at[:, :64].set(rnd((128, 64)))
    wl2 = jnp.zeros((128, 128), jnp.float32).at[:64, :].set(rnd((64, 128)))

    # regression first layer as 8 row blocks of [128, 256]
    # (block 3 corresponds to the 64-wide x_mid chunk; its pad rows are zero)
    wr1 = jnp.zeros((8, 128, 256), jnp.float32)
    for i in range(8):
        rows = 64 if i == 3 else 128
        wr1 = wr1.at[i, :rows, :].set(rnd((rows, 256)))
    br1 = rnd((1, 256))
    wr2, br2 = rnd((256, 128)), rnd((1, 128))
    wr3, br3 = rnd((128, 1)), rnd((1, 1))

    return dict(emb=emb, wih=wih, whh=whh, bih=bih, bhh=bhh, fcw=fcw, fcb=fcb,
                wf1g=wf1g, wf1s=wf1s, bf1=bf1, wf2=wf2, bf2=bf2,
                wc1=wc1, bc1=bc1, wc2=wc2, bc2=bc2, wl1=wl1, wl2=wl2,
                wr1=wr1, br1=br1, wr2=wr2, br2=br2, wr3=wr3, br3=br3)


@jax.jit
def deepkgi_forward(sequences, x_drug_graph, x_cell_raw, params):
    B, T = sequences.shape
    # tiny scalar glue only: time-major flatten of token ids, lengths, lane pad
    seq_tb = jnp.transpose(sequences).reshape(T * B, 1).astype(jnp.int32)
    lengths = (sequences != 0).sum(axis=1).astype(jnp.int32).reshape(B, 1)
    dg_pad = params["wf1g"].shape[0]
    xg_pad = jnp.zeros((B, dg_pad), jnp.float32).at[
        :, :x_drug_graph.shape[1]].set(x_drug_graph.astype(jnp.float32))
    return run_deepkgi(seq_tb, lengths, xg_pad,
                       x_cell_raw.astype(jnp.float32), params)


if __name__ == "__main__":
    key = jax.random.PRNGKey(0)
    k_p, k_g, k_c, k_s = jax.random.split(key, 4)

    # small-shape config consistent with the module
    B, T, VOCAB = 2, 16, 32
    DIM_DRUG, DIM_CELL, FINAL_NODE = 8, 8, 16
    DG_DIM = DIM_DRUG * 9            # 72  (GNN_drug output width)
    DC_DIM = DIM_CELL * FINAL_NODE   # 128 (GNN_cell output width)

    params = make_params(k_p, VOCAB, DG_DIM, DC_DIM)

    x_drug_graph = jax.random.normal(k_g, (B, DG_DIM), jnp.float32)
    x_cell_raw = jax.random.normal(k_c, (B, DC_DIM), jnp.float32)

    # token id sequences: nonzero tokens up to each length, zero-padded after
    lengths = jnp.array([10, 7], dtype=jnp.int32)
    raw_ids = jax.random.randint(k_s, (B, T), 4, VOCAB, dtype=jnp.int32)
    valid = jnp.arange(T)[None, :] < lengths[:, None]
    sequences = jnp.where(valid, raw_ids, 0)

    out = deepkgi_forward(sequences, x_drug_graph, x_cell_raw, params)
    jax.block_until_ready(out)
    assert out.shape == (B, 1)
    print("KERNEL_OK")
</pallas_src>

<mosaic_0001>
module attributes {stable_mosaic.version = 11 : i64} {
  func.func @deepkgi_kernel(%arg0: memref<32x1xi32, #tpu.memory_space<vmem>>, %arg1: memref<2x1xi32, #tpu.memory_space<vmem>>, %arg2: memref<2x128xf32, #tpu.memory_space<vmem>>, %arg3: memref<2x128xf32, #tpu.memory_space<vmem>>, %arg4: memref<32x128xf32, #tpu.memory_space<vmem>>, %arg5: memref<128x384xf32, #tpu.memory_space<vmem>>, %arg6: memref<128x384xf32, #tpu.memory_space<vmem>>, %arg7: memref<1x384xf32, #tpu.memory_space<vmem>>, %arg8: memref<1x384xf32, #tpu.memory_space<vmem>>, %arg9: memref<128x128xf32, #tpu.memory_space<vmem>>, %arg10: memref<1x128xf32, #tpu.memory_space<vmem>>, %arg11: memref<128x512xf32, #tpu.memory_space<vmem>>, %arg12: memref<128x512xf32, #tpu.memory_space<vmem>>, %arg13: memref<1x512xf32, #tpu.memory_space<vmem>>, %arg14: memref<512x128xf32, #tpu.memory_space<vmem>>, %arg15: memref<1x128xf32, #tpu.memory_space<vmem>>, %arg16: memref<128x512xf32, #tpu.memory_space<vmem>>, %arg17: memref<1x512xf32, #tpu.memory_space<vmem>>, %arg18: memref<512x128xf32, #tpu.memory_space<vmem>>, %arg19: memref<1x128xf32, #tpu.memory_space<vmem>>, %arg20: memref<128x128xf32, #tpu.memory_space<vmem>>, %arg21: memref<128x128xf32, #tpu.memory_space<vmem>>, %arg22: memref<8x128x256xf32, #tpu.memory_space<vmem>>, %arg23: memref<1x256xf32, #tpu.memory_space<vmem>>, %arg24: memref<256x128xf32, #tpu.memory_space<vmem>>, %arg25: memref<1x128xf32, #tpu.memory_space<vmem>>, %arg26: memref<128x1xf32, #tpu.memory_space<vmem>>, %arg27: memref<1x1xf32, #tpu.memory_space<vmem>>, %arg28: memref<2x1xf32, #tpu.memory_space<vmem>>) attributes {dimension_semantics = [], scalar_prefetch = 0 : i64, scratch_operands = 0 : i64, tpu.core_type = #tpu.core_type<tc>} {
    %c0 = arith.constant 0 : index
    %c0_0 = arith.constant 0 : index
    %0 = vector.load %arg0[%c0, %c0_0] : memref<32x1xi32, #tpu.memory_space<vmem>>, vector<32x1xi32>
    %1 = tpu.iota {dimensions = array<i32: 1>} : vector<32x32xi32>
    %2 = vector.broadcast %0 : vector<32x1xi32> to vector<32x32xi32>
    %3 = arith.cmpi eq, %2, %1 : vector<32x32xi32>
    %4 = arith.extui %3 : vector<32x32xi1> to vector<32x32xi32>
    %5 = arith.sitofp %4 : vector<32x32xi32> to vector<32x32xf32>
    %c0_1 = arith.constant 0 : index
    %c0_2 = arith.constant 0 : index
    %6 = vector.load %arg4[%c0_1, %c0_2] : memref<32x128xf32, #tpu.memory_space<vmem>>, vector<32x128xf32>
    %cst = arith.constant dense<0.000000e+00> : vector<32x128xf32>
    %7 = tpu.matmul %5, %6, %cst {dimension_numbers = #tpu.dot_dimension_numbers<[1], [0], [0], [1], [0, 0, 1, 1], [], []>} : vector<32x32xf32>, vector<32x128xf32>, vector<32x128xf32> -> vector<32x128xf32>
    %c0_3 = arith.constant 0 : index
    %c0_4 = arith.constant 0 : index
    %8 = vector.load %arg5[%c0_3, %c0_4] : memref<128x384xf32, #tpu.memory_space<vmem>>, vector<128x384xf32>
    %cst_5 = arith.constant dense<0.000000e+00> : vector<32x384xf32>
    %9 = tpu.matmul %7, %8, %cst_5 {dimension_numbers = #tpu.dot_dimension_numbers<[1], [0], [0], [1], [0, 0, 1, 1], [], []>} : vector<32x128xf32>, vector<128x384xf32>, vector<32x384xf32> -> vector<32x384xf32>
    %c0_6 = arith.constant 0 : index
    %c0_7 = arith.constant 0 : index
    %10 = vector.load %arg7[%c0_6, %c0_7] : memref<1x384xf32, #tpu.memory_space<vmem>>, vector<1x384xf32>
    %11 = vector.broadcast %10 : vector<1x384xf32> to vector<32x384xf32>
    %12 = arith.addf %9, %11 : vector<32x384xf32>
    %c0_8 = arith.constant 0 : index
    %c0_9 = arith.constant 0 : index
    %13 = vector.load %arg6[%c0_8, %c0_9] : memref<128x384xf32, #tpu.memory_space<vmem>>, vector<128x384xf32>
    %c0_10 = arith.constant 0 : index
    %c0_11 = arith.constant 0 : index
    %14 = vector.load %arg8[%c0_10, %c0_11] : memref<1x384xf32, #tpu.memory_space<vmem>>, vector<1x384xf32>
    %c0_12 = arith.constant 0 : index
    %c0_13 = arith.constant 0 : index
    %15 = vector.load %arg1[%c0_12, %c0_13] : memref<2x1xi32, #tpu.memory_space<vmem>>, vector<2x1xi32>
    %cst_14 = arith.constant 0.000000e+00 : f32
    %16 = vector.broadcast %cst_14 : f32 to vector<2x128xf32>
    %17 = vector.extract_strided_slice %12 {offsets = [0, 0], sizes = [2, 384], strides = [1, 1]} : vector<32x384xf32> to vector<2x384xf32>
    %cst_15 = arith.constant dense<0.000000e+00> : vector<2x384xf32>
    %18 = tpu.matmul %16, %13, %cst_15 {dimension_numbers = #tpu.dot_dimension_numbers<[1], [0], [0], [1], [0, 0, 1, 1], [], []>} : vector<2x128xf32>, vector<128x384xf32>, vector<2x384xf32> -> vector<2x384xf32>
    %19 = vector.broadcast %14 : vector<1x384xf32> to vector<2x384xf32>
    %20 = arith.addf %18, %19 : vector<2x384xf32>
    %21 = vector.extract_strided_slice %17 {offsets = [0, 0], sizes = [2, 128], strides = [1, 1]} : vector<2x384xf32> to vector<2x128xf32>
    %22 = vector.extract_strided_slice %20 {offsets = [0, 0], sizes = [2, 128], strides = [1, 1]} : vector<2x384xf32> to vector<2x128xf32>
    %23 = arith.addf %21, %22 : vector<2x128xf32>
    %24 = arith.negf %23 : vector<2x128xf32>
    %25 = math.exp %24 : vector<2x128xf32>
    %cst_16 = arith.constant 1.000000e+00 : f32
    %26 = vector.broadcast %cst_16 : f32 to vector<2x128xf32>
    %27 = arith.addf %26, %25 : vector<2x128xf32>
    %28 = arith.divf %26, %27 : vector<2x128xf32>
    %29 = vector.extract_strided_slice %17 {offsets = [0, 128], sizes = [2, 128], strides = [1, 1]} : vector<2x384xf32> to vector<2x128xf32>
    %30 = vector.extract_strided_slice %20 {offsets = [0, 128], sizes = [2, 128], strides = [1, 1]} : vector<2x384xf32> to vector<2x128xf32>
    %31 = arith.addf %29, %30 : vector<2x128xf32>
    %32 = arith.negf %31 : vector<2x128xf32>
    %33 = math.exp %32 : vector<2x128xf32>
    %cst_17 = arith.constant 1.000000e+00 : f32
    %34 = vector.broadcast %cst_17 : f32 to vector<2x128xf32>
    %35 = arith.addf %34, %33 : vector<2x128xf32>
    %36 = arith.divf %34, %35 : vector<2x128xf32>
    %37 = vector.extract_strided_slice %17 {offsets = [0, 256], sizes = [2, 128], strides = [1, 1]} : vector<2x384xf32> to vector<2x128xf32>
    %38 = vector.extract_strided_slice %20 {offsets = [0, 256], sizes = [2, 128], strides = [1, 1]} : vector<2x384xf32> to vector<2x128xf32>
    %39 = arith.mulf %28, %38 : vector<2x128xf32>
    %40 = arith.addf %37, %39 : vector<2x128xf32>
    %41 = math.tanh %40 : vector<2x128xf32>
    %cst_18 = arith.constant 1.000000e+00 : f32
    %42 = vector.broadcast %cst_18 : f32 to vector<2x128xf32>
    %43 = arith.subf %42, %36 : vector<2x128xf32>
    %44 = arith.mulf %43, %41 : vector<2x128xf32>
    %45 = arith.mulf %36, %16 : vector<2x128xf32>
    %46 = arith.addf %44, %45 : vector<2x128xf32>
    %c0_i32 = arith.constant 0 : i32
    %47 = vector.broadcast %c0_i32 : i32 to vector<2x1xi32>
    %48 = arith.cmpi sgt, %15, %47 : vector<2x1xi32>
    %49 = vector.shape_cast %48 : vector<2x1xi1> to vector<2x1xi1>
    %50 = vector.broadcast %49 : vector<2x1xi1> to vector<2x128xi1>
    %51 = arith.select %50, %46, %16 : vector<2x128xi1>, vector<2x128xf32>
    %52 = vector.extract_strided_slice %12 {offsets = [2, 0], sizes = [2, 384], strides = [1, 1]} : vector<32x384xf32> to vector<2x384xf32>
    %cst_19 = arith.constant dense<0.000000e+00> : vector<2x384xf32>
    %53 = tpu.matmul %51, %13, %cst_19 {dimension_numbers = #tpu.dot_dimension_numbers<[1], [0], [0], [1], [0, 0, 1, 1], [], []>} : vector<2x128xf32>, vector<128x384xf32>, vector<2x384xf32> -> vector<2x384xf32>
    %54 = vector.broadcast %14 : vector<1x384xf32> to vector<2x384xf32>
    %55 = arith.addf %53, %54 : vector<2x384xf32>
    %56 = vector.extract_strided_slice %52 {offsets = [0, 0], sizes = [2, 128], strides = [1, 1]} : vector<2x384xf32> to vector<2x128xf32>
    %57 = vector.extract_strided_slice %55 {offsets = [0, 0], sizes = [2, 128], strides = [1, 1]} : vector<2x384xf32> to vector<2x128xf32>
    %58 = arith.addf %56, %57 : vector<2x128xf32>
    %59 = arith.negf %58 : vector<2x128xf32>
    %60 = math.exp %59 : vector<2x128xf32>
    %cst_20 = arith.constant 1.000000e+00 : f32
    %61 = vector.broadcast %cst_20 : f32 to vector<2x128xf32>
    %62 = arith.addf %61, %60 : vector<2x128xf32>
    %63 = arith.divf %61, %62 : vector<2x128xf32>
    %64 = vector.extract_strided_slice %52 {offsets = [0, 128], sizes = [2, 128], strides = [1, 1]} : vector<2x384xf32> to vector<2x128xf32>
    %65 = vector.extract_strided_slice %55 {offsets = [0, 128], sizes = [2, 128], strides = [1, 1]} : vector<2x384xf32> to vector<2x128xf32>
    %66 = arith.addf %64, %65 : vector<2x128xf32>
    %67 = arith.negf %66 : vector<2x128xf32>
    %68 = math.exp %67 : vector<2x128xf32>
    %cst_21 = arith.constant 1.000000e+00 : f32
    %69 = vector.broadcast %cst_21 : f32 to vector<2x128xf32>
    %70 = arith.addf %69, %68 : vector<2x128xf32>
    %71 = arith.divf %69, %70 : vector<2x128xf32>
    %72 = vector.extract_strided_slice %52 {offsets = [0, 256], sizes = [2, 128], strides = [1, 1]} : vector<2x384xf32> to vector<2x128xf32>
    %73 = vector.extract_strided_slice %55 {offsets = [0, 256], sizes = [2, 128], strides = [1, 1]} : vector<2x384xf32> to vector<2x128xf32>
    %74 = arith.mulf %63, %73 : vector<2x128xf32>
    %75 = arith.addf %72, %74 : vector<2x128xf32>
    %76 = math.tanh %75 : vector<2x128xf32>
    %cst_22 = arith.constant 1.000000e+00 : f32
    %77 = vector.broadcast %cst_22 : f32 to vector<2x128xf32>
    %78 = arith.subf %77, %71 : vector<2x128xf32>
    %79 = arith.mulf %78, %76 : vector<2x128xf32>
    %80 = arith.mulf %71, %51 : vector<2x128xf32>
    %81 = arith.addf %79, %80 : vector<2x128xf32>
    %c1_i32 = arith.constant 1 : i32
    %82 = vector.broadcast %c1_i32 : i32 to vector<2x1xi32>
    %83 = arith.cmpi sgt, %15, %82 : vector<2x1xi32>
    %84 = vector.shape_cast %83 : vector<2x1xi1> to vector<2x1xi1>
    %85 = vector.broadcast %84 : vector<2x1xi1> to vector<2x128xi1>
    %86 = arith.select %85, %81, %51 : vector<2x128xi1>, vector<2x128xf32>
    %87 = vector.extract_strided_slice %12 {offsets = [4, 0], sizes = [2, 384], strides = [1, 1]} : vector<32x384xf32> to vector<2x384xf32>
    %cst_23 = arith.constant dense<0.000000e+00> : vector<2x384xf32>
    %88 = tpu.matmul %86, %13, %cst_23 {dimension_numbers = #tpu.dot_dimension_numbers<[1], [0], [0], [1], [0, 0, 1, 1], [], []>} : vector<2x128xf32>, vector<128x384xf32>, vector<2x384xf32> -> vector<2x384xf32>
    %89 = vector.broadcast %14 : vector<1x384xf32> to vector<2x384xf32>
    %90 = arith.addf %88, %89 : vector<2x384xf32>
    %91 = vector.extract_strided_slice %87 {offsets = [0, 0], sizes = [2, 128], strides = [1, 1]} : vector<2x384xf32> to vector<2x128xf32>
    %92 = vector.extract_strided_slice %90 {offsets = [0, 0], sizes = [2, 128], strides = [1, 1]} : vector<2x384xf32> to vector<2x128xf32>
    %93 = arith.addf %91, %92 : vector<2x128xf32>
    %94 = arith.negf %93 : vector<2x128xf32>
    %95 = math.exp %94 : vector<2x128xf32>
    %cst_24 = arith.constant 1.000000e+00 : f32
    %96 = vector.broadcast %cst_24 : f32 to vector<2x128xf32>
    %97 = arith.addf %96, %95 : vector<2x128xf32>
    %98 = arith.divf %96, %97 : vector<2x128xf32>
    %99 = vector.extract_strided_slice %87 {offsets = [0, 128], sizes = [2, 128], strides = [1, 1]} : vector<2x384xf32> to vector<2x128xf32>
    %100 = vector.extract_strided_slice %90 {offsets = [0, 128], sizes = [2, 128], strides = [1, 1]} : vector<2x384xf32> to vector<2x128xf32>
    %101 = arith.addf %99, %100 : vector<2x128xf32>
    %102 = arith.negf %101 : vector<2x128xf32>
    %103 = math.exp %102 : vector<2x128xf32>
    %cst_25 = arith.constant 1.000000e+00 : f32
    %104 = vector.broadcast %cst_25 : f32 to vector<2x128xf32>
    %105 = arith.addf %104, %103 : vector<2x128xf32>
    %106 = arith.divf %104, %105 : vector<2x128xf32>
    %107 = vector.extract_strided_slice %87 {offsets = [0, 256], sizes = [2, 128], strides = [1, 1]} : vector<2x384xf32> to vector<2x128xf32>
    %108 = vector.extract_strided_slice %90 {offsets = [0, 256], sizes = [2, 128], strides = [1, 1]} : vector<2x384xf32> to vector<2x128xf32>
    %109 = arith.mulf %98, %108 : vector<2x128xf32>
    %110 = arith.addf %107, %109 : vector<2x128xf32>
    %111 = math.tanh %110 : vector<2x128xf32>
    %cst_26 = arith.constant 1.000000e+00 : f32
    %112 = vector.broadcast %cst_26 : f32 to vector<2x128xf32>
    %113 = arith.subf %112, %106 : vector<2x128xf32>
    %114 = arith.mulf %113, %111 : vector<2x128xf32>
    %115 = arith.mulf %106, %86 : vector<2x128xf32>
    %116 = arith.addf %114, %115 : vector<2x128xf32>
    %c2_i32 = arith.constant 2 : i32
    %117 = vector.broadcast %c2_i32 : i32 to vector<2x1xi32>
    %118 = arith.cmpi sgt, %15, %117 : vector<2x1xi32>
    %119 = vector.shape_cast %118 : vector<2x1xi1> to vector<2x1xi1>
    %120 = vector.broadcast %119 : vector<2x1xi1> to vector<2x128xi1>
    %121 = arith.select %120, %116, %86 : vector<2x128xi1>, vector<2x128xf32>
    %122 = vector.extract_strided_slice %12 {offsets = [6, 0], sizes = [2, 384], strides = [1, 1]} : vector<32x384xf32> to vector<2x384xf32>
    %cst_27 = arith.constant dense<0.000000e+00> : vector<2x384xf32>
    %123 = tpu.matmul %121, %13, %cst_27 {dimension_numbers = #tpu.dot_dimension_numbers<[1], [0], [0], [1], [0, 0, 1, 1], [], []>} : vector<2x128xf32>, vector<128x384xf32>, vector<2x384xf32> -> vector<2x384xf32>
    %124 = vector.broadcast %14 : vector<1x384xf32> to vector<2x384xf32>
    %125 = arith.addf %123, %124 : vector<2x384xf32>
    %126 = vector.extract_strided_slice %122 {offsets = [0, 0], sizes = [2, 128], strides = [1, 1]} : vector<2x384xf32> to vector<2x128xf32>
    %127 = vector.extract_strided_slice %125 {offsets = [0, 0], sizes = [2, 128], strides = [1, 1]} : vector<2x384xf32> to vector<2x128xf32>
    %128 = arith.addf %126, %127 : vector<2x128xf32>
    %129 = arith.negf %128 : vector<2x128xf32>
    %130 = math.exp %129 : vector<2x128xf32>
    %cst_28 = arith.constant 1.000000e+00 : f32
    %131 = vector.broadcast %cst_28 : f32 to vector<2x128xf32>
    %132 = arith.addf %131, %130 : vector<2x128xf32>
    %133 = arith.divf %131, %132 : vector<2x128xf32>
    %134 = vector.extract_strided_slice %122 {offsets = [0, 128], sizes = [2, 128], strides = [1, 1]} : vector<2x384xf32> to vector<2x128xf32>
    %135 = vector.extract_strided_slice %125 {offsets = [0, 128], sizes = [2, 128], strides = [1, 1]} : vector<2x384xf32> to vector<2x128xf32>
    %136 = arith.addf %134, %135 : vector<2x128xf32>
    %137 = arith.negf %136 : vector<2x128xf32>
    %138 = math.exp %137 : vector<2x128xf32>
    %cst_29 = arith.constant 1.000000e+00 : f32
    %139 = vector.broadcast %cst_29 : f32 to vector<2x128xf32>
    %140 = arith.addf %139, %138 : vector<2x128xf32>
    %141 = arith.divf %139, %140 : vector<2x128xf32>
    %142 = vector.extract_strided_slice %122 {offsets = [0, 256], sizes = [2, 128], strides = [1, 1]} : vector<2x384xf32> to vector<2x128xf32>
    %143 = vector.extract_strided_slice %125 {offsets = [0, 256], sizes = [2, 128], strides = [1, 1]} : vector<2x384xf32> to vector<2x128xf32>
    %144 = arith.mulf %133, %143 : vector<2x128xf32>
    %145 = arith.addf %142, %144 : vector<2x128xf32>
    %146 = math.tanh %145 : vector<2x128xf32>
    %cst_30 = arith.constant 1.000000e+00 : f32
    %147 = vector.broadcast %cst_30 : f32 to vector<2x128xf32>
    %148 = arith.subf %147, %141 : vector<2x128xf32>
    %149 = arith.mulf %148, %146 : vector<2x128xf32>
    %150 = arith.mulf %141, %121 : vector<2x128xf32>
    %151 = arith.addf %149, %150 : vector<2x128xf32>
    %c3_i32 = arith.constant 3 : i32
    %152 = vector.broadcast %c3_i32 : i32 to vector<2x1xi32>
    %153 = arith.cmpi sgt, %15, %152 : vector<2x1xi32>
    %154 = vector.shape_cast %153 : vector<2x1xi1> to vector<2x1xi1>
    %155 = vector.broadcast %154 : vector<2x1xi1> to vector<2x128xi1>
    %156 = arith.select %155, %151, %121 : vector<2x128xi1>, vector<2x128xf32>
    %157 = vector.extract_strided_slice %12 {offsets = [8, 0], sizes = [2, 384], strides = [1, 1]} : vector<32x384xf32> to vector<2x384xf32>
    %cst_31 = arith.constant dense<0.000000e+00> : vector<2x384xf32>
    %158 = tpu.matmul %156, %13, %cst_31 {dimension_numbers = #tpu.dot_dimension_numbers<[1], [0], [0], [1], [0, 0, 1, 1], [], []>} : vector<2x128xf32>, vector<128x384xf32>, vector<2x384xf32> -> vector<2x384xf32>
    %159 = vector.broadcast %14 : vector<1x384xf32> to vector<2x384xf32>
    %160 = arith.addf %158, %159 : vector<2x384xf32>
    %161 = vector.extract_strided_slice %157 {offsets = [0, 0], sizes = [2, 128], strides = [1, 1]} : vector<2x384xf32> to vector<2x128xf32>
    %162 = vector.extract_strided_slice %160 {offsets = [0, 0], sizes = [2, 128], strides = [1, 1]} : vector<2x384xf32> to vector<2x128xf32>
    %163 = arith.addf %161, %162 : vector<2x128xf32>
    %164 = arith.negf %163 : vector<2x128xf32>
    %165 = math.exp %164 : vector<2x128xf32>
    %cst_32 = arith.constant 1.000000e+00 : f32
    %166 = vector.broadcast %cst_32 : f32 to vector<2x128xf32>
    %167 = arith.addf %166, %165 : vector<2x128xf32>
    %168 = arith.divf %166, %167 : vector<2x128xf32>
    %169 = vector.extract_strided_slice %157 {offsets = [0, 128], sizes = [2, 128], strides = [1, 1]} : vector<2x384xf32> to vector<2x128xf32>
    %170 = vector.extract_strided_slice %160 {offsets = [0, 128], sizes = [2, 128], strides = [1, 1]} : vector<2x384xf32> to vector<2x128xf32>
    %171 = arith.addf %169, %170 : vector<2x128xf32>
    %172 = arith.negf %171 : vector<2x128xf32>
    %173 = math.exp %172 : vector<2x128xf32>
    %cst_33 = arith.constant 1.000000e+00 : f32
    %174 = vector.broadcast %cst_33 : f32 to vector<2x128xf32>
    %175 = arith.addf %174, %173 : vector<2x128xf32>
    %176 = arith.divf %174, %175 : vector<2x128xf32>
    %177 = vector.extract_strided_slice %157 {offsets = [0, 256], sizes = [2, 128], strides = [1, 1]} : vector<2x384xf32> to vector<2x128xf32>
    %178 = vector.extract_strided_slice %160 {offsets = [0, 256], sizes = [2, 128], strides = [1, 1]} : vector<2x384xf32> to vector<2x128xf32>
    %179 = arith.mulf %168, %178 : vector<2x128xf32>
    %180 = arith.addf %177, %179 : vector<2x128xf32>
    %181 = math.tanh %180 : vector<2x128xf32>
    %cst_34 = arith.constant 1.000000e+00 : f32
    %182 = vector.broadcast %cst_34 : f32 to vector<2x128xf32>
    %183 = arith.subf %182, %176 : vector<2x128xf32>
    %184 = arith.mulf %183, %181 : vector<2x128xf32>
    %185 = arith.mulf %176, %156 : vector<2x128xf32>
    %186 = arith.addf %184, %185 : vector<2x128xf32>
    %c4_i32 = arith.constant 4 : i32
    %187 = vector.broadcast %c4_i32 : i32 to vector<2x1xi32>
    %188 = arith.cmpi sgt, %15, %187 : vector<2x1xi32>
    %189 = vector.shape_cast %188 : vector<2x1xi1> to vector<2x1xi1>
    %190 = vector.broadcast %189 : vector<2x1xi1> to vector<2x128xi1>
    %191 = arith.select %190, %186, %156 : vector<2x128xi1>, vector<2x128xf32>
    %192 = vector.extract_strided_slice %12 {offsets = [10, 0], sizes = [2, 384], strides = [1, 1]} : vector<32x384xf32> to vector<2x384xf32>
    %cst_35 = arith.constant dense<0.000000e+00> : vector<2x384xf32>
    %193 = tpu.matmul %191, %13, %cst_35 {dimension_numbers = #tpu.dot_dimension_numbers<[1], [0], [0], [1], [0, 0, 1, 1], [], []>} : vector<2x128xf32>, vector<128x384xf32>, vector<2x384xf32> -> vector<2x384xf32>
    %194 = vector.broadcast %14 : vector<1x384xf32> to vector<2x384xf32>
    %195 = arith.addf %193, %194 : vector<2x384xf32>
    %196 = vector.extract_strided_slice %192 {offsets = [0, 0], sizes = [2, 128], strides = [1, 1]} : vector<2x384xf32> to vector<2x128xf32>
    %197 = vector.extract_strided_slice %195 {offsets = [0, 0], sizes = [2, 128], strides = [1, 1]} : vector<2x384xf32> to vector<2x128xf32>
    %198 = arith.addf %196, %197 : vector<2x128xf32>
    %199 = arith.negf %198 : vector<2x128xf32>
    %200 = math.exp %199 : vector<2x128xf32>
    %cst_36 = arith.constant 1.000000e+00 : f32
    %201 = vector.broadcast %cst_36 : f32 to vector<2x128xf32>
    %202 = arith.addf %201, %200 : vector<2x128xf32>
    %203 = arith.divf %201, %202 : vector<2x128xf32>
    %204 = vector.extract_strided_slice %192 {offsets = [0, 128], sizes = [2, 128], strides = [1, 1]} : vector<2x384xf32> to vector<2x128xf32>
    %205 = vector.extract_strided_slice %195 {offsets = [0, 128], sizes = [2, 128], strides = [1, 1]} : vector<2x384xf32> to vector<2x128xf32>
    %206 = arith.addf %204, %205 : vector<2x128xf32>
    %207 = arith.negf %206 : vector<2x128xf32>
    %208 = math.exp %207 : vector<2x128xf32>
    %cst_37 = arith.constant 1.000000e+00 : f32
    %209 = vector.broadcast %cst_37 : f32 to vector<2x128xf32>
    %210 = arith.addf %209, %208 : vector<2x128xf32>
    %211 = arith.divf %209, %210 : vector<2x128xf32>
    %212 = vector.extract_strided_slice %192 {offsets = [0, 256], sizes = [2, 128], strides = [1, 1]} : vector<2x384xf32> to vector<2x128xf32>
    %213 = vector.extract_strided_slice %195 {offsets = [0, 256], sizes = [2, 128], strides = [1, 1]} : vector<2x384xf32> to vector<2x128xf32>
    %214 = arith.mulf %203, %213 : vector<2x128xf32>
    %215 = arith.addf %212, %214 : vector<2x128xf32>
    %216 = math.tanh %215 : vector<2x128xf32>
    %cst_38 = arith.constant 1.000000e+00 : f32
    %217 = vector.broadcast %cst_38 : f32 to vector<2x128xf32>
    %218 = arith.subf %217, %211 : vector<2x128xf32>
    %219 = arith.mulf %218, %216 : vector<2x128xf32>
    %220 = arith.mulf %211, %191 : vector<2x128xf32>
    %221 = arith.addf %219, %220 : vector<2x128xf32>
    %c5_i32 = arith.constant 5 : i32
    %222 = vector.broadcast %c5_i32 : i32 to vector<2x1xi32>
    %223 = arith.cmpi sgt, %15, %222 : vector<2x1xi32>
    %224 = vector.shape_cast %223 : vector<2x1xi1> to vector<2x1xi1>
    %225 = vector.broadcast %224 : vector<2x1xi1> to vector<2x128xi1>
    %226 = arith.select %225, %221, %191 : vector<2x128xi1>, vector<2x128xf32>
    %227 = vector.extract_strided_slice %12 {offsets = [12, 0], sizes = [2, 384], strides = [1, 1]} : vector<32x384xf32> to vector<2x384xf32>
    %cst_39 = arith.constant dense<0.000000e+00> : vector<2x384xf32>
    %228 = tpu.matmul %226, %13, %cst_39 {dimension_numbers = #tpu.dot_dimension_numbers<[1], [0], [0], [1], [0, 0, 1, 1], [], []>} : vector<2x128xf32>, vector<128x384xf32>, vector<2x384xf32> -> vector<2x384xf32>
    %229 = vector.broadcast %14 : vector<1x384xf32> to vector<2x384xf32>
    %230 = arith.addf %228, %229 : vector<2x384xf32>
    %231 = vector.extract_strided_slice %227 {offsets = [0, 0], sizes = [2, 128], strides = [1, 1]} : vector<2x384xf32> to vector<2x128xf32>
    %232 = vector.extract_strided_slice %230 {offsets = [0, 0], sizes = [2, 128], strides = [1, 1]} : vector<2x384xf32> to vector<2x128xf32>
    %233 = arith.addf %231, %232 : vector<2x128xf32>
    %234 = arith.negf %233 : vector<2x128xf32>
    %235 = math.exp %234 : vector<2x128xf32>
    %cst_40 = arith.constant 1.000000e+00 : f32
    %236 = vector.broadcast %cst_40 : f32 to vector<2x128xf32>
    %237 = arith.addf %236, %235 : vector<2x128xf32>
    %238 = arith.divf %236, %237 : vector<2x128xf32>
    %239 = vector.extract_strided_slice %227 {offsets = [0, 128], sizes = [2, 128], strides = [1, 1]} : vector<2x384xf32> to vector<2x128xf32>
    %240 = vector.extract_strided_slice %230 {offsets = [0, 128], sizes = [2, 128], strides = [1, 1]} : vector<2x384xf32> to vector<2x128xf32>
    %241 = arith.addf %239, %240 : vector<2x128xf32>
    %242 = arith.negf %241 : vector<2x128xf32>
    %243 = math.exp %242 : vector<2x128xf32>
    %cst_41 = arith.constant 1.000000e+00 : f32
    %244 = vector.broadcast %cst_41 : f32 to vector<2x128xf32>
    %245 = arith.addf %244, %243 : vector<2x128xf32>
    %246 = arith.divf %244, %245 : vector<2x128xf32>
    %247 = vector.extract_strided_slice %227 {offsets = [0, 256], sizes = [2, 128], strides = [1, 1]} : vector<2x384xf32> to vector<2x128xf32>
    %248 = vector.extract_strided_slice %230 {offsets = [0, 256], sizes = [2, 128], strides = [1, 1]} : vector<2x384xf32> to vector<2x128xf32>
    %249 = arith.mulf %238, %248 : vector<2x128xf32>
    %250 = arith.addf %247, %249 : vector<2x128xf32>
    %251 = math.tanh %250 : vector<2x128xf32>
    %cst_42 = arith.constant 1.000000e+00 : f32
    %252 = vector.broadcast %cst_42 : f32 to vector<2x128xf32>
    %253 = arith.subf %252, %246 : vector<2x128xf32>
    %254 = arith.mulf %253, %251 : vector<2x128xf32>
    %255 = arith.mulf %246, %226 : vector<2x128xf32>
    %256 = arith.addf %254, %255 : vector<2x128xf32>
    %c6_i32 = arith.constant 6 : i32
    %257 = vector.broadcast %c6_i32 : i32 to vector<2x1xi32>
    %258 = arith.cmpi sgt, %15, %257 : vector<2x1xi32>
    %259 = vector.shape_cast %258 : vector<2x1xi1> to vector<2x1xi1>
    %260 = vector.broadcast %259 : vector<2x1xi1> to vector<2x128xi1>
    %261 = arith.select %260, %256, %226 : vector<2x128xi1>, vector<2x128xf32>
    %262 = vector.extract_strided_slice %12 {offsets = [14, 0], sizes = [2, 384], strides = [1, 1]} : vector<32x384xf32> to vector<2x384xf32>
    %cst_43 = arith.constant dense<0.000000e+00> : vector<2x384xf32>
    %263 = tpu.matmul %261, %13, %cst_43 {dimension_numbers = #tpu.dot_dimension_numbers<[1], [0], [0], [1], [0, 0, 1, 1], [], []>} : vector<2x128xf32>, vector<128x384xf32>, vector<2x384xf32> -> vector<2x384xf32>
    %264 = vector.broadcast %14 : vector<1x384xf32> to vector<2x384xf32>
    %265 = arith.addf %263, %264 : vector<2x384xf32>
    %266 = vector.extract_strided_slice %262 {offsets = [0, 0], sizes = [2, 128], strides = [1, 1]} : vector<2x384xf32> to vector<2x128xf32>
    %267 = vector.extract_strided_slice %265 {offsets = [0, 0], sizes = [2, 128], strides = [1, 1]} : vector<2x384xf32> to vector<2x128xf32>
    %268 = arith.addf %266, %267 : vector<2x128xf32>
    %269 = arith.negf %268 : vector<2x128xf32>
    %270 = math.exp %269 : vector<2x128xf32>
    %cst_44 = arith.constant 1.000000e+00 : f32
    %271 = vector.broadcast %cst_44 : f32 to vector<2x128xf32>
    %272 = arith.addf %271, %270 : vector<2x128xf32>
    %273 = arith.divf %271, %272 : vector<2x128xf32>
    %274 = vector.extract_strided_slice %262 {offsets = [0, 128], sizes = [2, 128], strides = [1, 1]} : vector<2x384xf32> to vector<2x128xf32>
    %275 = vector.extract_strided_slice %265 {offsets = [0, 128], sizes = [2, 128], strides = [1, 1]} : vector<2x384xf32> to vector<2x128xf32>
    %276 = arith.addf %274, %275 : vector<2x128xf32>
    %277 = arith.negf %276 : vector<2x128xf32>
    %278 = math.exp %277 : vector<2x128xf32>
    %cst_45 = arith.constant 1.000000e+00 : f32
    %279 = vector.broadcast %cst_45 : f32 to vector<2x128xf32>
    %280 = arith.addf %279, %278 : vector<2x128xf32>
    %281 = arith.divf %279, %280 : vector<2x128xf32>
    %282 = vector.extract_strided_slice %262 {offsets = [0, 256], sizes = [2, 128], strides = [1, 1]} : vector<2x384xf32> to vector<2x128xf32>
    %283 = vector.extract_strided_slice %265 {offsets = [0, 256], sizes = [2, 128], strides = [1, 1]} : vector<2x384xf32> to vector<2x128xf32>
    %284 = arith.mulf %273, %283 : vector<2x128xf32>
    %285 = arith.addf %282, %284 : vector<2x128xf32>
    %286 = math.tanh %285 : vector<2x128xf32>
    %cst_46 = arith.constant 1.000000e+00 : f32
    %287 = vector.broadcast %cst_46 : f32 to vector<2x128xf32>
    %288 = arith.subf %287, %281 : vector<2x128xf32>
    %289 = arith.mulf %288, %286 : vector<2x128xf32>
    %290 = arith.mulf %281, %261 : vector<2x128xf32>
    %291 = arith.addf %289, %290 : vector<2x128xf32>
    %c7_i32 = arith.constant 7 : i32
    %292 = vector.broadcast %c7_i32 : i32 to vector<2x1xi32>
    %293 = arith.cmpi sgt, %15, %292 : vector<2x1xi32>
    %294 = vector.shape_cast %293 : vector<2x1xi1> to vector<2x1xi1>
    %295 = vector.broadcast %294 : vector<2x1xi1> to vector<2x128xi1>
    %296 = arith.select %295, %291, %261 : vector<2x128xi1>, vector<2x128xf32>
    %297 = vector.extract_strided_slice %12 {offsets = [16, 0], sizes = [2, 384], strides = [1, 1]} : vector<32x384xf32> to vector<2x384xf32>
    %cst_47 = arith.constant dense<0.000000e+00> : vector<2x384xf32>
    %298 = tpu.matmul %296, %13, %cst_47 {dimension_numbers = #tpu.dot_dimension_numbers<[1], [0], [0], [1], [0, 0, 1, 1], [], []>} : vector<2x128xf32>, vector<128x384xf32>, vector<2x384xf32> -> vector<2x384xf32>
    %299 = vector.broadcast %14 : vector<1x384xf32> to vector<2x384xf32>
    %300 = arith.addf %298, %299 : vector<2x384xf32>
    %301 = vector.extract_strided_slice %297 {offsets = [0, 0], sizes = [2, 128], strides = [1, 1]} : vector<2x384xf32> to vector<2x128xf32>
    %302 = vector.extract_strided_slice %300 {offsets = [0, 0], sizes = [2, 128], strides = [1, 1]} : vector<2x384xf32> to vector<2x128xf32>
    %303 = arith.addf %301, %302 : vector<2x128xf32>
    %304 = arith.negf %303 : vector<2x128xf32>
    %305 = math.exp %304 : vector<2x128xf32>
    %cst_48 = arith.constant 1.000000e+00 : f32
    %306 = vector.broadcast %cst_48 : f32 to vector<2x128xf32>
    %307 = arith.addf %306, %305 : vector<2x128xf32>
    %308 = arith.divf %306, %307 : vector<2x128xf32>
    %309 = vector.extract_strided_slice %297 {offsets = [0, 128], sizes = [2, 128], strides = [1, 1]} : vector<2x384xf32> to vector<2x128xf32>
    %310 = vector.extract_strided_slice %300 {offsets = [0, 128], sizes = [2, 128], strides = [1, 1]} : vector<2x384xf32> to vector<2x128xf32>
    %311 = arith.addf %309, %310 : vector<2x128xf32>
    %312 = arith.negf %311 : vector<2x128xf32>
    %313 = math.exp %312 : vector<2x128xf32>
    %cst_49 = arith.constant 1.000000e+00 : f32
    %314 = vector.broadcast %cst_49 : f32 to vector<2x128xf32>
    %315 = arith.addf %314, %313 : vector<2x128xf32>
    %316 = arith.divf %314, %315 : vector<2x128xf32>
    %317 = vector.extract_strided_slice %297 {offsets = [0, 256], sizes = [2, 128], strides = [1, 1]} : vector<2x384xf32> to vector<2x128xf32>
    %318 = vector.extract_strided_slice %300 {offsets = [0, 256], sizes = [2, 128], strides = [1, 1]} : vector<2x384xf32> to vector<2x128xf32>
    %319 = arith.mulf %308, %318 : vector<2x128xf32>
    %320 = arith.addf %317, %319 : vector<2x128xf32>
    %321 = math.tanh %320 : vector<2x128xf32>
    %cst_50 = arith.constant 1.000000e+00 : f32
    %322 = vector.broadcast %cst_50 : f32 to vector<2x128xf32>
    %323 = arith.subf %322, %316 : vector<2x128xf32>
    %324 = arith.mulf %323, %321 : vector<2x128xf32>
    %325 = arith.mulf %316, %296 : vector<2x128xf32>
    %326 = arith.addf %324, %325 : vector<2x128xf32>
    %c8_i32 = arith.constant 8 : i32
    %327 = vector.broadcast %c8_i32 : i32 to vector<2x1xi32>
    %328 = arith.cmpi sgt, %15, %327 : vector<2x1xi32>
    %329 = vector.shape_cast %328 : vector<2x1xi1> to vector<2x1xi1>
    %330 = vector.broadcast %329 : vector<2x1xi1> to vector<2x128xi1>
    %331 = arith.select %330, %326, %296 : vector<2x128xi1>, vector<2x128xf32>
    %332 = vector.extract_strided_slice %12 {offsets = [18, 0], sizes = [2, 384], strides = [1, 1]} : vector<32x384xf32> to vector<2x384xf32>
    %cst_51 = arith.constant dense<0.000000e+00> : vector<2x384xf32>
    %333 = tpu.matmul %331, %13, %cst_51 {dimension_numbers = #tpu.dot_dimension_numbers<[1], [0], [0], [1], [0, 0, 1, 1], [], []>} : vector<2x128xf32>, vector<128x384xf32>, vector<2x384xf32> -> vector<2x384xf32>
    %334 = vector.broadcast %14 : vector<1x384xf32> to vector<2x384xf32>
    %335 = arith.addf %333, %334 : vector<2x384xf32>
    %336 = vector.extract_strided_slice %332 {offsets = [0, 0], sizes = [2, 128], strides = [1, 1]} : vector<2x384xf32> to vector<2x128xf32>
    %337 = vector.extract_strided_slice %335 {offsets = [0, 0], sizes = [2, 128], strides = [1, 1]} : vector<2x384xf32> to vector<2x128xf32>
    %338 = arith.addf %336, %337 : vector<2x128xf32>
    %339 = arith.negf %338 : vector<2x128xf32>
    %340 = math.exp %339 : vector<2x128xf32>
    %cst_52 = arith.constant 1.000000e+00 : f32
    %341 = vector.broadcast %cst_52 : f32 to vector<2x128xf32>
    %342 = arith.addf %341, %340 : vector<2x128xf32>
    %343 = arith.divf %341, %342 : vector<2x128xf32>
    %344 = vector.extract_strided_slice %332 {offsets = [0, 128], sizes = [2, 128], strides = [1, 1]} : vector<2x384xf32> to vector<2x128xf32>
    %345 = vector.extract_strided_slice %335 {offsets = [0, 128], sizes = [2, 128], strides = [1, 1]} : vector<2x384xf32> to vector<2x128xf32>
    %346 = arith.addf %344, %345 : vector<2x128xf32>
    %347 = arith.negf %346 : vector<2x128xf32>
    %348 = math.exp %347 : vector<2x128xf32>
    %cst_53 = arith.constant 1.000000e+00 : f32
    %349 = vector.broadcast %cst_53 : f32 to vector<2x128xf32>
    %350 = arith.addf %349, %348 : vector<2x128xf32>
    %351 = arith.divf %349, %350 : vector<2x128xf32>
    %352 = vector.extract_strided_slice %332 {offsets = [0, 256], sizes = [2, 128], strides = [1, 1]} : vector<2x384xf32> to vector<2x128xf32>
    %353 = vector.extract_strided_slice %335 {offsets = [0, 256], sizes = [2, 128], strides = [1, 1]} : vector<2x384xf32> to vector<2x128xf32>
    %354 = arith.mulf %343, %353 : vector<2x128xf32>
    %355 = arith.addf %352, %354 : vector<2x128xf32>
    %356 = math.tanh %355 : vector<2x128xf32>
    %cst_54 = arith.constant 1.000000e+00 : f32
    %357 = vector.broadcast %cst_54 : f32 to vector<2x128xf32>
    %358 = arith.subf %357, %351 : vector<2x128xf32>
    %359 = arith.mulf %358, %356 : vector<2x128xf32>
    %360 = arith.mulf %351, %331 : vector<2x128xf32>
    %361 = arith.addf %359, %360 : vector<2x128xf32>
    %c9_i32 = arith.constant 9 : i32
    %362 = vector.broadcast %c9_i32 : i32 to vector<2x1xi32>
    %363 = arith.cmpi sgt, %15, %362 : vector<2x1xi32>
    %364 = vector.shape_cast %363 : vector<2x1xi1> to vector<2x1xi1>
    %365 = vector.broadcast %364 : vector<2x1xi1> to vector<2x128xi1>
    %366 = arith.select %365, %361, %331 : vector<2x128xi1>, vector<2x128xf32>
    %367 = vector.extract_strided_slice %12 {offsets = [20, 0], sizes = [2, 384], strides = [1, 1]} : vector<32x384xf32> to vector<2x384xf32>
    %cst_55 = arith.constant dense<0.000000e+00> : vector<2x384xf32>
    %368 = tpu.matmul %366, %13, %cst_55 {dimension_numbers = #tpu.dot_dimension_numbers<[1], [0], [0], [1], [0, 0, 1, 1], [], []>} : vector<2x128xf32>, vector<128x384xf32>, vector<2x384xf32> -> vector<2x384xf32>
    %369 = vector.broadcast %14 : vector<1x384xf32> to vector<2x384xf32>
    %370 = arith.addf %368, %369 : vector<2x384xf32>
    %371 = vector.extract_strided_slice %367 {offsets = [0, 0], sizes = [2, 128], strides = [1, 1]} : vector<2x384xf32> to vector<2x128xf32>
    %372 = vector.extract_strided_slice %370 {offsets = [0, 0], sizes = [2, 128], strides = [1, 1]} : vector<2x384xf32> to vector<2x128xf32>
    %373 = arith.addf %371, %372 : vector<2x128xf32>
    %374 = arith.negf %373 : vector<2x128xf32>
    %375 = math.exp %374 : vector<2x128xf32>
    %cst_56 = arith.constant 1.000000e+00 : f32
    %376 = vector.broadcast %cst_56 : f32 to vector<2x128xf32>
    %377 = arith.addf %376, %375 : vector<2x128xf32>
    %378 = arith.divf %376, %377 : vector<2x128xf32>
    %379 = vector.extract_strided_slice %367 {offsets = [0, 128], sizes = [2, 128], strides = [1, 1]} : vector<2x384xf32> to vector<2x128xf32>
    %380 = vector.extract_strided_slice %370 {offsets = [0, 128], sizes = [2, 128], strides = [1, 1]} : vector<2x384xf32> to vector<2x128xf32>
    %381 = arith.addf %379, %380 : vector<2x128xf32>
    %382 = arith.negf %381 : vector<2x128xf32>
    %383 = math.exp %382 : vector<2x128xf32>
    %cst_57 = arith.constant 1.000000e+00 : f32
    %384 = vector.broadcast %cst_57 : f32 to vector<2x128xf32>
    %385 = arith.addf %384, %383 : vector<2x128xf32>
    %386 = arith.divf %384, %385 : vector<2x128xf32>
    %387 = vector.extract_strided_slice %367 {offsets = [0, 256], sizes = [2, 128], strides = [1, 1]} : vector<2x384xf32> to vector<2x128xf32>
    %388 = vector.extract_strided_slice %370 {offsets = [0, 256], sizes = [2, 128], strides = [1, 1]} : vector<2x384xf32> to vector<2x128xf32>
    %389 = arith.mulf %378, %388 : vector<2x128xf32>
    %390 = arith.addf %387, %389 : vector<2x128xf32>
    %391 = math.tanh %390 : vector<2x128xf32>
    %cst_58 = arith.constant 1.000000e+00 : f32
    %392 = vector.broadcast %cst_58 : f32 to vector<2x128xf32>
    %393 = arith.subf %392, %386 : vector<2x128xf32>
    %394 = arith.mulf %393, %391 : vector<2x128xf32>
    %395 = arith.mulf %386, %366 : vector<2x128xf32>
    %396 = arith.addf %394, %395 : vector<2x128xf32>
    %c10_i32 = arith.constant 10 : i32
    %397 = vector.broadcast %c10_i32 : i32 to vector<2x1xi32>
    %398 = arith.cmpi sgt, %15, %397 : vector<2x1xi32>
    %399 = vector.shape_cast %398 : vector<2x1xi1> to vector<2x1xi1>
    %400 = vector.broadcast %399 : vector<2x1xi1> to vector<2x128xi1>
    %401 = arith.select %400, %396, %366 : vector<2x128xi1>, vector<2x128xf32>
    %402 = vector.extract_strided_slice %12 {offsets = [22, 0], sizes = [2, 384], strides = [1, 1]} : vector<32x384xf32> to vector<2x384xf32>
    %cst_59 = arith.constant dense<0.000000e+00> : vector<2x384xf32>
    %403 = tpu.matmul %401, %13, %cst_59 {dimension_numbers = #tpu.dot_dimension_numbers<[1], [0], [0], [1], [0, 0, 1, 1], [], []>} : vector<2x128xf32>, vector<128x384xf32>, vector<2x384xf32> -> vector<2x384xf32>
    %404 = vector.broadcast %14 : vector<1x384xf32> to vector<2x384xf32>
    %405 = arith.addf %403, %404 : vector<2x384xf32>
    %406 = vector.extract_strided_slice %402 {offsets = [0, 0], sizes = [2, 128], strides = [1, 1]} : vector<2x384xf32> to vector<2x128xf32>
    %407 = vector.extract_strided_slice %405 {offsets = [0, 0], sizes = [2, 128], strides = [1, 1]} : vector<2x384xf32> to vector<2x128xf32>
    %408 = arith.addf %406, %407 : vector<2x128xf32>
    %409 = arith.negf %408 : vector<2x128xf32>
    %410 = math.exp %409 : vector<2x128xf32>
    %cst_60 = arith.constant 1.000000e+00 : f32
    %411 = vector.broadcast %cst_60 : f32 to vector<2x128xf32>
    %412 = arith.addf %411, %410 : vector<2x128xf32>
    %413 = arith.divf %411, %412 : vector<2x128xf32>
    %414 = vector.extract_strided_slice %402 {offsets = [0, 128], sizes = [2, 128], strides = [1, 1]} : vector<2x384xf32> to vector<2x128xf32>
    %415 = vector.extract_strided_slice %405 {offsets = [0, 128], sizes = [2, 128], strides = [1, 1]} : vector<2x384xf32> to vector<2x128xf32>
    %416 = arith.addf %414, %415 : vector<2x128xf32>
    %417 = arith.negf %416 : vector<2x128xf32>
    %418 = math.exp %417 : vector<2x128xf32>
    %cst_61 = arith.constant 1.000000e+00 : f32
    %419 = vector.broadcast %cst_61 : f32 to vector<2x128xf32>
    %420 = arith.addf %419, %418 : vector<2x128xf32>
    %421 = arith.divf %419, %420 : vector<2x128xf32>
    %422 = vector.extract_strided_slice %402 {offsets = [0, 256], sizes = [2, 128], strides = [1, 1]} : vector<2x384xf32> to vector<2x128xf32>
    %423 = vector.extract_strided_slice %405 {offsets = [0, 256], sizes = [2, 128], strides = [1, 1]} : vector<2x384xf32> to vector<2x128xf32>
    %424 = arith.mulf %413, %423 : vector<2x128xf32>
    %425 = arith.addf %422, %424 : vector<2x128xf32>
    %426 = math.tanh %425 : vector<2x128xf32>
    %cst_62 = arith.constant 1.000000e+00 : f32
    %427 = vector.broadcast %cst_62 : f32 to vector<2x128xf32>
    %428 = arith.subf %427, %421 : vector<2x128xf32>
    %429 = arith.mulf %428, %426 : vector<2x128xf32>
    %430 = arith.mulf %421, %401 : vector<2x128xf32>
    %431 = arith.addf %429, %430 : vector<2x128xf32>
    %c11_i32 = arith.constant 11 : i32
    %432 = vector.broadcast %c11_i32 : i32 to vector<2x1xi32>
    %433 = arith.cmpi sgt, %15, %432 : vector<2x1xi32>
    %434 = vector.shape_cast %433 : vector<2x1xi1> to vector<2x1xi1>
    %435 = vector.broadcast %434 : vector<2x1xi1> to vector<2x128xi1>
    %436 = arith.select %435, %431, %401 : vector<2x128xi1>, vector<2x128xf32>
    %437 = vector.extract_strided_slice %12 {offsets = [24, 0], sizes = [2, 384], strides = [1, 1]} : vector<32x384xf32> to vector<2x384xf32>
    %cst_63 = arith.constant dense<0.000000e+00> : vector<2x384xf32>
    %438 = tpu.matmul %436, %13, %cst_63 {dimension_numbers = #tpu.dot_dimension_numbers<[1], [0], [0], [1], [0, 0, 1, 1], [], []>} : vector<2x128xf32>, vector<128x384xf32>, vector<2x384xf32> -> vector<2x384xf32>
    %439 = vector.broadcast %14 : vector<1x384xf32> to vector<2x384xf32>
    %440 = arith.addf %438, %439 : vector<2x384xf32>
    %441 = vector.extract_strided_slice %437 {offsets = [0, 0], sizes = [2, 128], strides = [1, 1]} : vector<2x384xf32> to vector<2x128xf32>
    %442 = vector.extract_strided_slice %440 {offsets = [0, 0], sizes = [2, 128], strides = [1, 1]} : vector<2x384xf32> to vector<2x128xf32>
    %443 = arith.addf %441, %442 : vector<2x128xf32>
    %444 = arith.negf %443 : vector<2x128xf32>
    %445 = math.exp %444 : vector<2x128xf32>
    %cst_64 = arith.constant 1.000000e+00 : f32
    %446 = vector.broadcast %cst_64 : f32 to vector<2x128xf32>
    %447 = arith.addf %446, %445 : vector<2x128xf32>
    %448 = arith.divf %446, %447 : vector<2x128xf32>
    %449 = vector.extract_strided_slice %437 {offsets = [0, 128], sizes = [2, 128], strides = [1, 1]} : vector<2x384xf32> to vector<2x128xf32>
    %450 = vector.extract_strided_slice %440 {offsets = [0, 128], sizes = [2, 128], strides = [1, 1]} : vector<2x384xf32> to vector<2x128xf32>
    %451 = arith.addf %449, %450 : vector<2x128xf32>
    %452 = arith.negf %451 : vector<2x128xf32>
    %453 = math.exp %452 : vector<2x128xf32>
    %cst_65 = arith.constant 1.000000e+00 : f32
    %454 = vector.broadcast %cst_65 : f32 to vector<2x128xf32>
    %455 = arith.addf %454, %453 : vector<2x128xf32>
    %456 = arith.divf %454, %455 : vector<2x128xf32>
    %457 = vector.extract_strided_slice %437 {offsets = [0, 256], sizes = [2, 128], strides = [1, 1]} : vector<2x384xf32> to vector<2x128xf32>
    %458 = vector.extract_strided_slice %440 {offsets = [0, 256], sizes = [2, 128], strides = [1, 1]} : vector<2x384xf32> to vector<2x128xf32>
    %459 = arith.mulf %448, %458 : vector<2x128xf32>
    %460 = arith.addf %457, %459 : vector<2x128xf32>
    %461 = math.tanh %460 : vector<2x128xf32>
    %cst_66 = arith.constant 1.000000e+00 : f32
    %462 = vector.broadcast %cst_66 : f32 to vector<2x128xf32>
    %463 = arith.subf %462, %456 : vector<2x128xf32>
    %464 = arith.mulf %463, %461 : vector<2x128xf32>
    %465 = arith.mulf %456, %436 : vector<2x128xf32>
    %466 = arith.addf %464, %465 : vector<2x128xf32>
    %c12_i32 = arith.constant 12 : i32
    %467 = vector.broadcast %c12_i32 : i32 to vector<2x1xi32>
    %468 = arith.cmpi sgt, %15, %467 : vector<2x1xi32>
    %469 = vector.shape_cast %468 : vector<2x1xi1> to vector<2x1xi1>
    %470 = vector.broadcast %469 : vector<2x1xi1> to vector<2x128xi1>
    %471 = arith.select %470, %466, %436 : vector<2x128xi1>, vector<2x128xf32>
    %472 = vector.extract_strided_slice %12 {offsets = [26, 0], sizes = [2, 384], strides = [1, 1]} : vector<32x384xf32> to vector<2x384xf32>
    %cst_67 = arith.constant dense<0.000000e+00> : vector<2x384xf32>
    %473 = tpu.matmul %471, %13, %cst_67 {dimension_numbers = #tpu.dot_dimension_numbers<[1], [0], [0], [1], [0, 0, 1, 1], [], []>} : vector<2x128xf32>, vector<128x384xf32>, vector<2x384xf32> -> vector<2x384xf32>
    %474 = vector.broadcast %14 : vector<1x384xf32> to vector<2x384xf32>
    %475 = arith.addf %473, %474 : vector<2x384xf32>
    %476 = vector.extract_strided_slice %472 {offsets = [0, 0], sizes = [2, 128], strides = [1, 1]} : vector<2x384xf32> to vector<2x128xf32>
    %477 = vector.extract_strided_slice %475 {offsets = [0, 0], sizes = [2, 128], strides = [1, 1]} : vector<2x384xf32> to vector<2x128xf32>
    %478 = arith.addf %476, %477 : vector<2x128xf32>
    %479 = arith.negf %478 : vector<2x128xf32>
    %480 = math.exp %479 : vector<2x128xf32>
    %cst_68 = arith.constant 1.000000e+00 : f32
    %481 = vector.broadcast %cst_68 : f32 to vector<2x128xf32>
    %482 = arith.addf %481, %480 : vector<2x128xf32>
    %483 = arith.divf %481, %482 : vector<2x128xf32>
    %484 = vector.extract_strided_slice %472 {offsets = [0, 128], sizes = [2, 128], strides = [1, 1]} : vector<2x384xf32> to vector<2x128xf32>
    %485 = vector.extract_strided_slice %475 {offsets = [0, 128], sizes = [2, 128], strides = [1, 1]} : vector<2x384xf32> to vector<2x128xf32>
    %486 = arith.addf %484, %485 : vector<2x128xf32>
    %487 = arith.negf %486 : vector<2x128xf32>
    %488 = math.exp %487 : vector<2x128xf32>
    %cst_69 = arith.constant 1.000000e+00 : f32
    %489 = vector.broadcast %cst_69 : f32 to vector<2x128xf32>
    %490 = arith.addf %489, %488 : vector<2x128xf32>
    %491 = arith.divf %489, %490 : vector<2x128xf32>
    %492 = vector.extract_strided_slice %472 {offsets = [0, 256], sizes = [2, 128], strides = [1, 1]} : vector<2x384xf32> to vector<2x128xf32>
    %493 = vector.extract_strided_slice %475 {offsets = [0, 256], sizes = [2, 128], strides = [1, 1]} : vector<2x384xf32> to vector<2x128xf32>
    %494 = arith.mulf %483, %493 : vector<2x128xf32>
    %495 = arith.addf %492, %494 : vector<2x128xf32>
    %496 = math.tanh %495 : vector<2x128xf32>
    %cst_70 = arith.constant 1.000000e+00 : f32
    %497 = vector.broadcast %cst_70 : f32 to vector<2x128xf32>
    %498 = arith.subf %497, %491 : vector<2x128xf32>
    %499 = arith.mulf %498, %496 : vector<2x128xf32>
    %500 = arith.mulf %491, %471 : vector<2x128xf32>
    %501 = arith.addf %499, %500 : vector<2x128xf32>
    %c13_i32 = arith.constant 13 : i32
    %502 = vector.broadcast %c13_i32 : i32 to vector<2x1xi32>
    %503 = arith.cmpi sgt, %15, %502 : vector<2x1xi32>
    %504 = vector.shape_cast %503 : vector<2x1xi1> to vector<2x1xi1>
    %505 = vector.broadcast %504 : vector<2x1xi1> to vector<2x128xi1>
    %506 = arith.select %505, %501, %471 : vector<2x128xi1>, vector<2x128xf32>
    %507 = vector.extract_strided_slice %12 {offsets = [28, 0], sizes = [2, 384], strides = [1, 1]} : vector<32x384xf32> to vector<2x384xf32>
    %cst_71 = arith.constant dense<0.000000e+00> : vector<2x384xf32>
    %508 = tpu.matmul %506, %13, %cst_71 {dimension_numbers = #tpu.dot_dimension_numbers<[1], [0], [0], [1], [0, 0, 1, 1], [], []>} : vector<2x128xf32>, vector<128x384xf32>, vector<2x384xf32> -> vector<2x384xf32>
    %509 = vector.broadcast %14 : vector<1x384xf32> to vector<2x384xf32>
    %510 = arith.addf %508, %509 : vector<2x384xf32>
    %511 = vector.extract_strided_slice %507 {offsets = [0, 0], sizes = [2, 128], strides = [1, 1]} : vector<2x384xf32> to vector<2x128xf32>
    %512 = vector.extract_strided_slice %510 {offsets = [0, 0], sizes = [2, 128], strides = [1, 1]} : vector<2x384xf32> to vector<2x128xf32>
    %513 = arith.addf %511, %512 : vector<2x128xf32>
    %514 = arith.negf %513 : vector<2x128xf32>
    %515 = math.exp %514 : vector<2x128xf32>
    %cst_72 = arith.constant 1.000000e+00 : f32
    %516 = vector.broadcast %cst_72 : f32 to vector<2x128xf32>
    %517 = arith.addf %516, %515 : vector<2x128xf32>
    %518 = arith.divf %516, %517 : vector<2x128xf32>
    %519 = vector.extract_strided_slice %507 {offsets = [0, 128], sizes = [2, 128], strides = [1, 1]} : vector<2x384xf32> to vector<2x128xf32>
    %520 = vector.extract_strided_slice %510 {offsets = [0, 128], sizes = [2, 128], strides = [1, 1]} : vector<2x384xf32> to vector<2x128xf32>
    %521 = arith.addf %519, %520 : vector<2x128xf32>
    %522 = arith.negf %521 : vector<2x128xf32>
    %523 = math.exp %522 : vector<2x128xf32>
    %cst_73 = arith.constant 1.000000e+00 : f32
    %524 = vector.broadcast %cst_73 : f32 to vector<2x128xf32>
    %525 = arith.addf %524, %523 : vector<2x128xf32>
    %526 = arith.divf %524, %525 : vector<2x128xf32>
    %527 = vector.extract_strided_slice %507 {offsets = [0, 256], sizes = [2, 128], strides = [1, 1]} : vector<2x384xf32> to vector<2x128xf32>
    %528 = vector.extract_strided_slice %510 {offsets = [0, 256], sizes = [2, 128], strides = [1, 1]} : vector<2x384xf32> to vector<2x128xf32>
    %529 = arith.mulf %518, %528 : vector<2x128xf32>
    %530 = arith.addf %527, %529 : vector<2x128xf32>
    %531 = math.tanh %530 : vector<2x128xf32>
    %cst_74 = arith.constant 1.000000e+00 : f32
    %532 = vector.broadcast %cst_74 : f32 to vector<2x128xf32>
    %533 = arith.subf %532, %526 : vector<2x128xf32>
    %534 = arith.mulf %533, %531 : vector<2x128xf32>
    %535 = arith.mulf %526, %506 : vector<2x128xf32>
    %536 = arith.addf %534, %535 : vector<2x128xf32>
    %c14_i32 = arith.constant 14 : i32
    %537 = vector.broadcast %c14_i32 : i32 to vector<2x1xi32>
    %538 = arith.cmpi sgt, %15, %537 : vector<2x1xi32>
    %539 = vector.shape_cast %538 : vector<2x1xi1> to vector<2x1xi1>
    %540 = vector.broadcast %539 : vector<2x1xi1> to vector<2x128xi1>
    %541 = arith.select %540, %536, %506 : vector<2x128xi1>, vector<2x128xf32>
    %542 = vector.extract_strided_slice %12 {offsets = [30, 0], sizes = [2, 384], strides = [1, 1]} : vector<32x384xf32> to vector<2x384xf32>
    %cst_75 = arith.constant dense<0.000000e+00> : vector<2x384xf32>
    %543 = tpu.matmul %541, %13, %cst_75 {dimension_numbers = #tpu.dot_dimension_numbers<[1], [0], [0], [1], [0, 0, 1, 1], [], []>} : vector<2x128xf32>, vector<128x384xf32>, vector<2x384xf32> -> vector<2x384xf32>
    %544 = vector.broadcast %14 : vector<1x384xf32> to vector<2x384xf32>
    %545 = arith.addf %543, %544 : vector<2x384xf32>
    %546 = vector.extract_strided_slice %542 {offsets = [0, 0], sizes = [2, 128], strides = [1, 1]} : vector<2x384xf32> to vector<2x128xf32>
    %547 = vector.extract_strided_slice %545 {offsets = [0, 0], sizes = [2, 128], strides = [1, 1]} : vector<2x384xf32> to vector<2x128xf32>
    %548 = arith.addf %546, %547 : vector<2x128xf32>
    %549 = arith.negf %548 : vector<2x128xf32>
    %550 = math.exp %549 : vector<2x128xf32>
    %cst_76 = arith.constant 1.000000e+00 : f32
    %551 = vector.broadcast %cst_76 : f32 to vector<2x128xf32>
    %552 = arith.addf %551, %550 : vector<2x128xf32>
    %553 = arith.divf %551, %552 : vector<2x128xf32>
    %554 = vector.extract_strided_slice %542 {offsets = [0, 128], sizes = [2, 128], strides = [1, 1]} : vector<2x384xf32> to vector<2x128xf32>
    %555 = vector.extract_strided_slice %545 {offsets = [0, 128], sizes = [2, 128], strides = [1, 1]} : vector<2x384xf32> to vector<2x128xf32>
    %556 = arith.addf %554, %555 : vector<2x128xf32>
    %557 = arith.negf %556 : vector<2x128xf32>
    %558 = math.exp %557 : vector<2x128xf32>
    %cst_77 = arith.constant 1.000000e+00 : f32
    %559 = vector.broadcast %cst_77 : f32 to vector<2x128xf32>
    %560 = arith.addf %559, %558 : vector<2x128xf32>
    %561 = arith.divf %559, %560 : vector<2x128xf32>
    %562 = vector.extract_strided_slice %542 {offsets = [0, 256], sizes = [2, 128], strides = [1, 1]} : vector<2x384xf32> to vector<2x128xf32>
    %563 = vector.extract_strided_slice %545 {offsets = [0, 256], sizes = [2, 128], strides = [1, 1]} : vector<2x384xf32> to vector<2x128xf32>
    %564 = arith.mulf %553, %563 : vector<2x128xf32>
    %565 = arith.addf %562, %564 : vector<2x128xf32>
    %566 = math.tanh %565 : vector<2x128xf32>
    %cst_78 = arith.constant 1.000000e+00 : f32
    %567 = vector.broadcast %cst_78 : f32 to vector<2x128xf32>
    %568 = arith.subf %567, %561 : vector<2x128xf32>
    %569 = arith.mulf %568, %566 : vector<2x128xf32>
    %570 = arith.mulf %561, %541 : vector<2x128xf32>
    %571 = arith.addf %569, %570 : vector<2x128xf32>
    %c15_i32 = arith.constant 15 : i32
    %572 = vector.broadcast %c15_i32 : i32 to vector<2x1xi32>
    %573 = arith.cmpi sgt, %15, %572 : vector<2x1xi32>
    %574 = vector.shape_cast %573 : vector<2x1xi1> to vector<2x1xi1>
    %575 = vector.broadcast %574 : vector<2x1xi1> to vector<2x128xi1>
    %576 = arith.select %575, %571, %541 : vector<2x128xi1>, vector<2x128xf32>
    %c0_79 = arith.constant 0 : index
    %c0_80 = arith.constant 0 : index
    %577 = vector.load %arg9[%c0_79, %c0_80] : memref<128x128xf32, #tpu.memory_space<vmem>>, vector<128x128xf32>
    %cst_81 = arith.constant dense<0.000000e+00> : vector<2x128xf32>
    %578 = tpu.matmul %576, %577, %cst_81 {dimension_numbers = #tpu.dot_dimension_numbers<[1], [0], [0], [1], [0, 0, 1, 1], [], []>} : vector<2x128xf32>, vector<128x128xf32>, vector<2x128xf32> -> vector<2x128xf32>
    %c0_82 = arith.constant 0 : index
    %c0_83 = arith.constant 0 : index
    %579 = vector.load %arg10[%c0_82, %c0_83] : memref<1x128xf32, #tpu.memory_space<vmem>>, vector<1x128xf32>
    %580 = vector.broadcast %579 : vector<1x128xf32> to vector<2x128xf32>
    %581 = arith.addf %578, %580 : vector<2x128xf32>
    %c0_84 = arith.constant 0 : index
    %c0_85 = arith.constant 0 : index
    %582 = vector.load %arg2[%c0_84, %c0_85] : memref<2x128xf32, #tpu.memory_space<vmem>>, vector<2x128xf32>
    %c0_86 = arith.constant 0 : index
    %c0_87 = arith.constant 0 : index
    %583 = vector.load %arg11[%c0_86, %c0_87] : memref<128x512xf32, #tpu.memory_space<vmem>>, vector<128x512xf32>
    %cst_88 = arith.constant dense<0.000000e+00> : vector<2x512xf32>
    %584 = tpu.matmul %582, %583, %cst_88 {dimension_numbers = #tpu.dot_dimension_numbers<[1], [0], [0], [1], [0, 0, 1, 1], [], []>} : vector<2x128xf32>, vector<128x512xf32>, vector<2x512xf32> -> vector<2x512xf32>
    %c0_89 = arith.constant 0 : index
    %c0_90 = arith.constant 0 : index
    %585 = vector.load %arg12[%c0_89, %c0_90] : memref<128x512xf32, #tpu.memory_space<vmem>>, vector<128x512xf32>
    %cst_91 = arith.constant dense<0.000000e+00> : vector<2x512xf32>
    %586 = tpu.matmul %581, %585, %cst_91 {dimension_numbers = #tpu.dot_dimension_numbers<[1], [0], [0], [1], [0, 0, 1, 1], [], []>} : vector<2x128xf32>, vector<128x512xf32>, vector<2x512xf32> -> vector<2x512xf32>
    %587 = arith.addf %584, %586 : vector<2x512xf32>
    %c0_92 = arith.constant 0 : index
    %c0_93 = arith.constant 0 : index
    %588 = vector.load %arg13[%c0_92, %c0_93] : memref<1x512xf32, #tpu.memory_space<vmem>>, vector<1x512xf32>
    %589 = vector.broadcast %588 : vector<1x512xf32> to vector<2x512xf32>
    %590 = arith.addf %587, %589 : vector<2x512xf32>
    %cst_94 = arith.constant 0.000000e+00 : f32
    %591 = vector.broadcast %cst_94 : f32 to vector<2x512xf32>
    %592 = arith.maximumf %590, %591 : vector<2x512xf32>
    %c0_95 = arith.constant 0 : index
    %c0_96 = arith.constant 0 : index
    %593 = vector.load %arg14[%c0_95, %c0_96] : memref<512x128xf32, #tpu.memory_space<vmem>>, vector<512x128xf32>
    %cst_97 = arith.constant dense<0.000000e+00> : vector<2x128xf32>
    %594 = tpu.matmul %592, %593, %cst_97 {dimension_numbers = #tpu.dot_dimension_numbers<[1], [0], [0], [1], [0, 0, 1, 1], [], []>} : vector<2x512xf32>, vector<512x128xf32>, vector<2x128xf32> -> vector<2x128xf32>
    %c0_98 = arith.constant 0 : index
    %c0_99 = arith.constant 0 : index
    %595 = vector.load %arg15[%c0_98, %c0_99] : memref<1x128xf32, #tpu.memory_space<vmem>>, vector<1x128xf32>
    %596 = vector.broadcast %595 : vector<1x128xf32> to vector<2x128xf32>
    %597 = arith.addf %594, %596 : vector<2x128xf32>
    %cst_100 = arith.constant 0.000000e+00 : f32
    %598 = vector.broadcast %cst_100 : f32 to vector<2x128xf32>
    %599 = arith.maximumf %597, %598 : vector<2x128xf32>
    %c0_101 = arith.constant 0 : index
    %c0_102 = arith.constant 0 : index
    %600 = vector.load %arg3[%c0_101, %c0_102] : memref<2x128xf32, #tpu.memory_space<vmem>>, vector<2x128xf32>
    %c0_103 = arith.constant 0 : index
    %c0_104 = arith.constant 0 : index
    %601 = vector.load %arg16[%c0_103, %c0_104] : memref<128x512xf32, #tpu.memory_space<vmem>>, vector<128x512xf32>
    %cst_105 = arith.constant dense<0.000000e+00> : vector<2x512xf32>
    %602 = tpu.matmul %600, %601, %cst_105 {dimension_numbers = #tpu.dot_dimension_numbers<[1], [0], [0], [1], [0, 0, 1, 1], [], []>} : vector<2x128xf32>, vector<128x512xf32>, vector<2x512xf32> -> vector<2x512xf32>
    %c0_106 = arith.constant 0 : index
    %c0_107 = arith.constant 0 : index
    %603 = vector.load %arg17[%c0_106, %c0_107] : memref<1x512xf32, #tpu.memory_space<vmem>>, vector<1x512xf32>
    %604 = vector.broadcast %603 : vector<1x512xf32> to vector<2x512xf32>
    %605 = arith.addf %602, %604 : vector<2x512xf32>
    %cst_108 = arith.constant 0.000000e+00 : f32
    %606 = vector.broadcast %cst_108 : f32 to vector<2x512xf32>
    %607 = arith.maximumf %605, %606 : vector<2x512xf32>
    %c0_109 = arith.constant 0 : index
    %c0_110 = arith.constant 0 : index
    %608 = vector.load %arg18[%c0_109, %c0_110] : memref<512x128xf32, #tpu.memory_space<vmem>>, vector<512x128xf32>
    %cst_111 = arith.constant dense<0.000000e+00> : vector<2x128xf32>
    %609 = tpu.matmul %607, %608, %cst_111 {dimension_numbers = #tpu.dot_dimension_numbers<[1], [0], [0], [1], [0, 0, 1, 1], [], []>} : vector<2x512xf32>, vector<512x128xf32>, vector<2x128xf32> -> vector<2x128xf32>
    %c0_112 = arith.constant 0 : index
    %c0_113 = arith.constant 0 : index
    %610 = vector.load %arg19[%c0_112, %c0_113] : memref<1x128xf32, #tpu.memory_space<vmem>>, vector<1x128xf32>
    %611 = vector.broadcast %610 : vector<1x128xf32> to vector<2x128xf32>
    %612 = arith.addf %609, %611 : vector<2x128xf32>
    %cst_114 = arith.constant 0.000000e+00 : f32
    %613 = vector.broadcast %cst_114 : f32 to vector<2x128xf32>
    %614 = arith.maximumf %612, %613 : vector<2x128xf32>
    %c0_115 = arith.constant 0 : index
    %c0_116 = arith.constant 0 : index
    %615 = vector.load %arg20[%c0_115, %c0_116] : memref<128x128xf32, #tpu.memory_space<vmem>>, vector<128x128xf32>
    %cst_117 = arith.constant dense<0.000000e+00> : vector<2x128xf32>
    %616 = tpu.matmul %599, %615, %cst_117 {dimension_numbers = #tpu.dot_dimension_numbers<[1], [0], [0], [1], [0, 0, 1, 1], [], []>} : vector<2x128xf32>, vector<128x128xf32>, vector<2x128xf32> -> vector<2x128xf32>
    %c0_118 = arith.constant 0 : index
    %c0_119 = arith.constant 0 : index
    %617 = vector.load %arg21[%c0_118, %c0_119] : memref<128x128xf32, #tpu.memory_space<vmem>>, vector<128x128xf32>
    %cst_120 = arith.constant dense<0.000000e+00> : vector<2x128xf32>
    %618 = tpu.matmul %616, %617, %cst_120 {dimension_numbers = #tpu.dot_dimension_numbers<[1], [0], [0], [1], [0, 0, 1, 1], [], []>} : vector<2x128xf32>, vector<128x128xf32>, vector<2x128xf32> -> vector<2x128xf32>
    %619 = arith.mulf %614, %618 : vector<2x128xf32>
    %620 = arith.addf %614, %618 : vector<2x128xf32>
    %621 = arith.addf %614, %599 : vector<2x128xf32>
    %622 = arith.mulf %614, %599 : vector<2x128xf32>
    %c0_121 = arith.constant 0 : index
    %c0_122 = arith.constant 0 : index
    %623 = vector.load %arg23[%c0_121, %c0_122] : memref<1x256xf32, #tpu.memory_space<vmem>>, vector<1x256xf32>
    %c0_123 = arith.constant 0 : index
    %c0_124 = arith.constant 0 : index
    %c0_125 = arith.constant 0 : index
    %624 = vector.load %arg22[%c0_123, %c0_124, %c0_125] : memref<8x128x256xf32, #tpu.memory_space<vmem>>, vector<1x128x256xf32>
    %625 = vector.shape_cast %624 : vector<1x128x256xf32> to vector<128x256xf32>
    %cst_126 = arith.constant dense<0.000000e+00> : vector<2x256xf32>
    %626 = tpu.matmul %619, %625, %cst_126 {dimension_numbers = #tpu.dot_dimension_numbers<[1], [0], [0], [1], [0, 0, 1, 1], [], []>} : vector<2x128xf32>, vector<128x256xf32>, vector<2x256xf32> -> vector<2x256xf32>
    %627 = vector.broadcast %623 : vector<1x256xf32> to vector<2x256xf32>
    %628 = arith.addf %627, %626 : vector<2x256xf32>
    %c1 = arith.constant 1 : index
    %c0_127 = arith.constant 0 : index
    %c0_128 = arith.constant 0 : index
    %629 = vector.load %arg22[%c1, %c0_127, %c0_128] : memref<8x128x256xf32, #tpu.memory_space<vmem>>, vector<1x128x256xf32>
    %630 = vector.shape_cast %629 : vector<1x128x256xf32> to vector<128x256xf32>
    %cst_129 = arith.constant dense<0.000000e+00> : vector<2x256xf32>
    %631 = tpu.matmul %620, %630, %cst_129 {dimension_numbers = #tpu.dot_dimension_numbers<[1], [0], [0], [1], [0, 0, 1, 1], [], []>} : vector<2x128xf32>, vector<128x256xf32>, vector<2x256xf32> -> vector<2x256xf32>
    %632 = arith.addf %628, %631 : vector<2x256xf32>
    %c2 = arith.constant 2 : index
    %c0_130 = arith.constant 0 : index
    %c0_131 = arith.constant 0 : index
    %633 = vector.load %arg22[%c2, %c0_130, %c0_131] : memref<8x128x256xf32, #tpu.memory_space<vmem>>, vector<1x128x256xf32>
    %634 = vector.shape_cast %633 : vector<1x128x256xf32> to vector<128x256xf32>
    %cst_132 = arith.constant dense<0.000000e+00> : vector<2x256xf32>
    %635 = tpu.matmul %618, %634, %cst_132 {dimension_numbers = #tpu.dot_dimension_numbers<[1], [0], [0], [1], [0, 0, 1, 1], [], []>} : vector<2x128xf32>, vector<128x256xf32>, vector<2x256xf32> -> vector<2x256xf32>
    %636 = arith.addf %632, %635 : vector<2x256xf32>
    %c3 = arith.constant 3 : index
    %c0_133 = arith.constant 0 : index
    %c0_134 = arith.constant 0 : index
    %637 = vector.load %arg22[%c3, %c0_133, %c0_134] : memref<8x128x256xf32, #tpu.memory_space<vmem>>, vector<1x128x256xf32>
    %638 = vector.shape_cast %637 : vector<1x128x256xf32> to vector<128x256xf32>
    %cst_135 = arith.constant dense<0.000000e+00> : vector<2x256xf32>
    %639 = tpu.matmul %616, %638, %cst_135 {dimension_numbers = #tpu.dot_dimension_numbers<[1], [0], [0], [1], [0, 0, 1, 1], [], []>} : vector<2x128xf32>, vector<128x256xf32>, vector<2x256xf32> -> vector<2x256xf32>
    %640 = arith.addf %636, %639 : vector<2x256xf32>
    %c4 = arith.constant 4 : index
    %c0_136 = arith.constant 0 : index
    %c0_137 = arith.constant 0 : index
    %641 = vector.load %arg22[%c4, %c0_136, %c0_137] : memref<8x128x256xf32, #tpu.memory_space<vmem>>, vector<1x128x256xf32>
    %642 = vector.shape_cast %641 : vector<1x128x256xf32> to vector<128x256xf32>
    %cst_138 = arith.constant dense<0.000000e+00> : vector<2x256xf32>
    %643 = tpu.matmul %599, %642, %cst_138 {dimension_numbers = #tpu.dot_dimension_numbers<[1], [0], [0], [1], [0, 0, 1, 1], [], []>} : vector<2x128xf32>, vector<128x256xf32>, vector<2x256xf32> -> vector<2x256xf32>
    %644 = arith.addf %640, %643 : vector<2x256xf32>
    %c5 = arith.constant 5 : index
    %c0_139 = arith.constant 0 : index
    %c0_140 = arith.constant 0 : index
    %645 = vector.load %arg22[%c5, %c0_139, %c0_140] : memref<8x128x256xf32, #tpu.memory_space<vmem>>, vector<1x128x256xf32>
    %646 = vector.shape_cast %645 : vector<1x128x256xf32> to vector<128x256xf32>
    %cst_141 = arith.constant dense<0.000000e+00> : vector<2x256xf32>
    %647 = tpu.matmul %614, %646, %cst_141 {dimension_numbers = #tpu.dot_dimension_numbers<[1], [0], [0], [1], [0, 0, 1, 1], [], []>} : vector<2x128xf32>, vector<128x256xf32>, vector<2x256xf32> -> vector<2x256xf32>
    %648 = arith.addf %644, %647 : vector<2x256xf32>
    %c6 = arith.constant 6 : index
    %c0_142 = arith.constant 0 : index
    %c0_143 = arith.constant 0 : index
    %649 = vector.load %arg22[%c6, %c0_142, %c0_143] : memref<8x128x256xf32, #tpu.memory_space<vmem>>, vector<1x128x256xf32>
    %650 = vector.shape_cast %649 : vector<1x128x256xf32> to vector<128x256xf32>
    %cst_144 = arith.constant dense<0.000000e+00> : vector<2x256xf32>
    %651 = tpu.matmul %621, %650, %cst_144 {dimension_numbers = #tpu.dot_dimension_numbers<[1], [0], [0], [1], [0, 0, 1, 1], [], []>} : vector<2x128xf32>, vector<128x256xf32>, vector<2x256xf32> -> vector<2x256xf32>
    %652 = arith.addf %648, %651 : vector<2x256xf32>
    %c7 = arith.constant 7 : index
    %c0_145 = arith.constant 0 : index
    %c0_146 = arith.constant 0 : index
    %653 = vector.load %arg22[%c7, %c0_145, %c0_146] : memref<8x128x256xf32, #tpu.memory_space<vmem>>, vector<1x128x256xf32>
    %654 = vector.shape_cast %653 : vector<1x128x256xf32> to vector<128x256xf32>
    %cst_147 = arith.constant dense<0.000000e+00> : vector<2x256xf32>
    %655 = tpu.matmul %622, %654, %cst_147 {dimension_numbers = #tpu.dot_dimension_numbers<[1], [0], [0], [1], [0, 0, 1, 1], [], []>} : vector<2x128xf32>, vector<128x256xf32>, vector<2x256xf32> -> vector<2x256xf32>
    %656 = arith.addf %652, %655 : vector<2x256xf32>
    %cst_148 = arith.constant 0.000000e+00 : f32
    %657 = vector.broadcast %cst_148 : f32 to vector<2x256xf32>
    %658 = arith.cmpf ogt, %656, %657 : vector<2x256xf32>
    %cst_149 = arith.constant 1.000000e-01 : f32
    %659 = vector.broadcast %cst_149 : f32 to vector<2x256xf32>
    %660 = arith.mulf %659, %656 : vector<2x256xf32>
    %661 = arith.select %658, %656, %660 : vector<2x256xi1>, vector<2x256xf32>
    %c0_150 = arith.constant 0 : index
    %c0_151 = arith.constant 0 : index
    %662 = vector.load %arg24[%c0_150, %c0_151] : memref<256x128xf32, #tpu.memory_space<vmem>>, vector<256x128xf32>
    %cst_152 = arith.constant dense<0.000000e+00> : vector<2x128xf32>
    %663 = tpu.matmul %661, %662, %cst_152 {dimension_numbers = #tpu.dot_dimension_numbers<[1], [0], [0], [1], [0, 0, 1, 1], [], []>} : vector<2x256xf32>, vector<256x128xf32>, vector<2x128xf32> -> vector<2x128xf32>
    %c0_153 = arith.constant 0 : index
    %c0_154 = arith.constant 0 : index
    %664 = vector.load %arg25[%c0_153, %c0_154] : memref<1x128xf32, #tpu.memory_space<vmem>>, vector<1x128xf32>
    %665 = vector.broadcast %664 : vector<1x128xf32> to vector<2x128xf32>
    %666 = arith.addf %663, %665 : vector<2x128xf32>
    %cst_155 = arith.constant 0.000000e+00 : f32
    %667 = vector.broadcast %cst_155 : f32 to vector<2x128xf32>
    %668 = arith.cmpf ogt, %666, %667 : vector<2x128xf32>
    %cst_156 = arith.constant 1.000000e-01 : f32
    %669 = vector.broadcast %cst_156 : f32 to vector<2x128xf32>
    %670 = arith.mulf %669, %666 : vector<2x128xf32>
    %671 = arith.select %668, %666, %670 : vector<2x128xi1>, vector<2x128xf32>
    %c0_157 = arith.constant 0 : index
    %c0_158 = arith.constant 0 : index
    %672 = vector.load %arg26[%c0_157, %c0_158] : memref<128x1xf32, #tpu.memory_space<vmem>>, vector<128x1xf32>
    %cst_159 = arith.constant dense<0.000000e+00> : vector<2x1xf32>
    %673 = tpu.matmul %671, %672, %cst_159 {dimension_numbers = #tpu.dot_dimension_numbers<[1], [0], [0], [1], [0, 0, 1, 1], [], []>} : vector<2x128xf32>, vector<128x1xf32>, vector<2x1xf32> -> vector<2x1xf32>
    %c0_160 = arith.constant 0 : index
    %c0_161 = arith.constant 0 : index
    %674 = vector.load %arg27[%c0_160, %c0_161] : memref<1x1xf32, #tpu.memory_space<vmem>>, vector<1x1xf32>
    %675 = vector.broadcast %674 : vector<1x1xf32> to vector<2x1xf32>
    %676 = arith.addf %673, %675 : vector<2x1xf32>
    %c0_162 = arith.constant 0 : index
    %c0_163 = arith.constant 0 : index
    %677 = vector.load %arg28[%c0_162, %c0_163] : memref<2x1xf32, #tpu.memory_space<vmem>>, vector<2x1xf32>
    tpu.vector_store %arg28[%c0_162, %c0_163], %676 {strides = array<i32>} : memref<2x1xf32, #tpu.memory_space<vmem>>, vector<2x1xf32>,
    return
  }
}

</mosaic_0001>

<llo_original>
// kernel: deepkgi_forward.1
$region0: #{deepkgi_forward.1}
  #allocation0 [shape = 'u32[]', space=smem, size = 0x4, offset = 0x4, fixed_abs, tag = 'smem constant byte address 0x4 - core index']
  #allocation1 [shape = 'u32[72,128]{1,0:T(1,128)}', space=vmem, size = 0x9000, scoped, tag = 'internal scratch']
  #allocation2 [shape = 'f32[1,1]{1,0:T(1,128)S(1)}', space=vmem, size = 0x200, scoped, tag = 'scoped memory for deepkgi_forward.1']
  %s0 = inlined_call_operand.vmem [shape: s32[32,1], index: 0, kind: input, shape index: {}]
  %s1 = inlined_call_operand.vmem [shape: s32[2,1], index: 1, kind: input, shape index: {}]
  %s2 = inlined_call_operand.vmem [shape: f32[2,128], index: 2, kind: input, shape index: {}]
  %s3 = inlined_call_operand.vmem [shape: f32[2,128], index: 3, kind: input, shape index: {}]
  %s4 = inlined_call_operand.vmem [shape: f32[32,128], index: 4, kind: input, shape index: {}]
  %s5 = inlined_call_operand.hbm [shape: f32[128,384], index: 5, kind: input, shape index: {}]
  %s6 = inlined_call_operand.hbm [shape: f32[128,384], index: 6, kind: input, shape index: {}]
  %s7 = inlined_call_operand.vmem [shape: f32[1,384], index: 7, kind: input, shape index: {}]
  %s8 = inlined_call_operand.vmem [shape: f32[1,384], index: 8, kind: input, shape index: {}]
  %s9 = inlined_call_operand.vmem [shape: f32[128,128], index: 9, kind: input, shape index: {}]
  %s10 = inlined_call_operand.vmem [shape: f32[1,128], index: 10, kind: input, shape index: {}]
  %s11 = inlined_call_operand.hbm [shape: f32[128,512], index: 11, kind: input, shape index: {}]
  %s12 = inlined_call_operand.hbm [shape: f32[128,512], index: 12, kind: input, shape index: {}]
  %s13 = inlined_call_operand.vmem [shape: f32[1,512], index: 13, kind: input, shape index: {}]
  %s14 = inlined_call_operand.hbm [shape: f32[512,128], index: 14, kind: input, shape index: {}]
  %s15 = inlined_call_operand.vmem [shape: f32[1,128], index: 15, kind: input, shape index: {}]
  %s16 = inlined_call_operand.hbm [shape: f32[128,512], index: 16, kind: input, shape index: {}]
  %s17 = inlined_call_operand.vmem [shape: f32[1,512], index: 17, kind: input, shape index: {}]
  %s18 = inlined_call_operand.hbm [shape: f32[512,128], index: 18, kind: input, shape index: {}]
  %s19 = inlined_call_operand.vmem [shape: f32[1,128], index: 19, kind: input, shape index: {}]
  %s20 = inlined_call_operand.hbm [shape: f32[128,128], index: 20, kind: input, shape index: {}]
  %s21 = inlined_call_operand.hbm [shape: f32[128,128], index: 21, kind: input, shape index: {}]
  %s22 = inlined_call_operand.hbm [shape: f32[8,128,256], index: 22, kind: input, shape index: {}]
  %s23 = inlined_call_operand.vmem [shape: f32[1,256], index: 23, kind: input, shape index: {}]
  %s24 = inlined_call_operand.hbm [shape: f32[256,128], index: 24, kind: input, shape index: {}]
  %s25 = inlined_call_operand.vmem [shape: f32[1,128], index: 25, kind: input, shape index: {}]
  %s26 = inlined_call_operand.vmem [shape: f32[128,1], index: 26, kind: input, shape index: {}]
  %s27 = inlined_call_operand.<no memory space> [shape: f32[1,1], index: 27, kind: input, shape index: {}]
  %s28 = inlined_call_operand.vmem [shape: f32[2,1], index: 28, kind: output, shape index: {}]
  %s29 = sld [smem:[#allocation0]]
  $region166: #{deepkgi_forward.1} parent=0
    _
  %s31 = ssub.s32 1, %s29
  %s32 = scalar_select 0, %s31, %s29
  %v33 = vstv %s27
  %34 = vst [vmem:[#allocation2] sm:$0x1] %v33
  $region1: #{deepkgi_forward.1} parent=0
    #allocation3 [shape = 'u8[196608]{0}', space=vmem, size = 0x30000, scoped, tag = 'input window, operand 5, single buffered']
    #allocation4 [shape = 's32[1]{0}', space=sflag, size = 0x4, scoped, tag = 'scoped memory for deepkgi_forward.1']
    #allocation5 [shape = 'u8[196608]{0}', space=vmem, size = 0x30000, scoped, tag = 'input window, operand 6, single buffered']
    #allocation6 [shape = 's32[1]{0}', space=sflag, size = 0x4, scoped, tag = 'scoped memory for deepkgi_forward.1']
    #allocation7 [shape = 'u8[262144]{0}', space=vmem, size = 0x40000, scoped, tag = 'input window, operand 11, single buffered']
    #allocation8 [shape = 'u8[262144]{0}', space=vmem, size = 0x40000, scoped, tag = 'input window, operand 12, single buffered']
    #allocation9 [shape = 's32[1]{0}', space=sflag, size = 0x4, scoped, tag = 'scoped memory for deepkgi_forward.1']
    #allocation10 [shape = 'u8[262144]{0}', space=vmem, size = 0x40000, scoped, tag = 'input window, operand 14, single buffered']
    #allocation11 [shape = 'u8[262144]{0}', space=vmem, size = 0x40000, scoped, tag = 'input window, operand 16, single buffered']
    #allocation12 [shape = 's32[1]{0}', space=sflag, size = 0x4, scoped, tag = 'scoped memory for deepkgi_forward.1']
    #allocation13 [shape = 'u8[262144]{0}', space=vmem, size = 0x40000, scoped, tag = 'input window, operand 18, single buffered']
    #allocation14 [shape = 'u8[65536]{0}', space=vmem, size = 0x10000, scoped, tag = 'input window, operand 20, single buffered']
    #allocation15 [shape = 's32[1]{0}', space=sflag, size = 0x4, scoped, tag = 'scoped memory for deepkgi_forward.1']
    #allocation16 [shape = 'u8[65536]{0}', space=vmem, size = 0x10000, scoped, tag = 'input window, operand 21, single buffered']
    #allocation17 [shape = 'u8[1048576]{0}', space=vmem, size = 0x100000, scoped, tag = 'input window, operand 22, single buffered']
    #allocation18 [shape = 's32[1]{0}', space=sflag, size = 0x4, scoped, tag = 'scoped memory for deepkgi_forward.1']
    #allocation19 [shape = 'u8[131072]{0}', space=vmem, size = 0x20000, scoped, tag = 'input window, operand 24, single buffered']
    %35 = vsyncpa [#allocation4], 0
    %36 = vsyncpa [#allocation6], 0
    %37 = vsyncpa [#allocation9], 0
    %38 = vsyncpa [#allocation12], 0
    %39 = vsyncpa [#allocation15], 0
    %40 = vsyncpa [#allocation18], 0
    // Predicated region
    $region2: #{deepkgi_forward.1} parent=1 // pred_check
      _
    $region3: #{deepkgi_forward.1} parent=1 // pred_check_branch
      %42 = sbr.rel (0) target = $region5
    $region4: #{deepkgi_forward.1} parent=1 // pred_region
      _
    $region5: #{deepkgi_forward.1} parent=1 // pred_fallthru
      _
    // Predicated region
    $region6: #{deepkgi_forward.1} parent=1 // pred_check
      _
    $region7: #{deepkgi_forward.1} parent=1 // pred_check_branch
      %44 = sbr.rel (0) target = $region9
    $region8: #{deepkgi_forward.1} parent=1 // pred_region
      _
    $region9: #{deepkgi_forward.1} parent=1 // pred_fallthru
      _
    // Predicated region
    $region10: #{deepkgi_forward.1} parent=1 // pred_check
      _
    $region11: #{deepkgi_forward.1} parent=1 // pred_check_branch
      %46 = sbr.rel (0) target = $region13
    $region12: #{deepkgi_forward.1} parent=1 // pred_region
      _
    $region13: #{deepkgi_forward.1} parent=1 // pred_fallthru
      _
    // Predicated region
    $region14: #{deepkgi_forward.1} parent=1 // pred_check
      _
    $region15: #{deepkgi_forward.1} parent=1 // pred_check_branch
      %48 = sbr.rel (0) target = $region17
    $region16: #{deepkgi_forward.1} parent=1 // pred_region
      _
    $region17: #{deepkgi_forward.1} parent=1 // pred_fallthru
      _
    // Predicated region
    $region18: #{deepkgi_forward.1} parent=1 // pred_check
      _
    $region19: #{deepkgi_forward.1} parent=1 // pred_check_branch
      %50 = sbr.rel (0) target = $region21
    $region20: #{deepkgi_forward.1} parent=1 // pred_region
      _
    $region21: #{deepkgi_forward.1} parent=1 // pred_fallthru
      _
    // Predicated region
    $region22: #{deepkgi_forward.1} parent=1 // pred_check
      _
    $region23: #{deepkgi_forward.1} parent=1 // pred_check_branch
      %52 = sbr.rel (0) target = $region25
    $region24: #{deepkgi_forward.1} parent=1 // pred_region
      %54 = vsyncadd [#allocation4], 0
      %s55 = sshll.u32 %s5, 4
      %s56 = int_to_ptr.hbm [resolvable:$true] %s55
      %s57 = sshll.u32 [#allocation3], 4
      %s58 = int_to_ptr.vmem [resolvable:$true] %s57
      %63 = dma.hbm_to_vmem [thread:$0]  %s56, 6144, %s58, [#allocation4], 384, 384, 24
    $region25: #{deepkgi_forward.1} parent=1 // pred_fallthru
      _
    // Predicated region
    $region26: #{deepkgi_forward.1} parent=1 // pred_check
      _
    $region27: #{deepkgi_forward.1} parent=1 // pred_check_branch
      %65 = sbr.rel (0) target = $region29
    $region28: #{deepkgi_forward.1} parent=1 // pred_region
      %67 = vsyncadd [#allocation6], 0
      %s68 = sshll.u32 %s6, 4
      %s69 = int_to_ptr.hbm [resolvable:$true] %s68
      %s70 = sshll.u32 [#allocation5], 4
      %s71 = int_to_ptr.vmem [resolvable:$true] %s70
      %76 = dma.hbm_to_vmem [thread:$0]  %s69, 6144, %s71, [#allocation6], 384, 384, 24
    $region29: #{deepkgi_forward.1} parent=1 // pred_fallthru
      _
    // Predicated region
    $region30: #{deepkgi_forward.1} parent=1 // pred_check
      _
    $region31: #{deepkgi_forward.1} parent=1 // pred_check_branch
      %78 = sbr.rel (0) target = $region33
    $region32: #{deepkgi_forward.1} parent=1 // pred_region
      _
    $region33: #{deepkgi_forward.1} parent=1 // pred_fallthru
      _
    // Predicated region
    $region34: #{deepkgi_forward.1} parent=1 // pred_check
      _
    $region35: #{deepkgi_forward.1} parent=1 // pred_check_branch
      %80 = sbr.rel (0) target = $region37
    $region36: #{deepkgi_forward.1} parent=1 // pred_region
      _
    $region37: #{deepkgi_forward.1} parent=1 // pred_fallthru
      _
    // Predicated region
    $region38: #{deepkgi_forward.1} parent=1 // pred_check
      _
    $region39: #{deepkgi_forward.1} parent=1 // pred_check_branch
      %82 = sbr.rel (0) target = $region41
    $region40: #{deepkgi_forward.1} parent=1 // pred_region
      _
    $region41: #{deepkgi_forward.1} parent=1 // pred_fallthru
      _
    // Predicated region
    $region42: #{deepkgi_forward.1} parent=1 // pred_check
      _
    $region43: #{deepkgi_forward.1} parent=1 // pred_check_branch
      %84 = sbr.rel (0) target = $region45
    $region44: #{deepkgi_forward.1} parent=1 // pred_region
      _
    $region45: #{deepkgi_forward.1} parent=1 // pred_fallthru
      _
    // Predicated region
    $region46: #{deepkgi_forward.1} parent=1 // pred_check
      _
    $region47: #{deepkgi_forward.1} parent=1 // pred_check_branch
      %86 = sbr.rel (0) target = $region49
    $region48: #{deepkgi_forward.1} parent=1 // pred_region
      %88 = vsyncadd [#allocation6], 0
      %s89 = sshll.u32 %s11, 4
      %s90 = int_to_ptr.hbm [resolvable:$true] %s89
      %s91 = sshll.u32 [#allocation7], 4
      %s92 = int_to_ptr.vmem [resolvable:$true] %s91
      %97 = dma.hbm_to_vmem [thread:$0]  %s90, 8192, %s92, [#allocation6], 512, 512, 32
    $region49: #{deepkgi_forward.1} parent=1 // pred_fallthru
      _
    // Predicated region
    $region50: #{deepkgi_forward.1} parent=1 // pred_check
      _
    $region51: #{deepkgi_forward.1} parent=1 // pred_check_branch
      %99 = sbr.rel (0) target = $region53
    $region52: #{deepkgi_forward.1} parent=1 // pred_region
      %101 = vsyncadd [#allocation9], 0
      %s102 = sshll.u32 %s12, 4
      %s103 = int_to_ptr.hbm [resolvable:$true] %s102
      %s104 = sshll.u32 [#allocation8], 4
      %s105 = int_to_ptr.vmem [resolvable:$true] %s104
      %110 = dma.hbm_to_vmem [thread:$0]  %s103, 8192, %s105, [#allocation9], 512, 512, 32
    $region53: #{deepkgi_forward.1} parent=1 // pred_fallthru
      _
    // Predicated region
    $region54: #{deepkgi_forward.1} parent=1 // pred_check
      _
    $region55: #{deepkgi_forward.1} parent=1 // pred_check_branch
      %112 = sbr.rel (0) target = $region57
    $region56: #{deepkgi_forward.1} parent=1 // pred_region
      _
    $region57: #{deepkgi_forward.1} parent=1 // pred_fallthru
      _
    // Predicated region
    $region58: #{deepkgi_forward.1} parent=1 // pred_check
      _
    $region59: #{deepkgi_forward.1} parent=1 // pred_check_branch
      %114 = sbr.rel (0) target = $region61
    $region60: #{deepkgi_forward.1} parent=1 // pred_region
      %116 = vsyncadd [#allocation9], 0
      %s117 = sshll.u32 %s14, 4
      %s118 = int_to_ptr.hbm [resolvable:$true] %s117
      %s119 = sshll.u32 [#allocation10], 4
      %s120 = int_to_ptr.vmem [resolvable:$true] %s119
      %125 = dma.hbm_to_vmem [thread:$0]  %s118, 8192, %s120, [#allocation9], 128, 128, 8
    $region61: #{deepkgi_forward.1} parent=1 // pred_fallthru
      _
    // Predicated region
    $region62: #{deepkgi_forward.1} parent=1 // pred_check
      _
    $region63: #{deepkgi_forward.1} parent=1 // pred_check_branch
      %127 = sbr.rel (0) target = $region65
    $region64: #{deepkgi_forward.1} parent=1 // pred_region
      _
    $region65: #{deepkgi_forward.1} parent=1 // pred_fallthru
      _
    // Predicated region
    $region66: #{deepkgi_forward.1} parent=1 // pred_check
      _
    $region67: #{deepkgi_forward.1} parent=1 // pred_check_branch
      %129 = sbr.rel (0) target = $region69
    $region68: #{deepkgi_forward.1} parent=1 // pred_region
      %131 = vsyncadd [#allocation12], 0
      %s132 = sshll.u32 %s16, 4
      %s133 = int_to_ptr.hbm [resolvable:$true] %s132
      %s134 = sshll.u32 [#allocation11], 4
      %s135 = int_to_ptr.vmem [resolvable:$true] %s134
      %140 = dma.hbm_to_vmem [thread:$0]  %s133, 8192, %s135, [#allocation12], 512, 512, 32
    $region69: #{deepkgi_forward.1} parent=1 // pred_fallthru
      _
    // Predicated region
    $region70: #{deepkgi_forward.1} parent=1 // pred_check
      _
    $region71: #{deepkgi_forward.1} parent=1 // pred_check_branch
      %142 = sbr.rel (0) target = $region73
    $region72: #{deepkgi_forward.1} parent=1 // pred_region
      _
    $region73: #{deepkgi_forward.1} parent=1 // pred_fallthru
      _
    // Predicated region
    $region74: #{deepkgi_forward.1} parent=1 // pred_check
      _
    $region75: #{deepkgi_forward.1} parent=1 // pred_check_branch
      %144 = sbr.rel (0) target = $region77
    $region76: #{deepkgi_forward.1} parent=1 // pred_region
      %146 = vsyncadd [#allocation12], 0
      %s147 = sshll.u32 %s18, 4
      %s148 = int_to_ptr.hbm [resolvable:$true] %s147
      %s149 = sshll.u32 [#allocation13], 4
      %s150 = int_to_ptr.vmem [resolvable:$true] %s149
      %155 = dma.hbm_to_vmem [thread:$0]  %s148, 8192, %s150, [#allocation12], 128, 128, 8
    $region77: #{deepkgi_forward.1} parent=1 // pred_fallthru
      _
    // Predicated region
    $region78: #{deepkgi_forward.1} parent=1 // pred_check
      _
    $region79: #{deepkgi_forward.1} parent=1 // pred_check_branch
      %157 = sbr.rel (0) target = $region81
    $region80: #{deepkgi_forward.1} parent=1 // pred_region
      _
    $region81: #{deepkgi_forward.1} parent=1 // pred_fallthru
      _
    // Predicated region
    $region82: #{deepkgi_forward.1} parent=1 // pred_check
      _
    $region83: #{deepkgi_forward.1} parent=1 // pred_check_branch
      %159 = sbr.rel (0) target = $region85
    $region84: #{deepkgi_forward.1} parent=1 // pred_region
      %161 = vsyncadd [#allocation15], 0
      %s162 = sshll.u32 %s20, 4
      %s163 = int_to_ptr.hbm [resolvable:$true] %s162
      %s164 = sshll.u32 [#allocation14], 4
      %s165 = int_to_ptr.vmem [resolvable:$true] %s164
      %170 = dma.hbm_to_vmem [thread:$0]  %s163, 2048, %s165, [#allocation15], 128, 128, 8
    $region85: #{deepkgi_forward.1} parent=1 // pred_fallthru
      _
    // Predicated region
    $region86: #{deepkgi_forward.1} parent=1 // pred_check
      _
    $region87: #{deepkgi_forward.1} parent=1 // pred_check_branch
      %172 = sbr.rel (0) target = $region89
    $region88: #{deepkgi_forward.1} parent=1 // pred_region
      %174 = vsyncadd [#allocation15], 0
      %s175 = sshll.u32 %s21, 4
      %s176 = int_to_ptr.hbm [resolvable:$true] %s175
      %s177 = sshll.u32 [#allocation16], 4
      %s178 = int_to_ptr.vmem [resolvable:$true] %s177
      %183 = dma.hbm_to_vmem [thread:$0]  %s176, 2048, %s178, [#allocation15], 128, 128, 8
    $region89: #{deepkgi_forward.1} parent=1 // pred_fallthru
      _
    // Predicated region
    $region90: #{deepkgi_forward.1} parent=1 // pred_check
      _
    $region91: #{deepkgi_forward.1} parent=1 // pred_check_branch
      %185 = sbr.rel (0) target = $region93
    $region92: #{deepkgi_forward.1} parent=1 // pred_region
      %187 = vsyncadd [#allocation18], 0
      %s188 = sshll.u32 %s22, 4
      %s189 = int_to_ptr.hbm [resolvable:$true] %s188
      %s190 = sshll.u32 [#allocation17], 4
      %s191 = int_to_ptr.vmem [resolvable:$true] %s190
      %196 = dma.hbm_to_vmem [thread:$0]  %s189, 32768, %s191, [#allocation18], 256, 256, 16
    $region93: #{deepkgi_forward.1} parent=1 // pred_fallthru
      _
    // Predicated region
    $region94: #{deepkgi_forward.1} parent=1 // pred_check
      _
    $region95: #{deepkgi_forward.1} parent=1 // pred_check_branch
      %198 = sbr.rel (0) target = $region97
    $region96: #{deepkgi_forward.1} parent=1 // pred_region
      _
    $region97: #{deepkgi_forward.1} parent=1 // pred_fallthru
      _
    // Predicated region
    $region98: #{deepkgi_forward.1} parent=1 // pred_check
      _
    $region99: #{deepkgi_forward.1} parent=1 // pred_check_branch
      %200 = sbr.rel (0) target = $region101
    $region100: #{deepkgi_forward.1} parent=1 // pred_region
      %202 = vsyncadd [#allocation18], 0
      %s203 = sshll.u32 %s24, 4
      %s204 = int_to_ptr.hbm [resolvable:$true] %s203
      %s205 = sshll.u32 [#allocation19], 4
      %s206 = int_to_ptr.vmem [resolvable:$true] %s205
      %211 = dma.hbm_to_vmem [thread:$0]  %s204, 4096, %s206, [#allocation18], 128, 128, 8
    $region101: #{deepkgi_forward.1} parent=1 // pred_fallthru
      _
    // Predicated region
    $region102: #{deepkgi_forward.1} parent=1 // pred_check
      _
    $region103: #{deepkgi_forward.1} parent=1 // pred_check_branch
      %213 = sbr.rel (0) target = $region105
    $region104: #{deepkgi_forward.1} parent=1 // pred_region
      _
    $region105: #{deepkgi_forward.1} parent=1 // pred_fallthru
      _
    // Predicated region
    $region106: #{deepkgi_forward.1} parent=1 // pred_check
      _
    $region107: #{deepkgi_forward.1} parent=1 // pred_check_branch
      %215 = sbr.rel (0) target = $region109
    $region108: #{deepkgi_forward.1} parent=1 // pred_region
      _
    $region109: #{deepkgi_forward.1} parent=1 // pred_fallthru
      _
    // Predicated region
    $region110: #{deepkgi_forward.1} parent=1 // pred_check
      _
    $region111: #{deepkgi_forward.1} parent=1 // pred_check_branch
      %217 = sbr.rel (0) target = $region113
    $region112: #{deepkgi_forward.1} parent=1 // pred_region
      _
    $region113: #{deepkgi_forward.1} parent=1 // pred_fallthru
      _
    // Predicated region
    $region114: #{deepkgi_forward.1} parent=1 // pred_check
      _
    $region115: #{deepkgi_forward.1} parent=1 // pred_check_branch
      %219 = sbr.rel (0) target = $region117
    $region116: #{deepkgi_forward.1} parent=1 // pred_region
      %221 = dma.done [#allocation4], 6144
    $region117: #{deepkgi_forward.1} parent=1 // pred_fallthru
      _
    // Predicated region
    $region118: #{deepkgi_forward.1} parent=1 // pred_check
      _
    $region119: #{deepkgi_forward.1} parent=1 // pred_check_branch
      %223 = sbr.rel (0) target = $region121
    $region120: #{deepkgi_forward.1} parent=1 // pred_region
      %225 = dma.done [#allocation6], 6144
    $region121: #{deepkgi_forward.1} parent=1 // pred_fallthru
      _
    // Predicated region
    $region122: #{deepkgi_forward.1} parent=1 // pred_check
      _
    $region123: #{deepkgi_forward.1} parent=1 // pred_check_branch
      %227 = sbr.rel (0) target = $region125
    $region124: #{deepkgi_forward.1} parent=1 // pred_region
      %229 = dma.done [#allocation6], 8192
    $region125: #{deepkgi_forward.1} parent=1 // pred_fallthru
      _
    // Predicated region
    $region126: #{deepkgi_forward.1} parent=1 // pred_check
      _
    $region127: #{deepkgi_forward.1} parent=1 // pred_check_branch
      %231 = sbr.rel (0) target = $region129
    $region128: #{deepkgi_forward.1} parent=1 // pred_region
      %233 = dma.done [#allocation9], 8192
    $region129: #{deepkgi_forward.1} parent=1 // pred_fallthru
      _
    // Predicated region
    $region130: #{deepkgi_forward.1} parent=1 // pred_check
      _
    $region131: #{deepkgi_forward.1} parent=1 // pred_check_branch
      %235 = sbr.rel (0) target = $region133
    $region132: #{deepkgi_forward.1} parent=1 // pred_region
      %237 = dma.done [#allocation9], 8192
    $region133: #{deepkgi_forward.1} parent=1 // pred_fallthru
      _
    // Predicated region
    $region134: #{deepkgi_forward.1} parent=1 // pred_check
      _
    $region135: #{deepkgi_forward.1} parent=1 // pred_check_branch
      %239 = sbr.rel (0) target = $region137
    $region136: #{deepkgi_forward.1} parent=1 // pred_region
      %241 = dma.done [#allocation12], 8192
    $region137: #{deepkgi_forward.1} parent=1 // pred_fallthru
      _
    // Predicated region
    $region138: #{deepkgi_forward.1} parent=1 // pred_check
      _
    $region139: #{deepkgi_forward.1} parent=1 // pred_check_branch
      %243 = sbr.rel (0) target = $region141
    $region140: #{deepkgi_forward.1} parent=1 // pred_region
      %245 = dma.done [#allocation12], 8192
    $region141: #{deepkgi_forward.1} parent=1 // pred_fallthru
      _
    // Predicated region
    $region142: #{deepkgi_forward.1} parent=1 // pred_check
      _
    $region143: #{deepkgi_forward.1} parent=1 // pred_check_branch
      %247 = sbr.rel (0) target = $region145
    $region144: #{deepkgi_forward.1} parent=1 // pred_region
      %249 = dma.done [#allocation15], 2048
    $region145: #{deepkgi_forward.1} parent=1 // pred_fallthru
      _
    // Predicated region
    $region146: #{deepkgi_forward.1} parent=1 // pred_check
      _
    $region147: #{deepkgi_forward.1} parent=1 // pred_check_branch
      %251 = sbr.rel (0) target = $region149
    $region148: #{deepkgi_forward.1} parent=1 // pred_region
      %253 = dma.done [#allocation15], 2048
    $region149: #{deepkgi_forward.1} parent=1 // pred_fallthru
      _
    // Predicated region
    $region150: #{deepkgi_forward.1} parent=1 // pred_check
      _
    $region151: #{deepkgi_forward.1} parent=1 // pred_check_branch
      %255 = sbr.rel (0) target = $region153
    $region152: #{deepkgi_forward.1} parent=1 // pred_region
      %257 = dma.done [#allocation18], 32768
    $region153: #{deepkgi_forward.1} parent=1 // pred_fallthru
      _
    // Predicated region
    $region154: #{deepkgi_forward.1} parent=1 // pred_check
      _
    $region155: #{deepkgi_forward.1} parent=1 // pred_check_branch
      %259 = sbr.rel (0) target = $region157
    $region156: #{deepkgi_forward.1} parent=1 // pred_region
      %261 = dma.done [#allocation18], 4096
    $region157: #{deepkgi_forward.1} parent=1 // pred_fallthru
      _
    %v262 = vld [vmem:[%s0] sm:$0xff]
    %v263 = vld [vmem:[%s0 + $0x8] sm:$0xff]
    %v264 = vld [vmem:[%s0 + $0x10] sm:$0xff]
    %v265 = vld [vmem:[%s0 + $0x18] sm:$0xff]
    %v266 = vlaneseq
    %v267 = vand.u32 %v266, 127
    %268 = vset.pattern.permute.xlu0 0
    %269 = vperm.xlu0 %268, %v262
    %v270 = vpop.permute.xlu0 %269
    %271 = vset.pattern.permute.xlu0 0
    %272 = vperm.xlu0 %271, %v263
    %v273 = vpop.permute.xlu0 %272
    %274 = vset.pattern.permute.xlu0 0
    %275 = vperm.xlu0 %274, %v264
    %v276 = vpop.permute.xlu0 %275
    %277 = vset.pattern.permute.xlu0 0
    %278 = vperm.xlu0 %277, %v265
    %v279 = vpop.permute.xlu0 %278
    %vm280 = vcmp.eq.s32.totalorder %v270, %v267
    %vm281 = vcmp.eq.s32.totalorder %v273, %v267
    %vm282 = vcmp.eq.s32.totalorder %v276, %v267
    %vm283 = vcmp.eq.s32.totalorder %v279, %v267
    %v284 = vsel %vm280, 1, 0
    %v285 = vsel %vm281, 1, 0
    %v286 = vsel %vm282, 1, 0
    %v287 = vsel %vm283, 1, 0
    %v288 = vcvt.s32.f32 %v284
    %v289 = vcvt.s32.f32 %v285
    %v290 = vcvt.s32.f32 %v286
    %v291 = vcvt.s32.f32 %v287
    %v292 = vld [vmem:[%s4] sm:$0xff]
    %v293 = vld [vmem:[%s4 + $0x8] sm:$0xff]
    %v294 = vld [vmem:[%s4 + $0x10] sm:$0xff]
    %v295 = vld [vmem:[%s4 + $0x18] sm:$0xff]
    %vm296 = vcmask 261120
    %v298 = vsel %vm296, %v288, 0
    %v301 = vsel %vm296, %v289, 0
    %v304 = vsel %vm296, %v290, 0
    %v307 = vsel %vm296, %v291, 0
    %309 = vmatpush.msra.mxu0 0.0
    %310 = vmatpush.msra.mxu0 0.0
    %311 = vmatpush.msra.mxu0 0.0
    %312 = vmatpush.msra.mxu0 0.0
    %313 = vmatpush.msra.mxu0 0.0
    %314 = vmatpush.msra.mxu0 0.0
    %315 = vmatpush.msra.mxu0 0.0
    %316 = vmatpush.msra.mxu0 0.0
    %317 = vmatpush.msra.mxu0 0.0
    %318 = vmatpush.msra.mxu0 0.0
    %319 = vmatpush.msra.mxu0 0.0
    %320 = vmatpush.msra.mxu0 0.0
    %321 = vmatpush.msra.mxu0 %v295
    %322 = vmatpush.msra.mxu0 %v294
    %323 = vmatpush.msra.mxu0 %v293
    %324 = vmatpush.msra.mxu0 %v292
    %325 = vmatmul.f32.gmra.mxu0 %v298
    %v326 = vpop.f32.mrf.mxu0
    %v327 = vadd.f32 0.0, %v326
    %328 = vmatmul.f32.gmra.mxu0 %v301
    %v329 = vpop.f32.mrf.mxu0
    %v330 = vadd.f32 0.0, %v329
    %331 = vmatmul.f32.gmra.mxu0 %v304
    %v332 = vpop.f32.mrf.mxu0
    %v333 = vadd.f32 0.0, %v332
    %334 = vmatmul.f32.gmra.mxu0 %v307
    %v335 = vpop.f32.mrf.mxu0
    %v336 = vadd.f32 0.0, %v335
    %337 = vdwg.mxu0
    %v338 = vld [vmem:[#allocation3] sm:$0xff]
    %v339 = vld [vmem:[#allocation3 + $0x8] sm:$0xff]
    %v340 = vld [vmem:[#allocation3 + $0x10] sm:$0xff]
    %v341 = vld [vmem:[#allocation3 + $0x18] sm:$0xff]
    %v342 = vld [vmem:[#allocation3 + $0x20] sm:$0xff]
    %v343 = vld [vmem:[#allocation3 + $0x28] sm:$0xff]
    %v344 = vld [vmem:[#allocation3 + $0x30] sm:$0xff]
    %v345 = vld [vmem:[#allocation3 + $0x38] sm:$0xff]
    %v346 = vld [vmem:[#allocation3 + $0x40] sm:$0xff]
    %v347 = vld [vmem:[#allocation3 + $0x48] sm:$0xff]
    %v348 = vld [vmem:[#allocation3 + $0x50] sm:$0xff]
    %v349 = vld [vmem:[#allocation3 + $0x58] sm:$0xff]
    %v350 = vld [vmem:[#allocation3 + $0x60] sm:$0xff]
    %v351 = vld [vmem:[#allocation3 + $0x68] sm:$0xff]
    %v352 = vld [vmem:[#allocation3 + $0x70] sm:$0xff]
    %v353 = vld [vmem:[#allocation3 + $0x78] sm:$0xff]
    %v354 = vld [vmem:[#allocation3 + $0x80] sm:$0xff]
    %v355 = vld [vmem:[#allocation3 + $0x88] sm:$0xff]
    %v356 = vld [vmem:[#allocation3 + $0x90] sm:$0xff]
    %v357 = vld [vmem:[#allocation3 + $0x98] sm:$0xff]
    %v358 = vld [vmem:[#allocation3 + $0xa0] sm:$0xff]
    %v359 = vld [vmem:[#allocation3 + $0xa8] sm:$0xff]
    %v360 = vld [vmem:[#allocation3 + $0xb0] sm:$0xff]
    %v361 = vld [vmem:[#allocation3 + $0xb8] sm:$0xff]
    %v362 = vld [vmem:[#allocation3 + $0xc0] sm:$0xff]
    %v363 = vld [vmem:[#allocation3 + $0xc8] sm:$0xff]
    %v364 = vld [vmem:[#allocation3 + $0xd0] sm:$0xff]
    %v365 = vld [vmem:[#allocation3 + $0xd8] sm:$0xff]
    %v366 = vld [vmem:[#allocation3 + $0xe0] sm:$0xff]
    %v367 = vld [vmem:[#allocation3 + $0xe8] sm:$0xff]
    %v368 = vld [vmem:[#allocation3 + $0xf0] sm:$0xff]
    %v369 = vld [vmem:[#allocation3 + $0xf8] sm:$0xff]
    %v370 = vld [vmem:[#allocation3 + $0x100] sm:$0xff]
    %v371 = vld [vmem:[#allocation3 + $0x108] sm:$0xff]
    %v372 = vld [vmem:[#allocation3 + $0x110] sm:$0xff]
    %v373 = vld [vmem:[#allocation3 + $0x118] sm:$0xff]
    %v374 = vld [vmem:[#allocation3 + $0x120] sm:$0xff]
    %v375 = vld [vmem:[#allocation3 + $0x128] sm:$0xff]
    %v376 = vld [vmem:[#allocation3 + $0x130] sm:$0xff]
    %v377 = vld [vmem:[#allocation3 + $0x138] sm:$0xff]
    %v378 = vld [vmem:[#allocation3 + $0x140] sm:$0xff]
    %v379 = vld [vmem:[#allocation3 + $0x148] sm:$0xff]
    %v380 = vld [vmem:[#allocation3 + $0x150] sm:$0xff]
    %v381 = vld [vmem:[#allocation3 + $0x158] sm:$0xff]
    %v382 = vld [vmem:[#allocation3 + $0x160] sm:$0xff]
    %v383 = vld [vmem:[#allocation3 + $0x168] sm:$0xff]
    %v384 = vld [vmem:[#allocation3 + $0x170] sm:$0xff]
    %v385 = vld [vmem:[#allocation3 + $0x178] sm:$0xff]
    %v386 = vld [vmem:[%s7] sm:$0x7]
    %v388 = vperm.slane %v386, 0
    %v389 = vperm.slane %v386, 1
    %v390 = vperm.slane %v386, 2
    %394 = vmatpush.msra.mxu0 %v383
    %395 = vmatpush.msra.mxu0 %v380
    %396 = vmatpush.msra.mxu0 %v377
    %397 = vmatpush.msra.mxu0 %v374
    %398 = vmatpush.msra.mxu0 %v371
    %399 = vmatpush.msra.mxu0 %v368
    %400 = vmatpush.msra.mxu0 %v365
    %401 = vmatpush.msra.mxu0 %v362
    %402 = vmatpush.msra.mxu0 %v359
    %403 = vmatpush.msra.mxu0 %v356
    %404 = vmatpush.msra.mxu0 %v353
    %405 = vmatpush.msra.mxu0 %v350
    %406 = vmatpush.msra.mxu0 %v347
    %407 = vmatpush.msra.mxu0 %v344
    %408 = vmatpush.msra.mxu0 %v341
    %409 = vmatpush.msra.mxu0 %v338
    %410 = vmatmul.f32.gmra.mxu0 %v327
    %v411 = vpop.f32.mrf.mxu0
    %v412 = vadd.f32 %v388, %v411
    %413 = vmatmul.f32.gmra.mxu0 %v330
    %v414 = vpop.f32.mrf.mxu0
    %v415 = vadd.f32 %v388, %v414
    %416 = vmatmul.f32.gmra.mxu0 %v333
    %v417 = vpop.f32.mrf.mxu0
    %v418 = vadd.f32 %v388, %v417
    %419 = vmatmul.f32.gmra.mxu0 %v336
    %v420 = vpop.f32.mrf.mxu0
    %v421 = vadd.f32 %v388, %v420
    %422 = vdwg.mxu0
    %423 = vmatpush.msra.mxu0 %v384
    %424 = vmatpush.msra.mxu0 %v381
    %425 = vmatpush.msra.mxu0 %v378
    %426 = vmatpush.msra.mxu0 %v375
    %427 = vmatpush.msra.mxu0 %v372
    %428 = vmatpush.msra.mxu0 %v369
    %429 = vmatpush.msra.mxu0 %v366
    %430 = vmatpush.msra.mxu0 %v363
    %431 = vmatpush.msra.mxu0 %v360
    %432 = vmatpush.msra.mxu0 %v357
    %433 = vmatpush.msra.mxu0 %v354
    %434 = vmatpush.msra.mxu0 %v351
    %435 = vmatpush.msra.mxu0 %v348
    %436 = vmatpush.msra.mxu0 %v345
    %437 = vmatpush.msra.mxu0 %v342
    %438 = vmatpush.msra.mxu0 %v339
    %439 = vmatmul.f32.gmra.mxu0 %v327
    %v440 = vpop.f32.mrf.mxu0
    %v441 = vadd.f32 %v389, %v440
    %442 = vmatmul.f32.gmra.mxu0 %v330
    %v443 = vpop.f32.mrf.mxu0
    %v444 = vadd.f32 %v389, %v443
    %445 = vmatmul.f32.gmra.mxu0 %v333
    %v446 = vpop.f32.mrf.mxu0
    %v447 = vadd.f32 %v389, %v446
    %448 = vmatmul.f32.gmra.mxu0 %v336
    %v449 = vpop.f32.mrf.mxu0
    %v450 = vadd.f32 %v389, %v449
    %451 = vdwg.mxu0
    %452 = vmatpush.msra.mxu0 %v385
    %453 = vmatpush.msra.mxu0 %v382
    %454 = vmatpush.msra.mxu0 %v379
    %455 = vmatpush.msra.mxu0 %v376
    %456 = vmatpush.msra.mxu0 %v373
    %457 = vmatpush.msra.mxu0 %v370
    %458 = vmatpush.msra.mxu0 %v367
    %459 = vmatpush.msra.mxu0 %v364
    %460 = vmatpush.msra.mxu0 %v361
    %461 = vmatpush.msra.mxu0 %v358
    %462 = vmatpush.msra.mxu0 %v355
    %463 = vmatpush.msra.mxu0 %v352
    %464 = vmatpush.msra.mxu0 %v349
    %465 = vmatpush.msra.mxu0 %v346
    %466 = vmatpush.msra.mxu0 %v343
    %467 = vmatpush.msra.mxu0 %v340
    %468 = vmatmul.f32.gmra.mxu0 %v327
    %v469 = vpop.f32.mrf.mxu0
    %v470 = vadd.f32 %v390, %v469
    %471 = vmatmul.f32.gmra.mxu0 %v330
    %v472 = vpop.f32.mrf.mxu0
    %v473 = vadd.f32 %v390, %v472
    %474 = vmatmul.f32.gmra.mxu0 %v333
    %v475 = vpop.f32.mrf.mxu0
    %v476 = vadd.f32 %v390, %v475
    %477 = vmatmul.f32.gmra.mxu0 %v336
    %v478 = vpop.f32.mrf.mxu0
    %v479 = vadd.f32 %v390, %v478
    %480 = vdwg.mxu0
    %v481 = vld [vmem:[#allocation5] sm:$0xff]
    %v482 = vld [vmem:[#allocation5 + $0x8] sm:$0xff]
    %v483 = vld [vmem:[#allocation5 + $0x10] sm:$0xff]
    %v484 = vld [vmem:[#allocation5 + $0x18] sm:$0xff]
    %v485 = vld [vmem:[#allocation5 + $0x20] sm:$0xff]
    %v486 = vld [vmem:[#allocation5 + $0x28] sm:$0xff]
    %v487 = vld [vmem:[#allocation5 + $0x30] sm:$0xff]
    %v488 = vld [vmem:[#allocation5 + $0x38] sm:$0xff]
    %v489 = vld [vmem:[#allocation5 + $0x40] sm:$0xff]
    %v490 = vld [vmem:[#allocation5 + $0x48] sm:$0xff]
    %v491 = vld [vmem:[#allocation5 + $0x50] sm:$0xff]
    %v492 = vld [vmem:[#allocation5 + $0x58] sm:$0xff]
    %v493 = vld [vmem:[#allocation5 + $0x60] sm:$0xff]
    %v494 = vld [vmem:[#allocation5 + $0x68] sm:$0xff]
    %v495 = vld [vmem:[#allocation5 + $0x70] sm:$0xff]
    %v496 = vld [vmem:[#allocation5 + $0x78] sm:$0xff]
    %v497 = vld [vmem:[#allocation5 + $0x80] sm:$0xff]
    %v498 = vld [vmem:[#allocation5 + $0x88] sm:$0xff]
    %v499 = vld [vmem:[#allocation5 + $0x90] sm:$0xff]
    %v500 = vld [vmem:[#allocation5 + $0x98] sm:$0xff]
    %v501 = vld [vmem:[#allocation5 + $0xa0] sm:$0xff]
    %v502 = vld [vmem:[#allocation5 + $0xa8] sm:$0xff]
    %v503 = vld [vmem:[#allocation5 + $0xb0] sm:$0xff]
    %v504 = vld [vmem:[#allocation5 + $0xb8] sm:$0xff]
    %v505 = vld [vmem:[#allocation5 + $0xc0] sm:$0xff]
    %v506 = vld [vmem:[#allocation5 + $0xc8] sm:$0xff]
    %v507 = vld [vmem:[#allocation5 + $0xd0] sm:$0xff]
    %v508 = vld [vmem:[#allocation5 + $0xd8] sm:$0xff]
    %v509 = vld [vmem:[#allocation5 + $0xe0] sm:$0xff]
    %v510 = vld [vmem:[#allocation5 + $0xe8] sm:$0xff]
    %v511 = vld [vmem:[#allocation5 + $0xf0] sm:$0xff]
    %v512 = vld [vmem:[#allocation5 + $0xf8] sm:$0xff]
    %v513 = vld [vmem:[#allocation5 + $0x100] sm:$0xff]
    %v514 = vld [vmem:[#allocation5 + $0x108] sm:$0xff]
    %v515 = vld [vmem:[#allocation5 + $0x110] sm:$0xff]
    %v516 = vld [vmem:[#allocation5 + $0x118] sm:$0xff]
    %v517 = vld [vmem:[#allocation5 + $0x120] sm:$0xff]
    %v518 = vld [vmem:[#allocation5 + $0x128] sm:$0xff]
    %v519 = vld [vmem:[#allocation5 + $0x130] sm:$0xff]
    %v520 = vld [vmem:[#allocation5 + $0x138] sm:$0xff]
    %v521 = vld [vmem:[#allocation5 + $0x140] sm:$0xff]
    %v522 = vld [vmem:[#allocation5 + $0x148] sm:$0xff]
    %v523 = vld [vmem:[#allocation5 + $0x150] sm:$0xff]
    %v524 = vld [vmem:[#allocation5 + $0x158] sm:$0xff]
    %v525 = vld [vmem:[#allocation5 + $0x160] sm:$0xff]
    %v526 = vld [vmem:[#allocation5 + $0x168] sm:$0xff]
    %v527 = vld [vmem:[#allocation5 + $0x170] sm:$0xff]
    %v528 = vld [vmem:[#allocation5 + $0x178] sm:$0xff]
    %v529 = vld [vmem:[%s8] sm:$0x7]
    %v530 = vld [vmem:[%s1] sm:$0x3]
    %v532 = vperm.slane %v529, 0
    %v533 = vperm.slane %v529, 1
    %v534 = vperm.slane %v529, 2
    %538 = vmatpush.msra.mxu0 %v526
    %539 = vmatpush.msra.mxu0 %v523
    %540 = vmatpush.msra.mxu0 %v520
    %541 = vmatpush.msra.mxu0 %v517
    %542 = vmatpush.msra.mxu0 %v514
    %543 = vmatpush.msra.mxu0 %v511
    %544 = vmatpush.msra.mxu0 %v508
    %545 = vmatpush.msra.mxu0 %v505
    %546 = vmatpush.msra.mxu0 %v502
    %547 = vmatpush.msra.mxu0 %v499
    %548 = vmatpush.msra.mxu0 %v496
    %549 = vmatpush.msra.mxu0 %v493
    %550 = vmatpush.msra.mxu0 %v490
    %551 = vmatpush.msra.mxu0 %v487
    %552 = vmatpush.msra.mxu0 %v484
    %553 = vmatpush.msra.mxu0 %v481
    %554 = vmatmul.f32.gmra.mxu0 0.0
    %v555 = vpop.f32.mrf.mxu0
    %v556 = vadd.f32 %v532, %v555
    %557 = vdwg.mxu0
    %558 = vmatpush.msra.mxu0 %v527
    %559 = vmatpush.msra.mxu0 %v524
    %560 = vmatpush.msra.mxu0 %v521
    %561 = vmatpush.msra.mxu0 %v518
    %562 = vmatpush.msra.mxu0 %v515
    %563 = vmatpush.msra.mxu0 %v512
    %564 = vmatpush.msra.mxu0 %v509
    %565 = vmatpush.msra.mxu0 %v506
    %566 = vmatpush.msra.mxu0 %v503
    %567 = vmatpush.msra.mxu0 %v500
    %568 = vmatpush.msra.mxu0 %v497
    %569 = vmatpush.msra.mxu0 %v494
    %570 = vmatpush.msra.mxu0 %v491
    %571 = vmatpush.msra.mxu0 %v488
    %572 = vmatpush.msra.mxu0 %v485
    %573 = vmatpush.msra.mxu0 %v482
    %574 = vmatmul.f32.gmra.mxu0 0.0
    %v575 = vpop.f32.mrf.mxu0
    %v576 = vadd.f32 %v533, %v575
    %577 = vdwg.mxu0
    %578 = vmatpush.msra.mxu0 %v528
    %579 = vmatpush.msra.mxu0 %v525
    %580 = vmatpush.msra.mxu0 %v522
    %581 = vmatpush.msra.mxu0 %v519
    %582 = vmatpush.msra.mxu0 %v516
    %583 = vmatpush.msra.mxu0 %v513
    %584 = vmatpush.msra.mxu0 %v510
    %585 = vmatpush.msra.mxu0 %v507
    %586 = vmatpush.msra.mxu0 %v504
    %587 = vmatpush.msra.mxu0 %v501
    %588 = vmatpush.msra.mxu0 %v498
    %589 = vmatpush.msra.mxu0 %v495
    %590 = vmatpush.msra.mxu0 %v492
    %591 = vmatpush.msra.mxu0 %v489
    %592 = vmatpush.msra.mxu0 %v486
    %593 = vmatpush.msra.mxu0 %v483
    %594 = vmatmul.f32.gmra.mxu0 0.0
    %v595 = vpop.f32.mrf.mxu0
    %v596 = vadd.f32 %v534, %v595
    %597 = vdwg.mxu0
    %v598 = vadd.f32 %v412, %v556
    %v599 = vxor.u32 %v598, 2147483648
    %v600 = vmul.f32 %v599, 1.442695
    %v601 = vpow.pop %v600
    %v602 = vadd.f32 %v601, 1.0
    %v603 = vrcp.pop %v602
    %v604 = vmul.f32 %v602, %v603
    %v605 = vsub.f32 1.0, %v604
    %v606 = vmul.f32 %v603, %v605
    %v607 = vadd.f32 %v603, %v606
    %vm608 = vweird.f32 %v602
    %vm609 = vweird.f32 %v603
    %vm610 = vmor %vm608, %vm609
    %v611 = vsel %vm610, %v603, %v607
    %v612 = vand.u32 2147483647, %v602
    %vm613 = vcmp.eq.f32.partialorder %v612, 8.507059e+37
    %v614 = vand.u32 %v602, 2147483648
    %v615 = vor.u32 1.1754944e-38, %v614
    %v616 = vsel %vm613, %v615, %v611
    %v617 = vmul.f32 1.0, %v616
    %v618 = vadd.f32 %v441, %v576
    %v619 = vxor.u32 %v618, 2147483648
    %v620 = vmul.f32 %v619, 1.442695
    %v621 = vpow.pop %v620
    %v622 = vadd.f32 %v621, 1.0
    %v623 = vrcp.pop %v622
    %v624 = vmul.f32 %v622, %v623
    %v625 = vsub.f32 1.0, %v624
    %v626 = vmul.f32 %v623, %v625
    %v627 = vadd.f32 %v623, %v626
    %vm628 = vweird.f32 %v622
    %vm629 = vweird.f32 %v623
    %vm630 = vmor %vm628, %vm629
    %v631 = vsel %vm630, %v623, %v627
    %v632 = vand.u32 2147483647, %v622
    %vm633 = vcmp.eq.f32.partialorder %v632, 8.507059e+37
    %v634 = vand.u32 %v622, 2147483648
    %v635 = vor.u32 1.1754944e-38, %v634
    %v636 = vsel %vm633, %v635, %v631
    %v637 = vmul.f32 1.0, %v636
    %v638 = vmul.f32 %v617, %v596
    %v639 = vadd.f32 %v470, %v638
    %v640 = vtanh.pop %v639
    %v641 = vsub.f32 1.0, %v637
    %v642 = vmul.f32 %v641, %v640
    %v643 = vmul.f32 %v637, 0.0
    %v644 = vadd.f32 %v642, %v643
    %vm645 = vcmp.gt.s32.totalorder %v530, 0
    %v646 = vsel %vm645, 1, 0
    %647 = vset.pattern.permute.xlu0 0
    %648 = vperm.xlu0 %647, %v646
    %v649 = vpop.permute.xlu0 %648
    %vm650 = vcmp.eq.s32.totalorder %v649, 1
    %v651 = vsel %vm650, %v644, 0.0
    %652 = vmatpush.msra.mxu0 %v526
    %653 = vmatpush.msra.mxu0 %v523
    %654 = vmatpush.msra.mxu0 %v520
    %655 = vmatpush.msra.mxu0 %v517
    %656 = vmatpush.msra.mxu0 %v514
    %657 = vmatpush.msra.mxu0 %v511
    %658 = vmatpush.msra.mxu0 %v508
    %659 = vmatpush.msra.mxu0 %v505
    %660 = vmatpush.msra.mxu0 %v502
    %661 = vmatpush.msra.mxu0 %v499
    %662 = vmatpush.msra.mxu0 %v496
    %663 = vmatpush.msra.mxu0 %v493
    %664 = vmatpush.msra.mxu0 %v490
    %665 = vmatpush.msra.mxu0 %v487
    %666 = vmatpush.msra.mxu0 %v484
    %667 = vmatpush.msra.mxu0 %v481
    %668 = vmatmul.f32.gmra.mxu0 %v651
    %v669 = vpop.f32.mrf.mxu0
    %v670 = vadd.f32 %v532, %v669
    %671 = vdwg.mxu0
    %672 = vmatpush.msra.mxu0 %v527
    %673 = vmatpush.msra.mxu0 %v524
    %674 = vmatpush.msra.mxu0 %v521
    %675 = vmatpush.msra.mxu0 %v518
    %676 = vmatpush.msra.mxu0 %v515
    %677 = vmatpush.msra.mxu0 %v512
    %678 = vmatpush.msra.mxu0 %v509
    %679 = vmatpush.msra.mxu0 %v506
    %680 = vmatpush.msra.mxu0 %v503
    %681 = vmatpush.msra.mxu0 %v500
    %682 = vmatpush.msra.mxu0 %v497
    %683 = vmatpush.msra.mxu0 %v494
    %684 = vmatpush.msra.mxu0 %v491
    %685 = vmatpush.msra.mxu0 %v488
    %686 = vmatpush.msra.mxu0 %v485
    %687 = vmatpush.msra.mxu0 %v482
    %688 = vmatmul.f32.gmra.mxu0 %v651
    %v689 = vpop.f32.mrf.mxu0
    %v690 = vadd.f32 %v533, %v689
    %691 = vdwg.mxu0
    %692 = vmatpush.msra.mxu0 %v528
    %693 = vmatpush.msra.mxu0 %v525
    %694 = vmatpush.msra.mxu0 %v522
    %695 = vmatpush.msra.mxu0 %v519
    %696 = vmatpush.msra.mxu0 %v516
    %697 = vmatpush.msra.mxu0 %v513
    %698 = vmatpush.msra.mxu0 %v510
    %699 = vmatpush.msra.mxu0 %v507
    %700 = vmatpush.msra.mxu0 %v504
    %701 = vmatpush.msra.mxu0 %v501
    %702 = vmatpush.msra.mxu0 %v498
    %703 = vmatpush.msra.mxu0 %v495
    %704 = vmatpush.msra.mxu0 %v492
    %705 = vmatpush.msra.mxu0 %v489
    %706 = vmatpush.msra.mxu0 %v486
    %707 = vmatpush.msra.mxu0 %v483
    %708 = vmatmul.f32.gmra.mxu0 %v651
    %v709 = vpop.f32.mrf.mxu0
    %v710 = vadd.f32 %v534, %v709
    %711 = vdwg.mxu0
    %v713 = vrot.slane %v670, 6
    %v715 = vadd.f32 %v412, %v713
    %v716 = vxor.u32 %v715, 2147483648
    %v717 = vmul.f32 %v716, 1.442695
    %v718 = vpow.pop %v717
    %v719 = vadd.f32 %v718, 1.0
    %v720 = vrcp.pop %v719
    %v721 = vmul.f32 %v719, %v720
    %v722 = vsub.f32 1.0, %v721
    %v723 = vmul.f32 %v720, %v722
    %v724 = vadd.f32 %v720, %v723
    %vm725 = vweird.f32 %v719
    %vm726 = vweird.f32 %v720
    %vm727 = vmor %vm725, %vm726
    %v728 = vsel %vm727, %v720, %v724
    %v729 = vand.u32 2147483647, %v719
    %vm730 = vcmp.eq.f32.partialorder %v729, 8.507059e+37
    %v731 = vand.u32 %v719, 2147483648
    %v732 = vor.u32 1.1754944e-38, %v731
    %v733 = vsel %vm730, %v732, %v728
    %v734 = vmul.f32 1.0, %v733
    %v736 = vrot.slane %v690, 6
    %v738 = vadd.f32 %v441, %v736
    %v739 = vxor.u32 %v738, 2147483648
    %v740 = vmul.f32 %v739, 1.442695
    %v741 = vpow.pop %v740
    %v742 = vadd.f32 %v741, 1.0
    %v743 = vrcp.pop %v742
    %v744 = vmul.f32 %v742, %v743
    %v745 = vsub.f32 1.0, %v744
    %v746 = vmul.f32 %v743, %v745
    %v747 = vadd.f32 %v743, %v746
    %vm748 = vweird.f32 %v742
    %vm749 = vweird.f32 %v743
    %vm750 = vmor %vm748, %vm749
    %v751 = vsel %vm750, %v743, %v747
    %v752 = vand.u32 2147483647, %v742
    %vm753 = vcmp.eq.f32.partialorder %v752, 8.507059e+37
    %v754 = vand.u32 %v742, 2147483648
    %v755 = vor.u32 1.1754944e-38, %v754
    %v756 = vsel %vm753, %v755, %v751
    %v757 = vmul.f32 1.0, %v756
    %v759 = vrot.slane %v710, 6
    %v761 = vmul.f32 %v734, %v759
    %v762 = vadd.f32 %v470, %v761
    %v763 = vtanh.pop %v762
    %v764 = vsub.f32 1.0, %v757
    %v765 = vmul.f32 %v764, %v763
    %v767 = vrot.slane %v651, 6
    %v769 = vmul.f32 %v757, %v767
    %v770 = vadd.f32 %v765, %v769
    %vm771 = vcmp.gt.s32.totalorder %v530, 1
    %v772 = vsel %vm771, 1, 0
    %773 = vset.pattern.permute.xlu0 0
    %774 = vperm.xlu0 %773, %v772
    %v775 = vpop.permute.xlu0 %774
    %vm776 = vcmp.eq.s32.totalorder %v775, 1
    %v778 = vrot.slane %v770, 2
    %v780 = vsel %vm776, %v778, %v651
    %781 = vmatpush.msra.mxu0 %v526
    %782 = vmatpush.msra.mxu0 %v523
    %783 = vmatpush.msra.mxu0 %v520
    %784 = vmatpush.msra.mxu0 %v517
    %785 = vmatpush.msra.mxu0 %v514
    %786 = vmatpush.msra.mxu0 %v511
    %787 = vmatpush.msra.mxu0 %v508
    %788 = vmatpush.msra.mxu0 %v505
    %789 = vmatpush.msra.mxu0 %v502
    %790 = vmatpush.msra.mxu0 %v499
    %791 = vmatpush.msra.mxu0 %v496
    %792 = vmatpush.msra.mxu0 %v493
    %793 = vmatpush.msra.mxu0 %v490
    %794 = vmatpush.msra.mxu0 %v487
    %795 = vmatpush.msra.mxu0 %v484
    %796 = vmatpush.msra.mxu0 %v481
    %797 = vmatmul.f32.gmra.mxu0 %v780
    %v798 = vpop.f32.mrf.mxu0
    %v799 = vadd.f32 %v532, %v798
    %800 = vdwg.mxu0
    %801 = vmatpush.msra.mxu0 %v527
    %802 = vmatpush.msra.mxu0 %v524
    %803 = vmatpush.msra.mxu0 %v521
    %804 = vmatpush.msra.mxu0 %v518
    %805 = vmatpush.msra.mxu0 %v515
    %806 = vmatpush.msra.mxu0 %v512
    %807 = vmatpush.msra.mxu0 %v509
    %808 = vmatpush.msra.mxu0 %v506
    %809 = vmatpush.msra.mxu0 %v503
    %810 = vmatpush.msra.mxu0 %v500
    %811 = vmatpush.msra.mxu0 %v497
    %812 = vmatpush.msra.mxu0 %v494
    %813 = vmatpush.msra.mxu0 %v491
    %814 = vmatpush.msra.mxu0 %v488
    %815 = vmatpush.msra.mxu0 %v485
    %816 = vmatpush.msra.mxu0 %v482
    %817 = vmatmul.f32.gmra.mxu0 %v780
    %v818 = vpop.f32.mrf.mxu0
    %v819 = vadd.f32 %v533, %v818
    %820 = vdwg.mxu0
    %821 = vmatpush.msra.mxu0 %v528
    %822 = vmatpush.msra.mxu0 %v525
    %823 = vmatpush.msra.mxu0 %v522
    %824 = vmatpush.msra.mxu0 %v519
    %825 = vmatpush.msra.mxu0 %v516
    %826 = vmatpush.msra.mxu0 %v513
    %827 = vmatpush.msra.mxu0 %v510
    %828 = vmatpush.msra.mxu0 %v507
    %829 = vmatpush.msra.mxu0 %v504
    %830 = vmatpush.msra.mxu0 %v501
    %831 = vmatpush.msra.mxu0 %v498
    %832 = vmatpush.msra.mxu0 %v495
    %833 = vmatpush.msra.mxu0 %v492
    %834 = vmatpush.msra.mxu0 %v489
    %835 = vmatpush.msra.mxu0 %v486
    %836 = vmatpush.msra.mxu0 %v483
    %837 = vmatmul.f32.gmra.mxu0 %v780
    %v838 = vpop.f32.mrf.mxu0
    %v839 = vadd.f32 %v534, %v838
    %840 = vdwg.mxu0
    %v842 = vrot.slane %v799, 4
    %v844 = vadd.f32 %v412, %v842
    %v845 = vxor.u32 %v844, 2147483648
    %v846 = vmul.f32 %v845, 1.442695
    %v847 = vpow.pop %v846
    %v848 = vadd.f32 %v847, 1.0
    %v849 = vrcp.pop %v848
    %v850 = vmul.f32 %v848, %v849
    %v851 = vsub.f32 1.0, %v850
    %v852 = vmul.f32 %v849, %v851
    %v853 = vadd.f32 %v849, %v852
    %vm854 = vweird.f32 %v848
    %vm855 = vweird.f32 %v849
    %vm856 = vmor %vm854, %vm855
    %v857 = vsel %vm856, %v849, %v853
    %v858 = vand.u32 2147483647, %v848
    %vm859 = vcmp.eq.f32.partialorder %v858, 8.507059e+37
    %v860 = vand.u32 %v848, 2147483648
    %v861 = vor.u32 1.1754944e-38, %v860
    %v862 = vsel %vm859, %v861, %v857
    %v863 = vmul.f32 1.0, %v862
    %v865 = vrot.slane %v819, 4
    %v867 = vadd.f32 %v441, %v865
    %v868 = vxor.u32 %v867, 2147483648
    %v869 = vmul.f32 %v868, 1.442695
    %v870 = vpow.pop %v869
    %v871 = vadd.f32 %v870, 1.0
    %v872 = vrcp.pop %v871
    %v873 = vmul.f32 %v871, %v872
    %v874 = vsub.f32 1.0, %v873
    %v875 = vmul.f32 %v872, %v874
    %v876 = vadd.f32 %v872, %v875
    %vm877 = vweird.f32 %v871
    %vm878 = vweird.f32 %v872
    %vm879 = vmor %vm877, %vm878
    %v880 = vsel %vm879, %v872, %v876
    %v881 = vand.u32 2147483647, %v871
    %vm882 = vcmp.eq.f32.partialorder %v881, 8.507059e+37
    %v883 = vand.u32 %v871, 2147483648
    %v884 = vor.u32 1.1754944e-38, %v883
    %v885 = vsel %vm882, %v884, %v880
    %v886 = vmul.f32 1.0, %v885
    %v888 = vrot.slane %v839, 4
    %v890 = vmul.f32 %v863, %v888
    %v891 = vadd.f32 %v470, %v890
    %v892 = vtanh.pop %v891
    %v893 = vsub.f32 1.0, %v886
    %v894 = vmul.f32 %v893, %v892
    %v896 = vrot.slane %v780, 4
    %v898 = vmul.f32 %v886, %v896
    %v899 = vadd.f32 %v894, %v898
    %vm900 = vcmp.gt.s32.totalorder %v530, 2
    %v901 = vsel %vm900, 1, 0
    %902 = vset.pattern.permute.xlu0 0
    %903 = vperm.xlu0 %902, %v901
    %v904 = vpop.permute.xlu0 %903
    %vm905 = vcmp.eq.s32.totalorder %v904, 1
    %v907 = vrot.slane %v899, 4
    %v909 = vsel %vm905, %v907, %v780
    %910 = vmatpush.msra.mxu0 %v526
    %911 = vmatpush.msra.mxu0 %v523
    %912 = vmatpush.msra.mxu0 %v520
    %913 = vmatpush.msra.mxu0 %v517
    %914 = vmatpush.msra.mxu0 %v514
    %915 = vmatpush.msra.mxu0 %v511
    %916 = vmatpush.msra.mxu0 %v508
    %917 = vmatpush.msra.mxu0 %v505
    %918 = vmatpush.msra.mxu0 %v502
    %919 = vmatpush.msra.mxu0 %v499
    %920 = vmatpush.msra.mxu0 %v496
    %921 = vmatpush.msra.mxu0 %v493
    %922 = vmatpush.msra.mxu0 %v490
    %923 = vmatpush.msra.mxu0 %v487
    %924 = vmatpush.msra.mxu0 %v484
    %925 = vmatpush.msra.mxu0 %v481
    %926 = vmatmul.f32.gmra.mxu0 %v909
    %v927 = vpop.f32.mrf.mxu0
    %v928 = vadd.f32 %v532, %v927
    %929 = vdwg.mxu0
    %930 = vmatpush.msra.mxu0 %v527
    %931 = vmatpush.msra.mxu0 %v524
    %932 = vmatpush.msra.mxu0 %v521
    %933 = vmatpush.msra.mxu0 %v518
    %934 = vmatpush.msra.mxu0 %v515
    %935 = vmatpush.msra.mxu0 %v512
    %936 = vmatpush.msra.mxu0 %v509
    %937 = vmatpush.msra.mxu0 %v506
    %938 = vmatpush.msra.mxu0 %v503
    %939 = vmatpush.msra.mxu0 %v500
    %940 = vmatpush.msra.mxu0 %v497
    %941 = vmatpush.msra.mxu0 %v494
    %942 = vmatpush.msra.mxu0 %v491
    %943 = vmatpush.msra.mxu0 %v488
    %944 = vmatpush.msra.mxu0 %v485
    %945 = vmatpush.msra.mxu0 %v482
    %946 = vmatmul.f32.gmra.mxu0 %v909
    %v947 = vpop.f32.mrf.mxu0
    %v948 = vadd.f32 %v533, %v947
    %949 = vdwg.mxu0
    %950 = vmatpush.msra.mxu0 %v528
    %951 = vmatpush.msra.mxu0 %v525
    %952 = vmatpush.msra.mxu0 %v522
    %953 = vmatpush.msra.mxu0 %v519
    %954 = vmatpush.msra.mxu0 %v516
    %955 = vmatpush.msra.mxu0 %v513
    %956 = vmatpush.msra.mxu0 %v510
    %957 = vmatpush.msra.mxu0 %v507
    %958 = vmatpush.msra.mxu0 %v504
    %959 = vmatpush.msra.mxu0 %v501
    %960 = vmatpush.msra.mxu0 %v498
    %961 = vmatpush.msra.mxu0 %v495
    %962 = vmatpush.msra.mxu0 %v492
    %963 = vmatpush.msra.mxu0 %v489
    %964 = vmatpush.msra.mxu0 %v486
    %965 = vmatpush.msra.mxu0 %v483
    %966 = vmatmul.f32.gmra.mxu0 %v909
    %v967 = vpop.f32.mrf.mxu0
    %v968 = vadd.f32 %v534, %v967
    %969 = vdwg.mxu0
    %v971 = vrot.slane %v928, 2
    %v973 = vadd.f32 %v412, %v971
    %v974 = vxor.u32 %v973, 2147483648
    %v975 = vmul.f32 %v974, 1.442695
    %v976 = vpow.pop %v975
    %v977 = vadd.f32 %v976, 1.0
    %v978 = vrcp.pop %v977
    %v979 = vmul.f32 %v977, %v978
    %v980 = vsub.f32 1.0, %v979
    %v981 = vmul.f32 %v978, %v980
    %v982 = vadd.f32 %v978, %v981
    %vm983 = vweird.f32 %v977
    %vm984 = vweird.f32 %v978
    %vm985 = vmor %vm983, %vm984
    %v986 = vsel %vm985, %v978, %v982
    %v987 = vand.u32 2147483647, %v977
    %vm988 = vcmp.eq.f32.partialorder %v987, 8.507059e+37
    %v989 = vand.u32 %v977, 2147483648
    %v990 = vor.u32 1.1754944e-38, %v989
    %v991 = vsel %vm988, %v990, %v986
    %v992 = vmul.f32 1.0, %v991
    %v994 = vrot.slane %v948, 2
    %v996 = vadd.f32 %v441, %v994
    %v997 = vxor.u32 %v996, 2147483648
    %v998 = vmul.f32 %v997, 1.442695
    %v999 = vpow.pop %v998
    %v1000 = vadd.f32 %v999, 1.0
    %v1001 = vrcp.pop %v1000
    %v1002 = vmul.f32 %v1000, %v1001
    %v1003 = vsub.f32 1.0, %v1002
    %v1004 = vmul.f32 %v1001, %v1003
    %v1005 = vadd.f32 %v1001, %v1004
    %vm1006 = vweird.f32 %v1000
    %vm1007 = vweird.f32 %v1001
    %vm1008 = vmor %vm1006, %vm1007
    %v1009 = vsel %vm1008, %v1001, %v1005
    %v1010 = vand.u32 2147483647, %v1000
    %vm1011 = vcmp.eq.f32.partialorder %v1010, 8.507059e+37
    %v1012 = vand.u32 %v1000, 2147483648
    %v1013 = vor.u32 1.1754944e-38, %v1012
    %v1014 = vsel %vm1011, %v1013, %v1009
    %v1015 = vmul.f32 1.0, %v1014
    %v1017 = vrot.slane %v968, 2
    %v1019 = vmul.f32 %v992, %v1017
    %v1020 = vadd.f32 %v470, %v1019
    %v1021 = vtanh.pop %v1020
    %v1022 = vsub.f32 1.0, %v1015
    %v1023 = vmul.f32 %v1022, %v1021
    %v1025 = vrot.slane %v909, 2
    %v1027 = vmul.f32 %v1015, %v1025
    %v1028 = vadd.f32 %v1023, %v1027
    %vm1029 = vcmp.gt.s32.totalorder %v530, 3
    %v1030 = vsel %vm1029, 1, 0
    %1031 = vset.pattern.permute.xlu0 0
    %1032 = vperm.xlu0 %1031, %v1030
    %v1033 = vpop.permute.xlu0 %1032
    %vm1034 = vcmp.eq.s32.totalorder %v1033, 1
    %v1036 = vrot.slane %v1028, 6
    %v1038 = vsel %vm1034, %v1036, %v909
    %1039 = vmatpush.msra.mxu0 %v526
    %1040 = vmatpush.msra.mxu0 %v523
    %1041 = vmatpush.msra.mxu0 %v520
    %1042 = vmatpush.msra.mxu0 %v517
    %1043 = vmatpush.msra.mxu0 %v514
    %1044 = vmatpush.msra.mxu0 %v511
    %1045 = vmatpush.msra.mxu0 %v508
    %1046 = vmatpush.msra.mxu0 %v505
    %1047 = vmatpush.msra.mxu0 %v502
    %1048 = vmatpush.msra.mxu0 %v499
    %1049 = vmatpush.msra.mxu0 %v496
    %1050 = vmatpush.msra.mxu0 %v493
    %1051 = vmatpush.msra.mxu0 %v490
    %1052 = vmatpush.msra.mxu0 %v487
    %1053 = vmatpush.msra.mxu0 %v484
    %1054 = vmatpush.msra.mxu0 %v481
    %1055 = vmatmul.f32.gmra.mxu0 %v1038
    %v1056 = vpop.f32.mrf.mxu0
    %v1057 = vadd.f32 %v532, %v1056
    %1058 = vdwg.mxu0
    %1059 = vmatpush.msra.mxu0 %v527
    %1060 = vmatpush.msra.mxu0 %v524
    %1061 = vmatpush.msra.mxu0 %v521
    %1062 = vmatpush.msra.mxu0 %v518
    %1063 = vmatpush.msra.mxu0 %v515
    %1064 = vmatpush.msra.mxu0 %v512
    %1065 = vmatpush.msra.mxu0 %v509
    %1066 = vmatpush.msra.mxu0 %v506
    %1067 = vmatpush.msra.mxu0 %v503
    %1068 = vmatpush.msra.mxu0 %v500
    %1069 = vmatpush.msra.mxu0 %v497
    %1070 = vmatpush.msra.mxu0 %v494
    %1071 = vmatpush.msra.mxu0 %v491
    %1072 = vmatpush.msra.mxu0 %v488
    %1073 = vmatpush.msra.mxu0 %v485
    %1074 = vmatpush.msra.mxu0 %v482
    %1075 = vmatmul.f32.gmra.mxu0 %v1038
    %v1076 = vpop.f32.mrf.mxu0
    %v1077 = vadd.f32 %v533, %v1076
    %1078 = vdwg.mxu0
    %1079 = vmatpush.msra.mxu0 %v528
    %1080 = vmatpush.msra.mxu0 %v525
    %1081 = vmatpush.msra.mxu0 %v522
    %1082 = vmatpush.msra.mxu0 %v519
    %1083 = vmatpush.msra.mxu0 %v516
    %1084 = vmatpush.msra.mxu0 %v513
    %1085 = vmatpush.msra.mxu0 %v510
    %1086 = vmatpush.msra.mxu0 %v507
    %1087 = vmatpush.msra.mxu0 %v504
    %1088 = vmatpush.msra.mxu0 %v501
    %1089 = vmatpush.msra.mxu0 %v498
    %1090 = vmatpush.msra.mxu0 %v495
    %1091 = vmatpush.msra.mxu0 %v492
    %1092 = vmatpush.msra.mxu0 %v489
    %1093 = vmatpush.msra.mxu0 %v486
    %1094 = vmatpush.msra.mxu0 %v483
    %1095 = vmatmul.f32.gmra.mxu0 %v1038
    %v1096 = vpop.f32.mrf.mxu0
    %v1097 = vadd.f32 %v534, %v1096
    %1098 = vdwg.mxu0
    %v1099 = vadd.f32 %v415, %v1057
    %v1100 = vxor.u32 %v1099, 2147483648
    %v1101 = vmul.f32 %v1100, 1.442695
    %v1102 = vpow.pop %v1101
    %v1103 = vadd.f32 %v1102, 1.0
    %v1104 = vrcp.pop %v1103
    %v1105 = vmul.f32 %v1103, %v1104
    %v1106 = vsub.f32 1.0, %v1105
    %v1107 = vmul.f32 %v1104, %v1106
    %v1108 = vadd.f32 %v1104, %v1107
    %vm1109 = vweird.f32 %v1103
    %vm1110 = vweird.f32 %v1104
    %vm1111 = vmor %vm1109, %vm1110
    %v1112 = vsel %vm1111, %v1104, %v1108
    %v1113 = vand.u32 2147483647, %v1103
    %vm1114 = vcmp.eq.f32.partialorder %v1113, 8.507059e+37
    %v1115 = vand.u32 %v1103, 2147483648
    %v1116 = vor.u32 1.1754944e-38, %v1115
    %v1117 = vsel %vm1114, %v1116, %v1112
    %v1118 = vmul.f32 1.0, %v1117
    %v1119 = vadd.f32 %v444, %v1077
    %v1120 = vxor.u32 %v1119, 2147483648
    %v1121 = vmul.f32 %v1120, 1.442695
    %v1122 = vpow.pop %v1121
    %v1123 = vadd.f32 %v1122, 1.0
    %v1124 = vrcp.pop %v1123
    %v1125 = vmul.f32 %v1123, %v1124
    %v1126 = vsub.f32 1.0, %v1125
    %v1127 = vmul.f32 %v1124, %v1126
    %v1128 = vadd.f32 %v1124, %v1127
    %vm1129 = vweird.f32 %v1123
    %vm1130 = vweird.f32 %v1124
    %vm1131 = vmor %vm1129, %vm1130
    %v1132 = vsel %vm1131, %v1124, %v1128
    %v1133 = vand.u32 2147483647, %v1123
    %vm1134 = vcmp.eq.f32.partialorder %v1133, 8.507059e+37
    %v1135 = vand.u32 %v1123, 2147483648
    %v1136 = vor.u32 1.1754944e-38, %v1135
    %v1137 = vsel %vm1134, %v1136, %v1132
    %v1138 = vmul.f32 1.0, %v1137
    %v1139 = vmul.f32 %v1118, %v1097
    %v1140 = vadd.f32 %v473, %v1139
    %v1141 = vtanh.pop %v1140
    %v1142 = vsub.f32 1.0, %v1138
    %v1143 = vmul.f32 %v1142, %v1141
    %v1144 = vmul.f32 %v1138, %v1038
    %v1145 = vadd.f32 %v1143, %v1144
    %vm1146 = vcmp.gt.s32.totalorder %v530, 4
    %v1147 = vsel %vm1146, 1, 0
    %1148 = vset.pattern.permute.xlu0 0
    %1149 = vperm.xlu0 %1148, %v1147
    %v1150 = vpop.permute.xlu0 %1149
    %vm1151 = vcmp.eq.s32.totalorder %v1150, 1
    %v1152 = vsel %vm1151, %v1145, %v1038
    %1153 = vmatpush.msra.mxu0 %v526
    %1154 = vmatpush.msra.mxu0 %v523
    %1155 = vmatpush.msra.mxu0 %v520
    %1156 = vmatpush.msra.mxu0 %v517
    %1157 = vmatpush.msra.mxu0 %v514
    %1158 = vmatpush.msra.mxu0 %v511
    %1159 = vmatpush.msra.mxu0 %v508
    %1160 = vmatpush.msra.mxu0 %v505
    %1161 = vmatpush.msra.mxu0 %v502
    %1162 = vmatpush.msra.mxu0 %v499
    %1163 = vmatpush.msra.mxu0 %v496
    %1164 = vmatpush.msra.mxu0 %v493
    %1165 = vmatpush.msra.mxu0 %v490
    %1166 = vmatpush.msra.mxu0 %v487
    %1167 = vmatpush.msra.mxu0 %v484
    %1168 = vmatpush.msra.mxu0 %v481
    %1169 = vmatmul.f32.gmra.mxu0 %v1152
    %v1170 = vpop.f32.mrf.mxu0
    %v1171 = vadd.f32 %v532, %v1170
    %1172 = vdwg.mxu0
    %1173 = vmatpush.msra.mxu0 %v527
    %1174 = vmatpush.msra.mxu0 %v524
    %1175 = vmatpush.msra.mxu0 %v521
    %1176 = vmatpush.msra.mxu0 %v518
    %1177 = vmatpush.msra.mxu0 %v515
    %1178 = vmatpush.msra.mxu0 %v512
    %1179 = vmatpush.msra.mxu0 %v509
    %1180 = vmatpush.msra.mxu0 %v506
    %1181 = vmatpush.msra.mxu0 %v503
    %1182 = vmatpush.msra.mxu0 %v500
    %1183 = vmatpush.msra.mxu0 %v497
    %1184 = vmatpush.msra.mxu0 %v494
    %1185 = vmatpush.msra.mxu0 %v491
    %1186 = vmatpush.msra.mxu0 %v488
    %1187 = vmatpush.msra.mxu0 %v485
    %1188 = vmatpush.msra.mxu0 %v482
    %1189 = vmatmul.f32.gmra.mxu0 %v1152
    %v1190 = vpop.f32.mrf.mxu0
    %v1191 = vadd.f32 %v533, %v1190
    %1192 = vdwg.mxu0
    %1193 = vmatpush.msra.mxu0 %v528
    %1194 = vmatpush.msra.mxu0 %v525
    %1195 = vmatpush.msra.mxu0 %v522
    %1196 = vmatpush.msra.mxu0 %v519
    %1197 = vmatpush.msra.mxu0 %v516
    %1198 = vmatpush.msra.mxu0 %v513
    %1199 = vmatpush.msra.mxu0 %v510
    %1200 = vmatpush.msra.mxu0 %v507
    %1201 = vmatpush.msra.mxu0 %v504
    %1202 = vmatpush.msra.mxu0 %v501
    %1203 = vmatpush.msra.mxu0 %v498
    %1204 = vmatpush.msra.mxu0 %v495
    %1205 = vmatpush.msra.mxu0 %v492
    %1206 = vmatpush.msra.mxu0 %v489
    %1207 = vmatpush.msra.mxu0 %v486
    %1208 = vmatpush.msra.mxu0 %v483
    %1209 = vmatmul.f32.gmra.mxu0 %v1152
    %v1210 = vpop.f32.mrf.mxu0
    %v1211 = vadd.f32 %v534, %v1210
    %1212 = vdwg.mxu0
    %v1214 = vrot.slane %v1171, 6
    %v1216 = vadd.f32 %v415, %v1214
    %v1217 = vxor.u32 %v1216, 2147483648
    %v1218 = vmul.f32 %v1217, 1.442695
    %v1219 = vpow.pop %v1218
    %v1220 = vadd.f32 %v1219, 1.0
    %v1221 = vrcp.pop %v1220
    %v1222 = vmul.f32 %v1220, %v1221
    %v1223 = vsub.f32 1.0, %v1222
    %v1224 = vmul.f32 %v1221, %v1223
    %v1225 = vadd.f32 %v1221, %v1224
    %vm1226 = vweird.f32 %v1220
    %vm1227 = vweird.f32 %v1221
    %vm1228 = vmor %vm1226, %vm1227
    %v1229 = vsel %vm1228, %v1221, %v1225
    %v1230 = vand.u32 2147483647, %v1220
    %vm1231 = vcmp.eq.f32.partialorder %v1230, 8.507059e+37
    %v1232 = vand.u32 %v1220, 2147483648
    %v1233 = vor.u32 1.1754944e-38, %v1232
    %v1234 = vsel %vm1231, %v1233, %v1229
    %v1235 = vmul.f32 1.0, %v1234
    %v1237 = vrot.slane %v1191, 6
    %v1239 = vadd.f32 %v444, %v1237
    %v1240 = vxor.u32 %v1239, 2147483648
    %v1241 = vmul.f32 %v1240, 1.442695
    %v1242 = vpow.pop %v1241
    %v1243 = vadd.f32 %v1242, 1.0
    %v1244 = vrcp.pop %v1243
    %v1245 = vmul.f32 %v1243, %v1244
    %v1246 = vsub.f32 1.0, %v1245
    %v1247 = vmul.f32 %v1244, %v1246
    %v1248 = vadd.f32 %v1244, %v1247
    %vm1249 = vweird.f32 %v1243
    %vm1250 = vweird.f32 %v1244
    %vm1251 = vmor %vm1249, %vm1250
    %v1252 = vsel %vm1251, %v1244, %v1248
    %v1253 = vand.u32 2147483647, %v1243
    %vm1254 = vcmp.eq.f32.partialorder %v1253, 8.507059e+37
    %v1255 = vand.u32 %v1243, 2147483648
    %v1256 = vor.u32 1.1754944e-38, %v1255
    %v1257 = vsel %vm1254, %v1256, %v1252
    %v1258 = vmul.f32 1.0, %v1257
    %v1260 = vrot.slane %v1211, 6
    %v1262 = vmul.f32 %v1235, %v1260
    %v1263 = vadd.f32 %v473, %v1262
    %v1264 = vtanh.pop %v1263
    %v1265 = vsub.f32 1.0, %v1258
    %v1266 = vmul.f32 %v1265, %v1264
    %v1268 = vrot.slane %v1152, 6
    %v1270 = vmul.f32 %v1258, %v1268
    %v1271 = vadd.f32 %v1266, %v1270
    %vm1272 = vcmp.gt.s32.totalorder %v530, 5
    %v1273 = vsel %vm1272, 1, 0
    %1274 = vset.pattern.permute.xlu0 0
    %1275 = vperm.xlu0 %1274, %v1273
    %v1276 = vpop.permute.xlu0 %1275
    %vm1277 = vcmp.eq.s32.totalorder %v1276, 1
    %v1279 = vrot.slane %v1271, 2
    %v1281 = vsel %vm1277, %v1279, %v1152
    %1282 = vmatpush.msra.mxu0 %v526
    %1283 = vmatpush.msra.mxu0 %v523
    %1284 = vmatpush.msra.mxu0 %v520
    %1285 = vmatpush.msra.mxu0 %v517
    %1286 = vmatpush.msra.mxu0 %v514
    %1287 = vmatpush.msra.mxu0 %v511
    %1288 = vmatpush.msra.mxu0 %v508
    %1289 = vmatpush.msra.mxu0 %v505
    %1290 = vmatpush.msra.mxu0 %v502
    %1291 = vmatpush.msra.mxu0 %v499
    %1292 = vmatpush.msra.mxu0 %v496
    %1293 = vmatpush.msra.mxu0 %v493
    %1294 = vmatpush.msra.mxu0 %v490
    %1295 = vmatpush.msra.mxu0 %v487
    %1296 = vmatpush.msra.mxu0 %v484
    %1297 = vmatpush.msra.mxu0 %v481
    %1298 = vmatmul.f32.gmra.mxu0 %v1281
    %v1299 = vpop.f32.mrf.mxu0
    %v1300 = vadd.f32 %v532, %v1299
    %1301 = vdwg.mxu0
    %1302 = vmatpush.msra.mxu0 %v527
    %1303 = vmatpush.msra.mxu0 %v524
    %1304 = vmatpush.msra.mxu0 %v521
    %1305 = vmatpush.msra.mxu0 %v518
    %1306 = vmatpush.msra.mxu0 %v515
    %1307 = vmatpush.msra.mxu0 %v512
    %1308 = vmatpush.msra.mxu0 %v509
    %1309 = vmatpush.msra.mxu0 %v506
    %1310 = vmatpush.msra.mxu0 %v503
    %1311 = vmatpush.msra.mxu0 %v500
    %1312 = vmatpush.msra.mxu0 %v497
    %1313 = vmatpush.msra.mxu0 %v494
    %1314 = vmatpush.msra.mxu0 %v491
    %1315 = vmatpush.msra.mxu0 %v488
    %1316 = vmatpush.msra.mxu0 %v485
    %1317 = vmatpush.msra.mxu0 %v482
    %1318 = vmatmul.f32.gmra.mxu0 %v1281
    %v1319 = vpop.f32.mrf.mxu0
    %v1320 = vadd.f32 %v533, %v1319
    %1321 = vdwg.mxu0
    %1322 = vmatpush.msra.mxu0 %v528
    %1323 = vmatpush.msra.mxu0 %v525
    %1324 = vmatpush.msra.mxu0 %v522
    %1325 = vmatpush.msra.mxu0 %v519
    %1326 = vmatpush.msra.mxu0 %v516
    %1327 = vmatpush.msra.mxu0 %v513
    %1328 = vmatpush.msra.mxu0 %v510
    %1329 = vmatpush.msra.mxu0 %v507
    %1330 = vmatpush.msra.mxu0 %v504
    %1331 = vmatpush.msra.mxu0 %v501
    %1332 = vmatpush.msra.mxu0 %v498
    %1333 = vmatpush.msra.mxu0 %v495
    %1334 = vmatpush.msra.mxu0 %v492
    %1335 = vmatpush.msra.mxu0 %v489
    %1336 = vmatpush.msra.mxu0 %v486
    %1337 = vmatpush.msra.mxu0 %v483
    %1338 = vmatmul.f32.gmra.mxu0 %v1281
    %v1339 = vpop.f32.mrf.mxu0
    %v1340 = vadd.f32 %v534, %v1339
    %1341 = vdwg.mxu0
    %v1343 = vrot.slane %v1300, 4
    %v1345 = vadd.f32 %v415, %v1343
    %v1346 = vxor.u32 %v1345, 2147483648
    %v1347 = vmul.f32 %v1346, 1.442695
    %v1348 = vpow.pop %v1347
    %v1349 = vadd.f32 %v1348, 1.0
    %v1350 = vrcp.pop %v1349
    %v1351 = vmul.f32 %v1349, %v1350
    %v1352 = vsub.f32 1.0, %v1351
    %v1353 = vmul.f32 %v1350, %v1352
    %v1354 = vadd.f32 %v1350, %v1353
    %vm1355 = vweird.f32 %v1349
    %vm1356 = vweird.f32 %v1350
    %vm1357 = vmor %vm1355, %vm1356
    %v1358 = vsel %vm1357, %v1350, %v1354
    %v1359 = vand.u32 2147483647, %v1349
    %vm1360 = vcmp.eq.f32.partialorder %v1359, 8.507059e+37
    %v1361 = vand.u32 %v1349, 2147483648
    %v1362 = vor.u32 1.1754944e-38, %v1361
    %v1363 = vsel %vm1360, %v1362, %v1358
    %v1364 = vmul.f32 1.0, %v1363
    %v1366 = vrot.slane %v1320, 4
    %v1368 = vadd.f32 %v444, %v1366
    %v1369 = vxor.u32 %v1368, 2147483648
    %v1370 = vmul.f32 %v1369, 1.442695
    %v1371 = vpow.pop %v1370
    %v1372 = vadd.f32 %v1371, 1.0
    %v1373 = vrcp.pop %v1372
    %v1374 = vmul.f32 %v1372, %v1373
    %v1375 = vsub.f32 1.0, %v1374
    %v1376 = vmul.f32 %v1373, %v1375
    %v1377 = vadd.f32 %v1373, %v1376
    %vm1378 = vweird.f32 %v1372
    %vm1379 = vweird.f32 %v1373
    %vm1380 = vmor %vm1378, %vm1379
    %v1381 = vsel %vm1380, %v1373, %v1377
    %v1382 = vand.u32 2147483647, %v1372
    %vm1383 = vcmp.eq.f32.partialorder %v1382, 8.507059e+37
    %v1384 = vand.u32 %v1372, 2147483648
    %v1385 = vor.u32 1.1754944e-38, %v1384
    %v1386 = vsel %vm1383, %v1385, %v1381
    %v1387 = vmul.f32 1.0, %v1386
    %v1389 = vrot.slane %v1340, 4
    %v1391 = vmul.f32 %v1364, %v1389
    %v1392 = vadd.f32 %v473, %v1391
    %v1393 = vtanh.pop %v1392
    %v1394 = vsub.f32 1.0, %v1387
    %v1395 = vmul.f32 %v1394, %v1393
    %v1397 = vrot.slane %v1281, 4
    %v1399 = vmul.f32 %v1387, %v1397
    %v1400 = vadd.f32 %v1395, %v1399
    %vm1401 = vcmp.gt.s32.totalorder %v530, 6
    %v1402 = vsel %vm1401, 1, 0
    %1403 = vset.pattern.permute.xlu0 0
    %1404 = vperm.xlu0 %1403, %v1402
    %v1405 = vpop.permute.xlu0 %1404
    %vm1406 = vcmp.eq.s32.totalorder %v1405, 1
    %v1408 = vrot.slane %v1400, 4
    %v1410 = vsel %vm1406, %v1408, %v1281
    %1411 = vmatpush.msra.mxu0 %v526
    %1412 = vmatpush.msra.mxu0 %v523
    %1413 = vmatpush.msra.mxu0 %v520
    %1414 = vmatpush.msra.mxu0 %v517
    %1415 = vmatpush.msra.mxu0 %v514
    %1416 = vmatpush.msra.mxu0 %v511
    %1417 = vmatpush.msra.mxu0 %v508
    %1418 = vmatpush.msra.mxu0 %v505
    %1419 = vmatpush.msra.mxu0 %v502
    %1420 = vmatpush.msra.mxu0 %v499
    %1421 = vmatpush.msra.mxu0 %v496
    %1422 = vmatpush.msra.mxu0 %v493
    %1423 = vmatpush.msra.mxu0 %v490
    %1424 = vmatpush.msra.mxu0 %v487
    %1425 = vmatpush.msra.mxu0 %v484
    %1426 = vmatpush.msra.mxu0 %v481
    %1427 = vmatmul.f32.gmra.mxu0 %v1410
    %v1428 = vpop.f32.mrf.mxu0
    %v1429 = vadd.f32 %v532, %v1428
    %1430 = vdwg.mxu0
    %1431 = vmatpush.msra.mxu0 %v527
    %1432 = vmatpush.msra.mxu0 %v524
    %1433 = vmatpush.msra.mxu0 %v521
    %1434 = vmatpush.msra.mxu0 %v518
    %1435 = vmatpush.msra.mxu0 %v515
    %1436 = vmatpush.msra.mxu0 %v512
    %1437 = vmatpush.msra.mxu0 %v509
    %1438 = vmatpush.msra.mxu0 %v506
    %1439 = vmatpush.msra.mxu0 %v503
    %1440 = vmatpush.msra.mxu0 %v500
    %1441 = vmatpush.msra.mxu0 %v497
    %1442 = vmatpush.msra.mxu0 %v494
    %1443 = vmatpush.msra.mxu0 %v491
    %1444 = vmatpush.msra.mxu0 %v488
    %1445 = vmatpush.msra.mxu0 %v485
    %1446 = vmatpush.msra.mxu0 %v482
    %1447 = vmatmul.f32.gmra.mxu0 %v1410
    %v1448 = vpop.f32.mrf.mxu0
    %v1449 = vadd.f32 %v533, %v1448
    %1450 = vdwg.mxu0
    %1451 = vmatpush.msra.mxu0 %v528
    %1452 = vmatpush.msra.mxu0 %v525
    %1453 = vmatpush.msra.mxu0 %v522
    %1454 = vmatpush.msra.mxu0 %v519
    %1455 = vmatpush.msra.mxu0 %v516
    %1456 = vmatpush.msra.mxu0 %v513
    %1457 = vmatpush.msra.mxu0 %v510
    %1458 = vmatpush.msra.mxu0 %v507
    %1459 = vmatpush.msra.mxu0 %v504
    %1460 = vmatpush.msra.mxu0 %v501
    %1461 = vmatpush.msra.mxu0 %v498
    %1462 = vmatpush.msra.mxu0 %v495
    %1463 = vmatpush.msra.mxu0 %v492
    %1464 = vmatpush.msra.mxu0 %v489
    %1465 = vmatpush.msra.mxu0 %v486
    %1466 = vmatpush.msra.mxu0 %v483
    %1467 = vmatmul.f32.gmra.mxu0 %v1410
    %v1468 = vpop.f32.mrf.mxu0
    %v1469 = vadd.f32 %v534, %v1468
    %1470 = vdwg.mxu0
    %v1472 = vrot.slane %v1429, 2
    %v1474 = vadd.f32 %v415, %v1472
    %v1475 = vxor.u32 %v1474, 2147483648
    %v1476 = vmul.f32 %v1475, 1.442695
    %v1477 = vpow.pop %v1476
    %v1478 = vadd.f32 %v1477, 1.0
    %v1479 = vrcp.pop %v1478
    %v1480 = vmul.f32 %v1478, %v1479
    %v1481 = vsub.f32 1.0, %v1480
    %v1482 = vmul.f32 %v1479, %v1481
    %v1483 = vadd.f32 %v1479, %v1482
    %vm1484 = vweird.f32 %v1478
    %vm1485 = vweird.f32 %v1479
    %vm1486 = vmor %vm1484, %vm1485
    %v1487 = vsel %vm1486, %v1479, %v1483
    %v1488 = vand.u32 2147483647, %v1478
    %vm1489 = vcmp.eq.f32.partialorder %v1488, 8.507059e+37
    %v1490 = vand.u32 %v1478, 2147483648
    %v1491 = vor.u32 1.1754944e-38, %v1490
    %v1492 = vsel %vm1489, %v1491, %v1487
    %v1493 = vmul.f32 1.0, %v1492
    %v1495 = vrot.slane %v1449, 2
    %v1497 = vadd.f32 %v444, %v1495
    %v1498 = vxor.u32 %v1497, 2147483648
    %v1499 = vmul.f32 %v1498, 1.442695
    %v1500 = vpow.pop %v1499
    %v1501 = vadd.f32 %v1500, 1.0
    %v1502 = vrcp.pop %v1501
    %v1503 = vmul.f32 %v1501, %v1502
    %v1504 = vsub.f32 1.0, %v1503
    %v1505 = vmul.f32 %v1502, %v1504
    %v1506 = vadd.f32 %v1502, %v1505
    %vm1507 = vweird.f32 %v1501
    %vm1508 = vweird.f32 %v1502
    %vm1509 = vmor %vm1507, %vm1508
    %v1510 = vsel %vm1509, %v1502, %v1506
    %v1511 = vand.u32 2147483647, %v1501
    %vm1512 = vcmp.eq.f32.partialorder %v1511, 8.507059e+37
    %v1513 = vand.u32 %v1501, 2147483648
    %v1514 = vor.u32 1.1754944e-38, %v1513
    %v1515 = vsel %vm1512, %v1514, %v1510
    %v1516 = vmul.f32 1.0, %v1515
    %v1518 = vrot.slane %v1469, 2
    %v1520 = vmul.f32 %v1493, %v1518
    %v1521 = vadd.f32 %v473, %v1520
    %v1522 = vtanh.pop %v1521
    %v1523 = vsub.f32 1.0, %v1516
    %v1524 = vmul.f32 %v1523, %v1522
    %v1526 = vrot.slane %v1410, 2
    %v1528 = vmul.f32 %v1516, %v1526
    %v1529 = vadd.f32 %v1524, %v1528
    %vm1530 = vcmp.gt.s32.totalorder %v530, 7
    %v1531 = vsel %vm1530, 1, 0
    %1532 = vset.pattern.permute.xlu0 0
    %1533 = vperm.xlu0 %1532, %v1531
    %v1534 = vpop.permute.xlu0 %1533
    %vm1535 = vcmp.eq.s32.totalorder %v1534, 1
    %v1537 = vrot.slane %v1529, 6
    %v1539 = vsel %vm1535, %v1537, %v1410
    %1540 = vmatpush.msra.mxu0 %v526
    %1541 = vmatpush.msra.mxu0 %v523
    %1542 = vmatpush.msra.mxu0 %v520
    %1543 = vmatpush.msra.mxu0 %v517
    %1544 = vmatpush.msra.mxu0 %v514
    %1545 = vmatpush.msra.mxu0 %v511
    %1546 = vmatpush.msra.mxu0 %v508
    %1547 = vmatpush.msra.mxu0 %v505
    %1548 = vmatpush.msra.mxu0 %v502
    %1549 = vmatpush.msra.mxu0 %v499
    %1550 = vmatpush.msra.mxu0 %v496
    %1551 = vmatpush.msra.mxu0 %v493
    %1552 = vmatpush.msra.mxu0 %v490
    %1553 = vmatpush.msra.mxu0 %v487
    %1554 = vmatpush.msra.mxu0 %v484
    %1555 = vmatpush.msra.mxu0 %v481
    %1556 = vmatmul.f32.gmra.mxu0 %v1539
    %v1557 = vpop.f32.mrf.mxu0
    %v1558 = vadd.f32 %v532, %v1557
    %1559 = vdwg.mxu0
    %1560 = vmatpush.msra.mxu0 %v527
    %1561 = vmatpush.msra.mxu0 %v524
    %1562 = vmatpush.msra.mxu0 %v521
    %1563 = vmatpush.msra.mxu0 %v518
    %1564 = vmatpush.msra.mxu0 %v515
    %1565 = vmatpush.msra.mxu0 %v512
    %1566 = vmatpush.msra.mxu0 %v509
    %1567 = vmatpush.msra.mxu0 %v506
    %1568 = vmatpush.msra.mxu0 %v503
    %1569 = vmatpush.msra.mxu0 %v500
    %1570 = vmatpush.msra.mxu0 %v497
    %1571 = vmatpush.msra.mxu0 %v494
    %1572 = vmatpush.msra.mxu0 %v491
    %1573 = vmatpush.msra.mxu0 %v488
    %1574 = vmatpush.msra.mxu0 %v485
    %1575 = vmatpush.msra.mxu0 %v482
    %1576 = vmatmul.f32.gmra.mxu0 %v1539
    %v1577 = vpop.f32.mrf.mxu0
    %v1578 = vadd.f32 %v533, %v1577
    %1579 = vdwg.mxu0
    %1580 = vmatpush.msra.mxu0 %v528
    %1581 = vmatpush.msra.mxu0 %v525
    %1582 = vmatpush.msra.mxu0 %v522
    %1583 = vmatpush.msra.mxu0 %v519
    %1584 = vmatpush.msra.mxu0 %v516
    %1585 = vmatpush.msra.mxu0 %v513
    %1586 = vmatpush.msra.mxu0 %v510
    %1587 = vmatpush.msra.mxu0 %v507
    %1588 = vmatpush.msra.mxu0 %v504
    %1589 = vmatpush.msra.mxu0 %v501
    %1590 = vmatpush.msra.mxu0 %v498
    %1591 = vmatpush.msra.mxu0 %v495
    %1592 = vmatpush.msra.mxu0 %v492
    %1593 = vmatpush.msra.mxu0 %v489
    %1594 = vmatpush.msra.mxu0 %v486
    %1595 = vmatpush.msra.mxu0 %v483
    %1596 = vmatmul.f32.gmra.mxu0 %v1539
    %v1597 = vpop.f32.mrf.mxu0
    %v1598 = vadd.f32 %v534, %v1597
    %1599 = vdwg.mxu0
    %v1600 = vadd.f32 %v418, %v1558
    %v1601 = vxor.u32 %v1600, 2147483648
    %v1602 = vmul.f32 %v1601, 1.442695
    %v1603 = vpow.pop %v1602
    %v1604 = vadd.f32 %v1603, 1.0
    %v1605 = vrcp.pop %v1604
    %v1606 = vmul.f32 %v1604, %v1605
    %v1607 = vsub.f32 1.0, %v1606
    %v1608 = vmul.f32 %v1605, %v1607
    %v1609 = vadd.f32 %v1605, %v1608
    %vm1610 = vweird.f32 %v1604
    %vm1611 = vweird.f32 %v1605
    %vm1612 = vmor %vm1610, %vm1611
    %v1613 = vsel %vm1612, %v1605, %v1609
    %v1614 = vand.u32 2147483647, %v1604
    %vm1615 = vcmp.eq.f32.partialorder %v1614, 8.507059e+37
    %v1616 = vand.u32 %v1604, 2147483648
    %v1617 = vor.u32 1.1754944e-38, %v1616
    %v1618 = vsel %vm1615, %v1617, %v1613
    %v1619 = vmul.f32 1.0, %v1618
    %v1620 = vadd.f32 %v447, %v1578
    %v1621 = vxor.u32 %v1620, 2147483648
    %v1622 = vmul.f32 %v1621, 1.442695
    %v1623 = vpow.pop %v1622
    %v1624 = vadd.f32 %v1623, 1.0
    %v1625 = vrcp.pop %v1624
    %v1626 = vmul.f32 %v1624, %v1625
    %v1627 = vsub.f32 1.0, %v1626
    %v1628 = vmul.f32 %v1625, %v1627
    %v1629 = vadd.f32 %v1625, %v1628
    %vm1630 = vweird.f32 %v1624
    %vm1631 = vweird.f32 %v1625
    %vm1632 = vmor %vm1630, %vm1631
    %v1633 = vsel %vm1632, %v1625, %v1629
    %v1634 = vand.u32 2147483647, %v1624
    %vm1635 = vcmp.eq.f32.partialorder %v1634, 8.507059e+37
    %v1636 = vand.u32 %v1624, 2147483648
    %v1637 = vor.u32 1.1754944e-38, %v1636
    %v1638 = vsel %vm1635, %v1637, %v1633
    %v1639 = vmul.f32 1.0, %v1638
    %v1640 = vmul.f32 %v1619, %v1598
    %v1641 = vadd.f32 %v476, %v1640
    %v1642 = vtanh.pop %v1641
    %v1643 = vsub.f32 1.0, %v1639
    %v1644 = vmul.f32 %v1643, %v1642
    %v1645 = vmul.f32 %v1639, %v1539
    %v1646 = vadd.f32 %v1644, %v1645
    %vm1647 = vcmp.gt.s32.totalorder %v530, 8
    %v1648 = vsel %vm1647, 1, 0
    %1649 = vset.pattern.permute.xlu0 0
    %1650 = vperm.xlu0 %1649, %v1648
    %v1651 = vpop.permute.xlu0 %1650
    %vm1652 = vcmp.eq.s32.totalorder %v1651, 1
    %v1653 = vsel %vm1652, %v1646, %v1539
    %1654 = vmatpush.msra.mxu0 %v526
    %1655 = vmatpush.msra.mxu0 %v523
    %1656 = vmatpush.msra.mxu0 %v520
    %1657 = vmatpush.msra.mxu0 %v517
    %1658 = vmatpush.msra.mxu0 %v514
    %1659 = vmatpush.msra.mxu0 %v511
    %1660 = vmatpush.msra.mxu0 %v508
    %1661 = vmatpush.msra.mxu0 %v505
    %1662 = vmatpush.msra.mxu0 %v502
    %1663 = vmatpush.msra.mxu0 %v499
    %1664 = vmatpush.msra.mxu0 %v496
    %1665 = vmatpush.msra.mxu0 %v493
    %1666 = vmatpush.msra.mxu0 %v490
    %1667 = vmatpush.msra.mxu0 %v487
    %1668 = vmatpush.msra.mxu0 %v484
    %1669 = vmatpush.msra.mxu0 %v481
    %1670 = vmatmul.f32.gmra.mxu0 %v1653
    %v1671 = vpop.f32.mrf.mxu0
    %v1672 = vadd.f32 %v532, %v1671
    %1673 = vdwg.mxu0
    %1674 = vmatpush.msra.mxu0 %v527
    %1675 = vmatpush.msra.mxu0 %v524
    %1676 = vmatpush.msra.mxu0 %v521
    %1677 = vmatpush.msra.mxu0 %v518
    %1678 = vmatpush.msra.mxu0 %v515
    %1679 = vmatpush.msra.mxu0 %v512
    %1680 = vmatpush.msra.mxu0 %v509
    %1681 = vmatpush.msra.mxu0 %v506
    %1682 = vmatpush.msra.mxu0 %v503
    %1683 = vmatpush.msra.mxu0 %v500
    %1684 = vmatpush.msra.mxu0 %v497
    %1685 = vmatpush.msra.mxu0 %v494
    %1686 = vmatpush.msra.mxu0 %v491
    %1687 = vmatpush.msra.mxu0 %v488
    %1688 = vmatpush.msra.mxu0 %v485
    %1689 = vmatpush.msra.mxu0 %v482
    %1690 = vmatmul.f32.gmra.mxu0 %v1653
    %v1691 = vpop.f32.mrf.mxu0
    %v1692 = vadd.f32 %v533, %v1691
    %1693 = vdwg.mxu0
    %1694 = vmatpush.msra.mxu0 %v528
    %1695 = vmatpush.msra.mxu0 %v525
    %1696 = vmatpush.msra.mxu0 %v522
    %1697 = vmatpush.msra.mxu0 %v519
    %1698 = vmatpush.msra.mxu0 %v516
    %1699 = vmatpush.msra.mxu0 %v513
    %1700 = vmatpush.msra.mxu0 %v510
    %1701 = vmatpush.msra.mxu0 %v507
    %1702 = vmatpush.msra.mxu0 %v504
    %1703 = vmatpush.msra.mxu0 %v501
    %1704 = vmatpush.msra.mxu0 %v498
    %1705 = vmatpush.msra.mxu0 %v495
    %1706 = vmatpush.msra.mxu0 %v492
    %1707 = vmatpush.msra.mxu0 %v489
    %1708 = vmatpush.msra.mxu0 %v486
    %1709 = vmatpush.msra.mxu0 %v483
    %1710 = vmatmul.f32.gmra.mxu0 %v1653
    %v1711 = vpop.f32.mrf.mxu0
    %v1712 = vadd.f32 %v534, %v1711
    %1713 = vdwg.mxu0
    %v1715 = vrot.slane %v1672, 6
    %v1717 = vadd.f32 %v418, %v1715
    %v1718 = vxor.u32 %v1717, 2147483648
    %v1719 = vmul.f32 %v1718, 1.442695
    %v1720 = vpow.pop %v1719
    %v1721 = vadd.f32 %v1720, 1.0
    %v1722 = vrcp.pop %v1721
    %v1723 = vmul.f32 %v1721, %v1722
    %v1724 = vsub.f32 1.0, %v1723
    %v1725 = vmul.f32 %v1722, %v1724
    %v1726 = vadd.f32 %v1722, %v1725
    %vm1727 = vweird.f32 %v1721
    %vm1728 = vweird.f32 %v1722
    %vm1729 = vmor %vm1727, %vm1728
    %v1730 = vsel %vm1729, %v1722, %v1726
    %v1731 = vand.u32 2147483647, %v1721
    %vm1732 = vcmp.eq.f32.partialorder %v1731, 8.507059e+37
    %v1733 = vand.u32 %v1721, 2147483648
    %v1734 = vor.u32 1.1754944e-38, %v1733
    %v1735 = vsel %vm1732, %v1734, %v1730
    %v1736 = vmul.f32 1.0, %v1735
    %v1738 = vrot.slane %v1692, 6
    %v1740 = vadd.f32 %v447, %v1738
    %v1741 = vxor.u32 %v1740, 2147483648
    %v1742 = vmul.f32 %v1741, 1.442695
    %v1743 = vpow.pop %v1742
    %v1744 = vadd.f32 %v1743, 1.0
    %v1745 = vrcp.pop %v1744
    %v1746 = vmul.f32 %v1744, %v1745
    %v1747 = vsub.f32 1.0, %v1746
    %v1748 = vmul.f32 %v1745, %v1747
    %v1749 = vadd.f32 %v1745, %v1748
    %vm1750 = vweird.f32 %v1744
    %vm1751 = vweird.f32 %v1745
    %vm1752 = vmor %vm1750, %vm1751
    %v1753 = vsel %vm1752, %v1745, %v1749
    %v1754 = vand.u32 2147483647, %v1744
    %vm1755 = vcmp.eq.f32.partialorder %v1754, 8.507059e+37
    %v1756 = vand.u32 %v1744, 2147483648
    %v1757 = vor.u32 1.1754944e-38, %v1756
    %v1758 = vsel %vm1755, %v1757, %v1753
    %v1759 = vmul.f32 1.0, %v1758
    %v1761 = vrot.slane %v1712, 6
    %v1763 = vmul.f32 %v1736, %v1761
    %v1764 = vadd.f32 %v476, %v1763
    %v1765 = vtanh.pop %v1764
    %v1766 = vsub.f32 1.0, %v1759
    %v1767 = vmul.f32 %v1766, %v1765
    %v1769 = vrot.slane %v1653, 6
    %v1771 = vmul.f32 %v1759, %v1769
    %v1772 = vadd.f32 %v1767, %v1771
    %vm1773 = vcmp.gt.s32.totalorder %v530, 9
    %v1774 = vsel %vm1773, 1, 0
    %1775 = vset.pattern.permute.xlu0 0
    %1776 = vperm.xlu0 %1775, %v1774
    %v1777 = vpop.permute.xlu0 %1776
    %vm1778 = vcmp.eq.s32.totalorder %v1777, 1
    %v1780 = vrot.slane %v1772, 2
    %v1782 = vsel %vm1778, %v1780, %v1653
    %1783 = vmatpush.msra.mxu0 %v526
    %1784 = vmatpush.msra.mxu0 %v523
    %1785 = vmatpush.msra.mxu0 %v520
    %1786 = vmatpush.msra.mxu0 %v517
    %1787 = vmatpush.msra.mxu0 %v514
    %1788 = vmatpush.msra.mxu0 %v511
    %1789 = vmatpush.msra.mxu0 %v508
    %1790 = vmatpush.msra.mxu0 %v505
    %1791 = vmatpush.msra.mxu0 %v502
    %1792 = vmatpush.msra.mxu0 %v499
    %1793 = vmatpush.msra.mxu0 %v496
    %1794 = vmatpush.msra.mxu0 %v493
    %1795 = vmatpush.msra.mxu0 %v490
    %1796 = vmatpush.msra.mxu0 %v487
    %1797 = vmatpush.msra.mxu0 %v484
    %1798 = vmatpush.msra.mxu0 %v481
    %1799 = vmatmul.f32.gmra.mxu0 %v1782
    %v1800 = vpop.f32.mrf.mxu0
    %v1801 = vadd.f32 %v532, %v1800
    %1802 = vdwg.mxu0
    %1803 = vmatpush.msra.mxu0 %v527
    %1804 = vmatpush.msra.mxu0 %v524
    %1805 = vmatpush.msra.mxu0 %v521
    %1806 = vmatpush.msra.mxu0 %v518
    %1807 = vmatpush.msra.mxu0 %v515
    %1808 = vmatpush.msra.mxu0 %v512
    %1809 = vmatpush.msra.mxu0 %v509
    %1810 = vmatpush.msra.mxu0 %v506
    %1811 = vmatpush.msra.mxu0 %v503
    %1812 = vmatpush.msra.mxu0 %v500
    %1813 = vmatpush.msra.mxu0 %v497
    %1814 = vmatpush.msra.mxu0 %v494
    %1815 = vmatpush.msra.mxu0 %v491
    %1816 = vmatpush.msra.mxu0 %v488
    %1817 = vmatpush.msra.mxu0 %v485
    %1818 = vmatpush.msra.mxu0 %v482
    %1819 = vmatmul.f32.gmra.mxu0 %v1782
    %v1820 = vpop.f32.mrf.mxu0
    %v1821 = vadd.f32 %v533, %v1820
    %1822 = vdwg.mxu0
    %1823 = vmatpush.msra.mxu0 %v528
    %1824 = vmatpush.msra.mxu0 %v525
    %1825 = vmatpush.msra.mxu0 %v522
    %1826 = vmatpush.msra.mxu0 %v519
    %1827 = vmatpush.msra.mxu0 %v516
    %1828 = vmatpush.msra.mxu0 %v513
    %1829 = vmatpush.msra.mxu0 %v510
    %1830 = vmatpush.msra.mxu0 %v507
    %1831 = vmatpush.msra.mxu0 %v504
    %1832 = vmatpush.msra.mxu0 %v501
    %1833 = vmatpush.msra.mxu0 %v498
    %1834 = vmatpush.msra.mxu0 %v495
    %1835 = vmatpush.msra.mxu0 %v492
    %1836 = vmatpush.msra.mxu0 %v489
    %1837 = vmatpush.msra.mxu0 %v486
    %1838 = vmatpush.msra.mxu0 %v483
    %1839 = vmatmul.f32.gmra.mxu0 %v1782
    %v1840 = vpop.f32.mrf.mxu0
    %v1841 = vadd.f32 %v534, %v1840
    %1842 = vdwg.mxu0
    %v1844 = vrot.slane %v1801, 4
    %v1846 = vadd.f32 %v418, %v1844
    %v1847 = vxor.u32 %v1846, 2147483648
    %v1848 = vmul.f32 %v1847, 1.442695
    %v1849 = vpow.pop %v1848
    %v1850 = vadd.f32 %v1849, 1.0
    %v1851 = vrcp.pop %v1850
    %v1852 = vmul.f32 %v1850, %v1851
    %v1853 = vsub.f32 1.0, %v1852
    %v1854 = vmul.f32 %v1851, %v1853
    %v1855 = vadd.f32 %v1851, %v1854
    %vm1856 = vweird.f32 %v1850
    %vm1857 = vweird.f32 %v1851
    %vm1858 = vmor %vm1856, %vm1857
    %v1859 = vsel %vm1858, %v1851, %v1855
    %v1860 = vand.u32 2147483647, %v1850
    %vm1861 = vcmp.eq.f32.partialorder %v1860, 8.507059e+37
    %v1862 = vand.u32 %v1850, 2147483648
    %v1863 = vor.u32 1.1754944e-38, %v1862
    %v1864 = vsel %vm1861, %v1863, %v1859
    %v1865 = vmul.f32 1.0, %v1864
    %v1867 = vrot.slane %v1821, 4
    %v1869 = vadd.f32 %v447, %v1867
    %v1870 = vxor.u32 %v1869, 2147483648
    %v1871 = vmul.f32 %v1870, 1.442695
    %v1872 = vpow.pop %v1871
    %v1873 = vadd.f32 %v1872, 1.0
    %v1874 = vrcp.pop %v1873
    %v1875 = vmul.f32 %v1873, %v1874
    %v1876 = vsub.f32 1.0, %v1875
    %v1877 = vmul.f32 %v1874, %v1876
    %v1878 = vadd.f32 %v1874, %v1877
    %vm1879 = vweird.f32 %v1873
    %vm1880 = vweird.f32 %v1874
    %vm1881 = vmor %vm1879, %vm1880
    %v1882 = vsel %vm1881, %v1874, %v1878
    %v1883 = vand.u32 2147483647, %v1873
    %vm1884 = vcmp.eq.f32.partialorder %v1883, 8.507059e+37
    %v1885 = vand.u32 %v1873, 2147483648
    %v1886 = vor.u32 1.1754944e-38, %v1885
    %v1887 = vsel %vm1884, %v1886, %v1882
    %v1888 = vmul.f32 1.0, %v1887
    %v1890 = vrot.slane %v1841, 4
    %v1892 = vmul.f32 %v1865, %v1890
    %v1893 = vadd.f32 %v476, %v1892
    %v1894 = vtanh.pop %v1893
    %v1895 = vsub.f32 1.0, %v1888
    %v1896 = vmul.f32 %v1895, %v1894
    %v1898 = vrot.slane %v1782, 4
    %v1900 = vmul.f32 %v1888, %v1898
    %v1901 = vadd.f32 %v1896, %v1900
    %vm1902 = vcmp.gt.s32.totalorder %v530, 10
    %v1903 = vsel %vm1902, 1, 0
    %1904 = vset.pattern.permute.xlu0 0
    %1905 = vperm.xlu0 %1904, %v1903
    %v1906 = vpop.permute.xlu0 %1905
    %vm1907 = vcmp.eq.s32.totalorder %v1906, 1
    %v1909 = vrot.slane %v1901, 4
    %v1911 = vsel %vm1907, %v1909, %v1782
    %1912 = vmatpush.msra.mxu0 %v526
    %1913 = vmatpush.msra.mxu0 %v523
    %1914 = vmatpush.msra.mxu0 %v520
    %1915 = vmatpush.msra.mxu0 %v517
    %1916 = vmatpush.msra.mxu0 %v514
    %1917 = vmatpush.msra.mxu0 %v511
    %1918 = vmatpush.msra.mxu0 %v508
    %1919 = vmatpush.msra.mxu0 %v505
    %1920 = vmatpush.msra.mxu0 %v502
    %1921 = vmatpush.msra.mxu0 %v499
    %1922 = vmatpush.msra.mxu0 %v496
    %1923 = vmatpush.msra.mxu0 %v493
    %1924 = vmatpush.msra.mxu0 %v490
    %1925 = vmatpush.msra.mxu0 %v487
    %1926 = vmatpush.msra.mxu0 %v484
    %1927 = vmatpush.msra.mxu0 %v481
    %1928 = vmatmul.f32.gmra.mxu0 %v1911
    %v1929 = vpop.f32.mrf.mxu0
    %v1930 = vadd.f32 %v532, %v1929
    %1931 = vdwg.mxu0
    %1932 = vmatpush.msra.mxu0 %v527
    %1933 = vmatpush.msra.mxu0 %v524
    %1934 = vmatpush.msra.mxu0 %v521
    %1935 = vmatpush.msra.mxu0 %v518
    %1936 = vmatpush.msra.mxu0 %v515
    %1937 = vmatpush.msra.mxu0 %v512
    %1938 = vmatpush.msra.mxu0 %v509
    %1939 = vmatpush.msra.mxu0 %v506
    %1940 = vmatpush.msra.mxu0 %v503
    %1941 = vmatpush.msra.mxu0 %v500
    %1942 = vmatpush.msra.mxu0 %v497
    %1943 = vmatpush.msra.mxu0 %v494
    %1944 = vmatpush.msra.mxu0 %v491
    %1945 = vmatpush.msra.mxu0 %v488
    %1946 = vmatpush.msra.mxu0 %v485
    %1947 = vmatpush.msra.mxu0 %v482
    %1948 = vmatmul.f32.gmra.mxu0 %v1911
    %v1949 = vpop.f32.mrf.mxu0
    %v1950 = vadd.f32 %v533, %v1949
    %1951 = vdwg.mxu0
    %1952 = vmatpush.msra.mxu0 %v528
    %1953 = vmatpush.msra.mxu0 %v525
    %1954 = vmatpush.msra.mxu0 %v522
    %1955 = vmatpush.msra.mxu0 %v519
    %1956 = vmatpush.msra.mxu0 %v516
    %1957 = vmatpush.msra.mxu0 %v513
    %1958 = vmatpush.msra.mxu0 %v510
    %1959 = vmatpush.msra.mxu0 %v507
    %1960 = vmatpush.msra.mxu0 %v504
    %1961 = vmatpush.msra.mxu0 %v501
    %1962 = vmatpush.msra.mxu0 %v498
    %1963 = vmatpush.msra.mxu0 %v495
    %1964 = vmatpush.msra.mxu0 %v492
    %1965 = vmatpush.msra.mxu0 %v489
    %1966 = vmatpush.msra.mxu0 %v486
    %1967 = vmatpush.msra.mxu0 %v483
    %1968 = vmatmul.f32.gmra.mxu0 %v1911
    %v1969 = vpop.f32.mrf.mxu0
    %v1970 = vadd.f32 %v534, %v1969
    %1971 = vdwg.mxu0
    %v1973 = vrot.slane %v1930, 2
    %v1975 = vadd.f32 %v418, %v1973
    %v1976 = vxor.u32 %v1975, 2147483648
    %v1977 = vmul.f32 %v1976, 1.442695
    %v1978 = vpow.pop %v1977
    %v1979 = vadd.f32 %v1978, 1.0
    %v1980 = vrcp.pop %v1979
    %v1981 = vmul.f32 %v1979, %v1980
    %v1982 = vsub.f32 1.0, %v1981
    %v1983 = vmul.f32 %v1980, %v1982
    %v1984 = vadd.f32 %v1980, %v1983
    %vm1985 = vweird.f32 %v1979
    %vm1986 = vweird.f32 %v1980
    %vm1987 = vmor %vm1985, %vm1986
    %v1988 = vsel %vm1987, %v1980, %v1984
    %v1989 = vand.u32 2147483647, %v1979
    %vm1990 = vcmp.eq.f32.partialorder %v1989, 8.507059e+37
    %v1991 = vand.u32 %v1979, 2147483648
    %v1992 = vor.u32 1.1754944e-38, %v1991
    %v1993 = vsel %vm1990, %v1992, %v1988
    %v1994 = vmul.f32 1.0, %v1993
    %v1996 = vrot.slane %v1950, 2
    %v1998 = vadd.f32 %v447, %v1996
    %v1999 = vxor.u32 %v1998, 2147483648
    %v2000 = vmul.f32 %v1999, 1.442695
    %v2001 = vpow.pop %v2000
    %v2002 = vadd.f32 %v2001, 1.0
    %v2003 = vrcp.pop %v2002
    %v2004 = vmul.f32 %v2002, %v2003
    %v2005 = vsub.f32 1.0, %v2004
    %v2006 = vmul.f32 %v2003, %v2005
    %v2007 = vadd.f32 %v2003, %v2006
    %vm2008 = vweird.f32 %v2002
    %vm2009 = vweird.f32 %v2003
    %vm2010 = vmor %vm2008, %vm2009
    %v2011 = vsel %vm2010, %v2003, %v2007
    %v2012 = vand.u32 2147483647, %v2002
    %vm2013 = vcmp.eq.f32.partialorder %v2012, 8.507059e+37
    %v2014 = vand.u32 %v2002, 2147483648
    %v2015 = vor.u32 1.1754944e-38, %v2014
    %v2016 = vsel %vm2013, %v2015, %v2011
    %v2017 = vmul.f32 1.0, %v2016
    %v2019 = vrot.slane %v1970, 2
    %v2021 = vmul.f32 %v1994, %v2019
    %v2022 = vadd.f32 %v476, %v2021
    %v2023 = vtanh.pop %v2022
    %v2024 = vsub.f32 1.0, %v2017
    %v2025 = vmul.f32 %v2024, %v2023
    %v2027 = vrot.slane %v1911, 2
    %v2029 = vmul.f32 %v2017, %v2027
    %v2030 = vadd.f32 %v2025, %v2029
    %vm2031 = vcmp.gt.s32.totalorder %v530, 11
    %v2032 = vsel %vm2031, 1, 0
    %2033 = vset.pattern.permute.xlu0 0
    %2034 = vperm.xlu0 %2033, %v2032
    %v2035 = vpop.permute.xlu0 %2034
    %vm2036 = vcmp.eq.s32.totalorder %v2035, 1
    %v2038 = vrot.slane %v2030, 6
    %v2040 = vsel %vm2036, %v2038, %v1911
    %2041 = vmatpush.msra.mxu0 %v526
    %2042 = vmatpush.msra.mxu0 %v523
    %2043 = vmatpush.msra.mxu0 %v520
    %2044 = vmatpush.msra.mxu0 %v517
    %2045 = vmatpush.msra.mxu0 %v514
    %2046 = vmatpush.msra.mxu0 %v511
    %2047 = vmatpush.msra.mxu0 %v508
    %2048 = vmatpush.msra.mxu0 %v505
    %2049 = vmatpush.msra.mxu0 %v502
    %2050 = vmatpush.msra.mxu0 %v499
    %2051 = vmatpush.msra.mxu0 %v496
    %2052 = vmatpush.msra.mxu0 %v493
    %2053 = vmatpush.msra.mxu0 %v490
    %2054 = vmatpush.msra.mxu0 %v487
    %2055 = vmatpush.msra.mxu0 %v484
    %2056 = vmatpush.msra.mxu0 %v481
    %2057 = vmatmul.f32.gmra.mxu0 %v2040
    %v2058 = vpop.f32.mrf.mxu0
    %v2059 = vadd.f32 %v532, %v2058
    %2060 = vdwg.mxu0
    %2061 = vmatpush.msra.mxu0 %v527
    %2062 = vmatpush.msra.mxu0 %v524
    %2063 = vmatpush.msra.mxu0 %v521
    %2064 = vmatpush.msra.mxu0 %v518
    %2065 = vmatpush.msra.mxu0 %v515
    %2066 = vmatpush.msra.mxu0 %v512
    %2067 = vmatpush.msra.mxu0 %v509
    %2068 = vmatpush.msra.mxu0 %v506
    %2069 = vmatpush.msra.mxu0 %v503
    %2070 = vmatpush.msra.mxu0 %v500
    %2071 = vmatpush.msra.mxu0 %v497
    %2072 = vmatpush.msra.mxu0 %v494
    %2073 = vmatpush.msra.mxu0 %v491
    %2074 = vmatpush.msra.mxu0 %v488
    %2075 = vmatpush.msra.mxu0 %v485
    %2076 = vmatpush.msra.mxu0 %v482
    %2077 = vmatmul.f32.gmra.mxu0 %v2040
    %v2078 = vpop.f32.mrf.mxu0
    %v2079 = vadd.f32 %v533, %v2078
    %2080 = vdwg.mxu0
    %2081 = vmatpush.msra.mxu0 %v528
    %2082 = vmatpush.msra.mxu0 %v525
    %2083 = vmatpush.msra.mxu0 %v522
    %2084 = vmatpush.msra.mxu0 %v519
    %2085 = vmatpush.msra.mxu0 %v516
    %2086 = vmatpush.msra.mxu0 %v513
    %2087 = vmatpush.msra.mxu0 %v510
    %2088 = vmatpush.msra.mxu0 %v507
    %2089 = vmatpush.msra.mxu0 %v504
    %2090 = vmatpush.msra.mxu0 %v501
    %2091 = vmatpush.msra.mxu0 %v498
    %2092 = vmatpush.msra.mxu0 %v495
    %2093 = vmatpush.msra.mxu0 %v492
    %2094 = vmatpush.msra.mxu0 %v489
    %2095 = vmatpush.msra.mxu0 %v486
    %2096 = vmatpush.msra.mxu0 %v483
    %2097 = vmatmul.f32.gmra.mxu0 %v2040
    %v2098 = vpop.f32.mrf.mxu0
    %v2099 = vadd.f32 %v534, %v2098
    %2100 = vdwg.mxu0
    %v2101 = vadd.f32 %v421, %v2059
    %v2102 = vxor.u32 %v2101, 2147483648
    %v2103 = vmul.f32 %v2102, 1.442695
    %v2104 = vpow.pop %v2103
    %v2105 = vadd.f32 %v2104, 1.0
    %v2106 = vrcp.pop %v2105
    %v2107 = vmul.f32 %v2105, %v2106
    %v2108 = vsub.f32 1.0, %v2107
    %v2109 = vmul.f32 %v2106, %v2108
    %v2110 = vadd.f32 %v2106, %v2109
    %vm2111 = vweird.f32 %v2105
    %vm2112 = vweird.f32 %v2106
    %vm2113 = vmor %vm2111, %vm2112
    %v2114 = vsel %vm2113, %v2106, %v2110
    %v2115 = vand.u32 2147483647, %v2105
    %vm2116 = vcmp.eq.f32.partialorder %v2115, 8.507059e+37
    %v2117 = vand.u32 %v2105, 2147483648
    %v2118 = vor.u32 1.1754944e-38, %v2117
    %v2119 = vsel %vm2116, %v2118, %v2114
    %v2120 = vmul.f32 1.0, %v2119
    %v2121 = vadd.f32 %v450, %v2079
    %v2122 = vxor.u32 %v2121, 2147483648
    %v2123 = vmul.f32 %v2122, 1.442695
    %v2124 = vpow.pop %v2123
    %v2125 = vadd.f32 %v2124, 1.0
    %v2126 = vrcp.pop %v2125
    %v2127 = vmul.f32 %v2125, %v2126
    %v2128 = vsub.f32 1.0, %v2127
    %v2129 = vmul.f32 %v2126, %v2128
    %v2130 = vadd.f32 %v2126, %v2129
    %vm2131 = vweird.f32 %v2125
    %vm2132 = vweird.f32 %v2126
    %vm2133 = vmor %vm2131, %vm2132
    %v2134 = vsel %vm2133, %v2126, %v2130
    %v2135 = vand.u32 2147483647, %v2125
    %vm2136 = vcmp.eq.f32.partialorder %v2135, 8.507059e+37
    %v2137 = vand.u32 %v2125, 2147483648
    %v2138 = vor.u32 1.1754944e-38, %v2137
    %v2139 = vsel %vm2136, %v2138, %v2134
    %v2140 = vmul.f32 1.0, %v2139
    %v2141 = vmul.f32 %v2120, %v2099
    %v2142 = vadd.f32 %v479, %v2141
    %v2143 = vtanh.pop %v2142
    %v2144 = vsub.f32 1.0, %v2140
    %v2145 = vmul.f32 %v2144, %v2143
    %v2146 = vmul.f32 %v2140, %v2040
    %v2147 = vadd.f32 %v2145, %v2146
    %vm2148 = vcmp.gt.s32.totalorder %v530, 12
    %v2149 = vsel %vm2148, 1, 0
    %2150 = vset.pattern.permute.xlu0 0
    %2151 = vperm.xlu0 %2150, %v2149
    %v2152 = vpop.permute.xlu0 %2151
    %vm2153 = vcmp.eq.s32.totalorder %v2152, 1
    %v2154 = vsel %vm2153, %v2147, %v2040
    %2155 = vmatpush.msra.mxu0 %v526
    %2156 = vmatpush.msra.mxu0 %v523
    %2157 = vmatpush.msra.mxu0 %v520
    %2158 = vmatpush.msra.mxu0 %v517
    %2159 = vmatpush.msra.mxu0 %v514
    %2160 = vmatpush.msra.mxu0 %v511
    %2161 = vmatpush.msra.mxu0 %v508
    %2162 = vmatpush.msra.mxu0 %v505
    %2163 = vmatpush.msra.mxu0 %v502
    %2164 = vmatpush.msra.mxu0 %v499
    %2165 = vmatpush.msra.mxu0 %v496
    %2166 = vmatpush.msra.mxu0 %v493
    %2167 = vmatpush.msra.mxu0 %v490
    %2168 = vmatpush.msra.mxu0 %v487
    %2169 = vmatpush.msra.mxu0 %v484
    %2170 = vmatpush.msra.mxu0 %v481
    %2171 = vmatmul.f32.gmra.mxu0 %v2154
    %v2172 = vpop.f32.mrf.mxu0
    %v2173 = vadd.f32 %v532, %v2172
    %2174 = vdwg.mxu0
    %2175 = vmatpush.msra.mxu0 %v527
    %2176 = vmatpush.msra.mxu0 %v524
    %2177 = vmatpush.msra.mxu0 %v521
    %2178 = vmatpush.msra.mxu0 %v518
    %2179 = vmatpush.msra.mxu0 %v515
    %2180 = vmatpush.msra.mxu0 %v512
    %2181 = vmatpush.msra.mxu0 %v509
    %2182 = vmatpush.msra.mxu0 %v506
    %2183 = vmatpush.msra.mxu0 %v503
    %2184 = vmatpush.msra.mxu0 %v500
    %2185 = vmatpush.msra.mxu0 %v497
    %2186 = vmatpush.msra.mxu0 %v494
    %2187 = vmatpush.msra.mxu0 %v491
    %2188 = vmatpush.msra.mxu0 %v488
    %2189 = vmatpush.msra.mxu0 %v485
    %2190 = vmatpush.msra.mxu0 %v482
    %2191 = vmatmul.f32.gmra.mxu0 %v2154
    %v2192 = vpop.f32.mrf.mxu0
    %v2193 = vadd.f32 %v533, %v2192
    %2194 = vdwg.mxu0
    %2195 = vmatpush.msra.mxu0 %v528
    %2196 = vmatpush.msra.mxu0 %v525
    %2197 = vmatpush.msra.mxu0 %v522
    %2198 = vmatpush.msra.mxu0 %v519
    %2199 = vmatpush.msra.mxu0 %v516
    %2200 = vmatpush.msra.mxu0 %v513
    %2201 = vmatpush.msra.mxu0 %v510
    %2202 = vmatpush.msra.mxu0 %v507
    %2203 = vmatpush.msra.mxu0 %v504
    %2204 = vmatpush.msra.mxu0 %v501
    %2205 = vmatpush.msra.mxu0 %v498
    %2206 = vmatpush.msra.mxu0 %v495
    %2207 = vmatpush.msra.mxu0 %v492
    %2208 = vmatpush.msra.mxu0 %v489
    %2209 = vmatpush.msra.mxu0 %v486
    %2210 = vmatpush.msra.mxu0 %v483
    %2211 = vmatmul.f32.gmra.mxu0 %v2154
    %v2212 = vpop.f32.mrf.mxu0
    %v2213 = vadd.f32 %v534, %v2212
    %2214 = vdwg.mxu0
    %v2216 = vrot.slane %v2173, 6
    %v2218 = vadd.f32 %v421, %v2216
    %v2219 = vxor.u32 %v2218, 2147483648
    %v2220 = vmul.f32 %v2219, 1.442695
    %v2221 = vpow.pop %v2220
    %v2222 = vadd.f32 %v2221, 1.0
    %v2223 = vrcp.pop %v2222
    %v2224 = vmul.f32 %v2222, %v2223
    %v2225 = vsub.f32 1.0, %v2224
    %v2226 = vmul.f32 %v2223, %v2225
    %v2227 = vadd.f32 %v2223, %v2226
    %vm2228 = vweird.f32 %v2222
    %vm2229 = vweird.f32 %v2223
    %vm2230 = vmor %vm2228, %vm2229
    %v2231 = vsel %vm2230, %v2223, %v2227
    %v2232 = vand.u32 2147483647, %v2222
    %vm2233 = vcmp.eq.f32.partialorder %v2232, 8.507059e+37
    %v2234 = vand.u32 %v2222, 2147483648
    %v2235 = vor.u32 1.1754944e-38, %v2234
    %v2236 = vsel %vm2233, %v2235, %v2231
    %v2237 = vmul.f32 1.0, %v2236
    %v2239 = vrot.slane %v2193, 6
    %v2241 = vadd.f32 %v450, %v2239
    %v2242 = vxor.u32 %v2241, 2147483648
    %v2243 = vmul.f32 %v2242, 1.442695
    %v2244 = vpow.pop %v2243
    %v2245 = vadd.f32 %v2244, 1.0
    %v2246 = vrcp.pop %v2245
    %v2247 = vmul.f32 %v2245, %v2246
    %v2248 = vsub.f32 1.0, %v2247
    %v2249 = vmul.f32 %v2246, %v2248
    %v2250 = vadd.f32 %v2246, %v2249
    %vm2251 = vweird.f32 %v2245
    %vm2252 = vweird.f32 %v2246
    %vm2253 = vmor %vm2251, %vm2252
    %v2254 = vsel %vm2253, %v2246, %v2250
    %v2255 = vand.u32 2147483647, %v2245
    %vm2256 = vcmp.eq.f32.partialorder %v2255, 8.507059e+37
    %v2257 = vand.u32 %v2245, 2147483648
    %v2258 = vor.u32 1.1754944e-38, %v2257
    %v2259 = vsel %vm2256, %v2258, %v2254
    %v2260 = vmul.f32 1.0, %v2259
    %v2262 = vrot.slane %v2213, 6
    %v2264 = vmul.f32 %v2237, %v2262
    %v2265 = vadd.f32 %v479, %v2264
    %v2266 = vtanh.pop %v2265
    %v2267 = vsub.f32 1.0, %v2260
    %v2268 = vmul.f32 %v2267, %v2266
    %v2270 = vrot.slane %v2154, 6
    %v2272 = vmul.f32 %v2260, %v2270
    %v2273 = vadd.f32 %v2268, %v2272
    %vm2274 = vcmp.gt.s32.totalorder %v530, 13
    %v2275 = vsel %vm2274, 1, 0
    %2276 = vset.pattern.permute.xlu0 0
    %2277 = vperm.xlu0 %2276, %v2275
    %v2278 = vpop.permute.xlu0 %2277
    %vm2279 = vcmp.eq.s32.totalorder %v2278, 1
    %v2281 = vrot.slane %v2273, 2
    %v2283 = vsel %vm2279, %v2281, %v2154
    %2284 = vmatpush.msra.mxu0 %v526
    %2285 = vmatpush.msra.mxu0 %v523
    %2286 = vmatpush.msra.mxu0 %v520
    %2287 = vmatpush.msra.mxu0 %v517
    %2288 = vmatpush.msra.mxu0 %v514
    %2289 = vmatpush.msra.mxu0 %v511
    %2290 = vmatpush.msra.mxu0 %v508
    %2291 = vmatpush.msra.mxu0 %v505
    %2292 = vmatpush.msra.mxu0 %v502
    %2293 = vmatpush.msra.mxu0 %v499
    %2294 = vmatpush.msra.mxu0 %v496
    %2295 = vmatpush.msra.mxu0 %v493
    %2296 = vmatpush.msra.mxu0 %v490
    %2297 = vmatpush.msra.mxu0 %v487
    %2298 = vmatpush.msra.mxu0 %v484
    %2299 = vmatpush.msra.mxu0 %v481
    %2300 = vmatmul.f32.gmra.mxu0 %v2283
    %v2301 = vpop.f32.mrf.mxu0
    %v2302 = vadd.f32 %v532, %v2301
    %2303 = vdwg.mxu0
    %2304 = vmatpush.msra.mxu0 %v527
    %2305 = vmatpush.msra.mxu0 %v524
    %2306 = vmatpush.msra.mxu0 %v521
    %2307 = vmatpush.msra.mxu0 %v518
    %2308 = vmatpush.msra.mxu0 %v515
    %2309 = vmatpush.msra.mxu0 %v512
    %2310 = vmatpush.msra.mxu0 %v509
    %2311 = vmatpush.msra.mxu0 %v506
    %2312 = vmatpush.msra.mxu0 %v503
    %2313 = vmatpush.msra.mxu0 %v500
    %2314 = vmatpush.msra.mxu0 %v497
    %2315 = vmatpush.msra.mxu0 %v494
    %2316 = vmatpush.msra.mxu0 %v491
    %2317 = vmatpush.msra.mxu0 %v488
    %2318 = vmatpush.msra.mxu0 %v485
    %2319 = vmatpush.msra.mxu0 %v482
    %2320 = vmatmul.f32.gmra.mxu0 %v2283
    %v2321 = vpop.f32.mrf.mxu0
    %v2322 = vadd.f32 %v533, %v2321
    %2323 = vdwg.mxu0
    %2324 = vmatpush.msra.mxu0 %v528
    %2325 = vmatpush.msra.mxu0 %v525
    %2326 = vmatpush.msra.mxu0 %v522
    %2327 = vmatpush.msra.mxu0 %v519
    %2328 = vmatpush.msra.mxu0 %v516
    %2329 = vmatpush.msra.mxu0 %v513
    %2330 = vmatpush.msra.mxu0 %v510
    %2331 = vmatpush.msra.mxu0 %v507
    %2332 = vmatpush.msra.mxu0 %v504
    %2333 = vmatpush.msra.mxu0 %v501
    %2334 = vmatpush.msra.mxu0 %v498
    %2335 = vmatpush.msra.mxu0 %v495
    %2336 = vmatpush.msra.mxu0 %v492
    %2337 = vmatpush.msra.mxu0 %v489
    %2338 = vmatpush.msra.mxu0 %v486
    %2339 = vmatpush.msra.mxu0 %v483
    %2340 = vmatmul.f32.gmra.mxu0 %v2283
    %v2341 = vpop.f32.mrf.mxu0
    %v2342 = vadd.f32 %v534, %v2341
    %2343 = vdwg.mxu0
    %v2345 = vrot.slane %v2302, 4
    %v2347 = vadd.f32 %v421, %v2345
    %v2348 = vxor.u32 %v2347, 2147483648
    %v2349 = vmul.f32 %v2348, 1.442695
    %v2350 = vpow.pop %v2349
    %v2351 = vadd.f32 %v2350, 1.0
    %v2352 = vrcp.pop %v2351
    %v2353 = vmul.f32 %v2351, %v2352
    %v2354 = vsub.f32 1.0, %v2353
    %v2355 = vmul.f32 %v2352, %v2354
    %v2356 = vadd.f32 %v2352, %v2355
    %vm2357 = vweird.f32 %v2351
    %vm2358 = vweird.f32 %v2352
    %vm2359 = vmor %vm2357, %vm2358
    %v2360 = vsel %vm2359, %v2352, %v2356
    %v2361 = vand.u32 2147483647, %v2351
    %vm2362 = vcmp.eq.f32.partialorder %v2361, 8.507059e+37
    %v2363 = vand.u32 %v2351, 2147483648
    %v2364 = vor.u32 1.1754944e-38, %v2363
    %v2365 = vsel %vm2362, %v2364, %v2360
    %v2366 = vmul.f32 1.0, %v2365
    %v2368 = vrot.slane %v2322, 4
    %v2370 = vadd.f32 %v450, %v2368
    %v2371 = vxor.u32 %v2370, 2147483648
    %v2372 = vmul.f32 %v2371, 1.442695
    %v2373 = vpow.pop %v2372
    %v2374 = vadd.f32 %v2373, 1.0
    %v2375 = vrcp.pop %v2374
    %v2376 = vmul.f32 %v2374, %v2375
    %v2377 = vsub.f32 1.0, %v2376
    %v2378 = vmul.f32 %v2375, %v2377
    %v2379 = vadd.f32 %v2375, %v2378
    %vm2380 = vweird.f32 %v2374
    %vm2381 = vweird.f32 %v2375
    %vm2382 = vmor %vm2380, %vm2381
    %v2383 = vsel %vm2382, %v2375, %v2379
    %v2384 = vand.u32 2147483647, %v2374
    %vm2385 = vcmp.eq.f32.partialorder %v2384, 8.507059e+37
    %v2386 = vand.u32 %v2374, 2147483648
    %v2387 = vor.u32 1.1754944e-38, %v2386
    %v2388 = vsel %vm2385, %v2387, %v2383
    %v2389 = vmul.f32 1.0, %v2388
    %v2391 = vrot.slane %v2342, 4
    %v2393 = vmul.f32 %v2366, %v2391
    %v2394 = vadd.f32 %v479, %v2393
    %v2395 = vtanh.pop %v2394
    %v2396 = vsub.f32 1.0, %v2389
    %v2397 = vmul.f32 %v2396, %v2395
    %v2399 = vrot.slane %v2283, 4
    %v2401 = vmul.f32 %v2389, %v2399
    %v2402 = vadd.f32 %v2397, %v2401
    %vm2403 = vcmp.gt.s32.totalorder %v530, 14
    %v2404 = vsel %vm2403, 1, 0
    %2405 = vset.pattern.permute.xlu0 0
    %2406 = vperm.xlu0 %2405, %v2404
    %v2407 = vpop.permute.xlu0 %2406
    %vm2408 = vcmp.eq.s32.totalorder %v2407, 1
    %v2410 = vrot.slane %v2402, 4
    %v2412 = vsel %vm2408, %v2410, %v2283
    %2413 = vmatpush.msra.mxu0 %v526
    %2414 = vmatpush.msra.mxu0 %v523
    %2415 = vmatpush.msra.mxu0 %v520
    %2416 = vmatpush.msra.mxu0 %v517
    %2417 = vmatpush.msra.mxu0 %v514
    %2418 = vmatpush.msra.mxu0 %v511
    %2419 = vmatpush.msra.mxu0 %v508
    %2420 = vmatpush.msra.mxu0 %v505
    %2421 = vmatpush.msra.mxu0 %v502
    %2422 = vmatpush.msra.mxu0 %v499
    %2423 = vmatpush.msra.mxu0 %v496
    %2424 = vmatpush.msra.mxu0 %v493
    %2425 = vmatpush.msra.mxu0 %v490
    %2426 = vmatpush.msra.mxu0 %v487
    %2427 = vmatpush.msra.mxu0 %v484
    %2428 = vmatpush.msra.mxu0 %v481
    %2429 = vmatmul.f32.gmra.mxu0 %v2412
    %v2430 = vpop.f32.mrf.mxu0
    %v2431 = vadd.f32 %v532, %v2430
    %2432 = vdwg.mxu0
    %2433 = vmatpush.msra.mxu0 %v527
    %2434 = vmatpush.msra.mxu0 %v524
    %2435 = vmatpush.msra.mxu0 %v521
    %2436 = vmatpush.msra.mxu0 %v518
    %2437 = vmatpush.msra.mxu0 %v515
    %2438 = vmatpush.msra.mxu0 %v512
    %2439 = vmatpush.msra.mxu0 %v509
    %2440 = vmatpush.msra.mxu0 %v506
    %2441 = vmatpush.msra.mxu0 %v503
    %2442 = vmatpush.msra.mxu0 %v500
    %2443 = vmatpush.msra.mxu0 %v497
    %2444 = vmatpush.msra.mxu0 %v494
    %2445 = vmatpush.msra.mxu0 %v491
    %2446 = vmatpush.msra.mxu0 %v488
    %2447 = vmatpush.msra.mxu0 %v485
    %2448 = vmatpush.msra.mxu0 %v482
    %2449 = vmatmul.f32.gmra.mxu0 %v2412
    %v2450 = vpop.f32.mrf.mxu0
    %v2451 = vadd.f32 %v533, %v2450
    %2452 = vdwg.mxu0
    %2453 = vmatpush.msra.mxu0 %v528
    %2454 = vmatpush.msra.mxu0 %v525
    %2455 = vmatpush.msra.mxu0 %v522
    %2456 = vmatpush.msra.mxu0 %v519
    %2457 = vmatpush.msra.mxu0 %v516
    %2458 = vmatpush.msra.mxu0 %v513
    %2459 = vmatpush.msra.mxu0 %v510
    %2460 = vmatpush.msra.mxu0 %v507
    %2461 = vmatpush.msra.mxu0 %v504
    %2462 = vmatpush.msra.mxu0 %v501
    %2463 = vmatpush.msra.mxu0 %v498
    %2464 = vmatpush.msra.mxu0 %v495
    %2465 = vmatpush.msra.mxu0 %v492
    %2466 = vmatpush.msra.mxu0 %v489
    %2467 = vmatpush.msra.mxu0 %v486
    %2468 = vmatpush.msra.mxu0 %v483
    %2469 = vmatmul.f32.gmra.mxu0 %v2412
    %v2470 = vpop.f32.mrf.mxu0
    %v2471 = vadd.f32 %v534, %v2470
    %2472 = vdwg.mxu0
    %v2474 = vrot.slane %v2431, 2
    %v2476 = vadd.f32 %v421, %v2474
    %v2477 = vxor.u32 %v2476, 2147483648
    %v2478 = vmul.f32 %v2477, 1.442695
    %v2479 = vpow.pop %v2478
    %v2480 = vadd.f32 %v2479, 1.0
    %v2481 = vrcp.pop %v2480
    %v2482 = vmul.f32 %v2480, %v2481
    %v2483 = vsub.f32 1.0, %v2482
    %v2484 = vmul.f32 %v2481, %v2483
    %v2485 = vadd.f32 %v2481, %v2484
    %vm2486 = vweird.f32 %v2480
    %vm2487 = vweird.f32 %v2481
    %vm2488 = vmor %vm2486, %vm2487
    %v2489 = vsel %vm2488, %v2481, %v2485
    %v2490 = vand.u32 2147483647, %v2480
    %vm2491 = vcmp.eq.f32.partialorder %v2490, 8.507059e+37
    %v2492 = vand.u32 %v2480, 2147483648
    %v2493 = vor.u32 1.1754944e-38, %v2492
    %v2494 = vsel %vm2491, %v2493, %v2489
    %v2495 = vmul.f32 1.0, %v2494
    %v2497 = vrot.slane %v2451, 2
    %v2499 = vadd.f32 %v450, %v2497
    %v2500 = vxor.u32 %v2499, 2147483648
    %v2501 = vmul.f32 %v2500, 1.442695
    %v2502 = vpow.pop %v2501
    %v2503 = vadd.f32 %v2502, 1.0
    %v2504 = vrcp.pop %v2503
    %v2505 = vmul.f32 %v2503, %v2504
    %v2506 = vsub.f32 1.0, %v2505
    %v2507 = vmul.f32 %v2504, %v2506
    %v2508 = vadd.f32 %v2504, %v2507
    %vm2509 = vweird.f32 %v2503
    %vm2510 = vweird.f32 %v2504
    %vm2511 = vmor %vm2509, %vm2510
    %v2512 = vsel %vm2511, %v2504, %v2508
    %v2513 = vand.u32 2147483647, %v2503
    %vm2514 = vcmp.eq.f32.partialorder %v2513, 8.507059e+37
    %v2515 = vand.u32 %v2503, 2147483648
    %v2516 = vor.u32 1.1754944e-38, %v2515
    %v2517 = vsel %vm2514, %v2516, %v2512
    %v2518 = vmul.f32 1.0, %v2517
    %v2520 = vrot.slane %v2471, 2
    %v2522 = vmul.f32 %v2495, %v2520
    %v2523 = vadd.f32 %v479, %v2522
    %v2524 = vtanh.pop %v2523
    %v2525 = vsub.f32 1.0, %v2518
    %v2526 = vmul.f32 %v2525, %v2524
    %v2528 = vrot.slane %v2412, 2
    %v2530 = vmul.f32 %v2518, %v2528
    %v2531 = vadd.f32 %v2526, %v2530
    %vm2532 = vcmp.gt.s32.totalorder %v530, 15
    %v2533 = vsel %vm2532, 1, 0
    %2534 = vset.pattern.permute.xlu0 0
    %2535 = vperm.xlu0 %2534, %v2533
    %v2536 = vpop.permute.xlu0 %2535
    %vm2537 = vcmp.eq.s32.totalorder %v2536, 1
    %v2539 = vrot.slane %v2531, 6
    %v2541 = vsel %vm2537, %v2539, %v2412
    %v2542 = vld [vmem:[%s9] sm:$0xff]
    %v2543 = vld [vmem:[%s9 + $0x8] sm:$0xff]
    %v2544 = vld [vmem:[%s9 + $0x10] sm:$0xff]
    %v2545 = vld [vmem:[%s9 + $0x18] sm:$0xff]
    %v2546 = vld [vmem:[%s9 + $0x20] sm:$0xff]
    %v2547 = vld [vmem:[%s9 + $0x28] sm:$0xff]
    %v2548 = vld [vmem:[%s9 + $0x30] sm:$0xff]
    %v2549 = vld [vmem:[%s9 + $0x38] sm:$0xff]
    %v2550 = vld [vmem:[%s9 + $0x40] sm:$0xff]
    %v2551 = vld [vmem:[%s9 + $0x48] sm:$0xff]
    %v2552 = vld [vmem:[%s9 + $0x50] sm:$0xff]
    %v2553 = vld [vmem:[%s9 + $0x58] sm:$0xff]
    %v2554 = vld [vmem:[%s9 + $0x60] sm:$0xff]
    %v2555 = vld [vmem:[%s9 + $0x68] sm:$0xff]
    %v2556 = vld [vmem:[%s9 + $0x70] sm:$0xff]
    %v2557 = vld [vmem:[%s9 + $0x78] sm:$0xff]
    %v2558 = vld [vmem:[%s10] sm:$0x1]
    %v2560 = vperm.slane %v2558, 0
    %2562 = vmatpush.msra.mxu0 %v2557
    %2563 = vmatpush.msra.mxu0 %v2556
    %2564 = vmatpush.msra.mxu0 %v2555
    %2565 = vmatpush.msra.mxu0 %v2554
    %2566 = vmatpush.msra.mxu0 %v2553
    %2567 = vmatpush.msra.mxu0 %v2552
    %2568 = vmatpush.msra.mxu0 %v2551
    %2569 = vmatpush.msra.mxu0 %v2550
    %2570 = vmatpush.msra.mxu0 %v2549
    %2571 = vmatpush.msra.mxu0 %v2548
    %2572 = vmatpush.msra.mxu0 %v2547
    %2573 = vmatpush.msra.mxu0 %v2546
    %2574 = vmatpush.msra.mxu0 %v2545
    %2575 = vmatpush.msra.mxu0 %v2544
    %2576 = vmatpush.msra.mxu0 %v2543
    %2577 = vmatpush.msra.mxu0 %v2542
    %2578 = vmatmul.f32.gmra.mxu0 %v2541
    %v2579 = vpop.f32.mrf.mxu0
    %v2580 = vadd.f32 %v2560, %v2579
    %2581 = vdwg.mxu0
    %v2582 = vld [vmem:[%s2] sm:$0x3]
    %v2583 = vld [vmem:[#allocation7] sm:$0xff]
    %v2584 = vld [vmem:[#allocation7 + $0x8] sm:$0xff]
    %v2585 = vld [vmem:[#allocation7 + $0x10] sm:$0xff]
    %v2586 = vld [vmem:[#allocation7 + $0x18] sm:$0xff]
    %v2587 = vld [vmem:[#allocation7 + $0x20] sm:$0xff]
    %v2588 = vld [vmem:[#allocation7 + $0x28] sm:$0xff]
    %v2589 = vld [vmem:[#allocation7 + $0x30] sm:$0xff]
    %v2590 = vld [vmem:[#allocation7 + $0x38] sm:$0xff]
    %v2591 = vld [vmem:[#allocation7 + $0x40] sm:$0xff]
    %v2592 = vld [vmem:[#allocation7 + $0x48] sm:$0xff]
    %v2593 = vld [vmem:[#allocation7 + $0x50] sm:$0xff]
    %v2594 = vld [vmem:[#allocation7 + $0x58] sm:$0xff]
    %v2595 = vld [vmem:[#allocation7 + $0x60] sm:$0xff]
    %v2596 = vld [vmem:[#allocation7 + $0x68] sm:$0xff]
    %v2597 = vld [vmem:[#allocation7 + $0x70] sm:$0xff]
    %v2598 = vld [vmem:[#allocation7 + $0x78] sm:$0xff]
    %v2599 = vld [vmem:[#allocation7 + $0x80] sm:$0xff]
    %v2600 = vld [vmem:[#allocation7 + $0x88] sm:$0xff]
    %v2601 = vld [vmem:[#allocation7 + $0x90] sm:$0xff]
    %v2602 = vld [vmem:[#allocation7 + $0x98] sm:$0xff]
    %v2603 = vld [vmem:[#allocation7 + $0xa0] sm:$0xff]
    %v2604 = vld [vmem:[#allocation7 + $0xa8] sm:$0xff]
    %v2605 = vld [vmem:[#allocation7 + $0xb0] sm:$0xff]
    %v2606 = vld [vmem:[#allocation7 + $0xb8] sm:$0xff]
    %v2607 = vld [vmem:[#allocation7 + $0xc0] sm:$0xff]
    %v2608 = vld [vmem:[#allocation7 + $0xc8] sm:$0xff]
    %v2609 = vld [vmem:[#allocation7 + $0xd0] sm:$0xff]
    %v2610 = vld [vmem:[#allocation7 + $0xd8] sm:$0xff]
    %v2611 = vld [vmem:[#allocation7 + $0xe0] sm:$0xff]
    %v2612 = vld [vmem:[#allocation7 + $0xe8] sm:$0xff]
    %v2613 = vld [vmem:[#allocation7 + $0xf0] sm:$0xff]
    %v2614 = vld [vmem:[#allocation7 + $0xf8] sm:$0xff]
    %v2615 = vld [vmem:[#allocation7 + $0x100] sm:$0xff]
    %v2616 = vld [vmem:[#allocation7 + $0x108] sm:$0xff]
    %v2617 = vld [vmem:[#allocation7 + $0x110] sm:$0xff]
    %v2618 = vld [vmem:[#allocation7 + $0x118] sm:$0xff]
    %v2619 = vld [vmem:[#allocation7 + $0x120] sm:$0xff]
    %v2620 = vld [vmem:[#allocation7 + $0x128] sm:$0xff]
    %v2621 = vld [vmem:[#allocation7 + $0x130] sm:$0xff]
    %v2622 = vld [vmem:[#allocation7 + $0x138] sm:$0xff]
    %v2623 = vld [vmem:[#allocation7 + $0x140] sm:$0xff]
    %v2624 = vld [vmem:[#allocation7 + $0x148] sm:$0xff]
    %v2625 = vld [vmem:[#allocation7 + $0x150] sm:$0xff]
    %v2626 = vld [vmem:[#allocation7 + $0x158] sm:$0xff]
    %v2627 = vld [vmem:[#allocation7 + $0x160] sm:$0xff]
    %v2628 = vld [vmem:[#allocation7 + $0x168] sm:$0xff]
    %v2629 = vld [vmem:[#allocation7 + $0x170] sm:$0xff]
    %v2630 = vld [vmem:[#allocation7 + $0x178] sm:$0xff]
    %v2631 = vld [vmem:[#allocation7 + $0x180] sm:$0xff]
    %v2632 = vld [vmem:[#allocation7 + $0x188] sm:$0xff]
    %v2633 = vld [vmem:[#allocation7 + $0x190] sm:$0xff]
    %v2634 = vld [vmem:[#allocation7 + $0x198] sm:$0xff]
    %v2635 = vld [vmem:[#allocation7 + $0x1a0] sm:$0xff]
    %v2636 = vld [vmem:[#allocation7 + $0x1a8] sm:$0xff]
    %v2637 = vld [vmem:[#allocation7 + $0x1b0] sm:$0xff]
    %v2638 = vld [vmem:[#allocation7 + $0x1b8] sm:$0xff]
    %v2639 = vld [vmem:[#allocation7 + $0x1c0] sm:$0xff]
    %v2640 = vld [vmem:[#allocation7 + $0x1c8] sm:$0xff]
    %v2641 = vld [vmem:[#allocation7 + $0x1d0] sm:$0xff]
    %v2642 = vld [vmem:[#allocation7 + $0x1d8] sm:$0xff]
    %v2643 = vld [vmem:[#allocation7 + $0x1e0] sm:$0xff]
    %v2644 = vld [vmem:[#allocation7 + $0x1e8] sm:$0xff]
    %v2645 = vld [vmem:[#allocation7 + $0x1f0] sm:$0xff]
    %v2646 = vld [vmem:[#allocation7 + $0x1f8] sm:$0xff]
    %v2647 = vld [vmem:[#allocation8] sm:$0xff]
    %v2648 = vld [vmem:[#allocation8 + $0x8] sm:$0xff]
    %v2649 = vld [vmem:[#allocation8 + $0x10] sm:$0xff]
    %v2650 = vld [vmem:[#allocation8 + $0x18] sm:$0xff]
    %v2651 = vld [vmem:[#allocation8 + $0x20] sm:$0xff]
    %v2652 = vld [vmem:[#allocation8 + $0x28] sm:$0xff]
    %v2653 = vld [vmem:[#allocation8 + $0x30] sm:$0xff]
    %v2654 = vld [vmem:[#allocation8 + $0x38] sm:$0xff]
    %v2655 = vld [vmem:[#allocation8 + $0x40] sm:$0xff]
    %v2656 = vld [vmem:[#allocation8 + $0x48] sm:$0xff]
    %v2657 = vld [vmem:[#allocation8 + $0x50] sm:$0xff]
    %v2658 = vld [vmem:[#allocation8 + $0x58] sm:$0xff]
    %v2659 = vld [vmem:[#allocation8 + $0x60] sm:$0xff]
    %v2660 = vld [vmem:[#allocation8 + $0x68] sm:$0xff]
    %v2661 = vld [vmem:[#allocation8 + $0x70] sm:$0xff]
    %v2662 = vld [vmem:[#allocation8 + $0x78] sm:$0xff]
    %v2663 = vld [vmem:[#allocation8 + $0x80] sm:$0xff]
    %v2664 = vld [vmem:[#allocation8 + $0x88] sm:$0xff]
    %v2665 = vld [vmem:[#allocation8 + $0x90] sm:$0xff]
    %v2666 = vld [vmem:[#allocation8 + $0x98] sm:$0xff]
    %v2667 = vld [vmem:[#allocation8 + $0xa0] sm:$0xff]
    %v2668 = vld [vmem:[#allocation8 + $0xa8] sm:$0xff]
    %v2669 = vld [vmem:[#allocation8 + $0xb0] sm:$0xff]
    %v2670 = vld [vmem:[#allocation8 + $0xb8] sm:$0xff]
    %v2671 = vld [vmem:[#allocation8 + $0xc0] sm:$0xff]
    %v2672 = vld [vmem:[#allocation8 + $0xc8] sm:$0xff]
    %v2673 = vld [vmem:[#allocation8 + $0xd0] sm:$0xff]
    %v2674 = vld [vmem:[#allocation8 + $0xd8] sm:$0xff]
    %v2675 = vld [vmem:[#allocation8 + $0xe0] sm:$0xff]
    %v2676 = vld [vmem:[#allocation8 + $0xe8] sm:$0xff]
    %v2677 = vld [vmem:[#allocation8 + $0xf0] sm:$0xff]
    %v2678 = vld [vmem:[#allocation8 + $0xf8] sm:$0xff]
    %v2679 = vld [vmem:[#allocation8 + $0x100] sm:$0xff]
    %v2680 = vld [vmem:[#allocation8 + $0x108] sm:$0xff]
    %v2681 = vld [vmem:[#allocation8 + $0x110] sm:$0xff]
    %v2682 = vld [vmem:[#allocation8 + $0x118] sm:$0xff]
    %v2683 = vld [vmem:[#allocation8 + $0x120] sm:$0xff]
    %v2684 = vld [vmem:[#allocation8 + $0x128] sm:$0xff]
    %v2685 = vld [vmem:[#allocation8 + $0x130] sm:$0xff]
    %v2686 = vld [vmem:[#allocation8 + $0x138] sm:$0xff]
    %v2687 = vld [vmem:[#allocation8 + $0x140] sm:$0xff]
    %v2688 = vld [vmem:[#allocation8 + $0x148] sm:$0xff]
    %v2689 = vld [vmem:[#allocation8 + $0x150] sm:$0xff]
    %v2690 = vld [vmem:[#allocation8 + $0x158] sm:$0xff]
    %v2691 = vld [vmem:[#allocation8 + $0x160] sm:$0xff]
    %v2692 = vld [vmem:[#allocation8 + $0x168] sm:$0xff]
    %v2693 = vld [vmem:[#allocation8 + $0x170] sm:$0xff]
    %v2694 = vld [vmem:[#allocation8 + $0x178] sm:$0xff]
    %v2695 = vld [vmem:[#allocation8 + $0x180] sm:$0xff]
    %v2696 = vld [vmem:[#allocation8 + $0x188] sm:$0xff]
    %v2697 = vld [vmem:[#allocation8 + $0x190] sm:$0xff]
    %v2698 = vld [vmem:[#allocation8 + $0x198] sm:$0xff]
    %v2699 = vld [vmem:[#allocation8 + $0x1a0] sm:$0xff]
    %v2700 = vld [vmem:[#allocation8 + $0x1a8] sm:$0xff]
    %v2701 = vld [vmem:[#allocation8 + $0x1b0] sm:$0xff]
    %v2702 = vld [vmem:[#allocation8 + $0x1b8] sm:$0xff]
    %v2703 = vld [vmem:[#allocation8 + $0x1c0] sm:$0xff]
    %v2704 = vld [vmem:[#allocation8 + $0x1c8] sm:$0xff]
    %v2705 = vld [vmem:[#allocation8 + $0x1d0] sm:$0xff]
    %v2706 = vld [vmem:[#allocation8 + $0x1d8] sm:$0xff]
    %v2707 = vld [vmem:[#allocation8 + $0x1e0] sm:$0xff]
    %v2708 = vld [vmem:[#allocation8 + $0x1e8] sm:$0xff]
    %v2709 = vld [vmem:[#allocation8 + $0x1f0] sm:$0xff]
    %v2710 = vld [vmem:[#allocation8 + $0x1f8] sm:$0xff]
    %2711 = vmatpush.msra.mxu0 %v2707
    %2712 = vmatpush.msra.mxu0 %v2703
    %2713 = vmatpush.msra.mxu0 %v2699
    %2714 = vmatpush.msra.mxu0 %v2695
    %2715 = vmatpush.msra.mxu0 %v2691
    %2716 = vmatpush.msra.mxu0 %v2687
    %2717 = vmatpush.msra.mxu0 %v2683
    %2718 = vmatpush.msra.mxu0 %v2679
    %2719 = vmatpush.msra.mxu0 %v2675
    %2720 = vmatpush.msra.mxu0 %v2671
    %2721 = vmatpush.msra.mxu0 %v2667
    %2722 = vmatpush.msra.mxu0 %v2663
    %2723 = vmatpush.msra.mxu0 %v2659
    %2724 = vmatpush.msra.mxu0 %v2655
    %2725 = vmatpush.msra.mxu0 %v2651
    %2726 = vmatpush.msra.mxu0 %v2647
    %2727 = vmatmul.f32.gmra.mxu0 %v2580
    %v2728 = vpop.f32.mrf.mxu0
    %v2729 = vadd.f32 0.0, %v2728
    %2730 = vdwg.mxu0
    %2731 = vmatpush.msra.mxu0 %v2708
    %2732 = vmatpush.msra.mxu0 %v2704
    %2733 = vmatpush.msra.mxu0 %v2700
    %2734 = vmatpush.msra.mxu0 %v2696
    %2735 = vmatpush.msra.mxu0 %v2692
    %2736 = vmatpush.msra.mxu0 %v2688
    %2737 = vmatpush.msra.mxu0 %v2684
    %2738 = vmatpush.msra.mxu0 %v2680
    %2739 = vmatpush.msra.mxu0 %v2676
    %2740 = vmatpush.msra.mxu0 %v2672
    %2741 = vmatpush.msra.mxu0 %v2668
    %2742 = vmatpush.msra.mxu0 %v2664
    %2743 = vmatpush.msra.mxu0 %v2660
    %2744 = vmatpush.msra.mxu0 %v2656
    %2745 = vmatpush.msra.mxu0 %v2652
    %2746 = vmatpush.msra.mxu0 %v2648
    %2747 = vmatmul.f32.gmra.mxu0 %v2580
    %v2748 = vpop.f32.mrf.mxu0
    %v2749 = vadd.f32 0.0, %v2748
    %2750 = vdwg.mxu0
    %2751 = vmatpush.msra.mxu0 %v2709
    %2752 = vmatpush.msra.mxu0 %v2705
    %2753 = vmatpush.msra.mxu0 %v2701
    %2754 = vmatpush.msra.mxu0 %v2697
    %2755 = vmatpush.msra.mxu0 %v2693
    %2756 = vmatpush.msra.mxu0 %v2689
    %2757 = vmatpush.msra.mxu0 %v2685
    %2758 = vmatpush.msra.mxu0 %v2681
    %2759 = vmatpush.msra.mxu0 %v2677
    %2760 = vmatpush.msra.mxu0 %v2673
    %2761 = vmatpush.msra.mxu0 %v2669
    %2762 = vmatpush.msra.mxu0 %v2665
    %2763 = vmatpush.msra.mxu0 %v2661
    %2764 = vmatpush.msra.mxu0 %v2657
    %2765 = vmatpush.msra.mxu0 %v2653
    %2766 = vmatpush.msra.mxu0 %v2649
    %2767 = vmatmul.f32.gmra.mxu0 %v2580
    %v2768 = vpop.f32.mrf.mxu0
    %v2769 = vadd.f32 0.0, %v2768
    %2770 = vdwg.mxu0
    %2771 = vmatpush.msra.mxu0 %v2710
    %2772 = vmatpush.msra.mxu0 %v2706
    %2773 = vmatpush.msra.mxu0 %v2702
    %2774 = vmatpush.msra.mxu0 %v2698
    %2775 = vmatpush.msra.mxu0 %v2694
    %2776 = vmatpush.msra.mxu0 %v2690
    %2777 = vmatpush.msra.mxu0 %v2686
    %2778 = vmatpush.msra.mxu0 %v2682
    %2779 = vmatpush.msra.mxu0 %v2678
    %2780 = vmatpush.msra.mxu0 %v2674
    %2781 = vmatpush.msra.mxu0 %v2670
    %2782 = vmatpush.msra.mxu0 %v2666
    %2783 = vmatpush.msra.mxu0 %v2662
    %2784 = vmatpush.msra.mxu0 %v2658
    %2785 = vmatpush.msra.mxu0 %v2654
    %2786 = vmatpush.msra.mxu0 %v2650
    %2787 = vmatmul.f32.gmra.mxu0 %v2580
    %v2788 = vpop.f32.mrf.mxu0
    %v2789 = vadd.f32 0.0, %v2788
    %2790 = vdwg.mxu0
    %2791 = vmatpush.msra.mxu0 %v2643
    %2792 = vmatpush.msra.mxu0 %v2639
    %2793 = vmatpush.msra.mxu0 %v2635
    %2794 = vmatpush.msra.mxu0 %v2631
    %2795 = vmatpush.msra.mxu0 %v2627
    %2796 = vmatpush.msra.mxu0 %v2623
    %2797 = vmatpush.msra.mxu0 %v2619
    %2798 = vmatpush.msra.mxu0 %v2615
    %2799 = vmatpush.msra.mxu0 %v2611
    %2800 = vmatpush.msra.mxu0 %v2607
    %2801 = vmatpush.msra.mxu0 %v2603
    %2802 = vmatpush.msra.mxu0 %v2599
    %2803 = vmatpush.msra.mxu0 %v2595
    %2804 = vmatpush.msra.mxu0 %v2591
    %2805 = vmatpush.msra.mxu0 %v2587
    %2806 = vmatpush.msra.mxu0 %v2583
    %2807 = vmatmul.f32.gmra.mxu0 %v2582
    %v2808 = vpop.f32.mrf.mxu0
    %v2809 = vadd.f32 %v2729, %v2808
    %2810 = vdwg.mxu0
    %2811 = vmatpush.msra.mxu0 %v2644
    %2812 = vmatpush.msra.mxu0 %v2640
    %2813 = vmatpush.msra.mxu0 %v2636
    %2814 = vmatpush.msra.mxu0 %v2632
    %2815 = vmatpush.msra.mxu0 %v2628
    %2816 = vmatpush.msra.mxu0 %v2624
    %2817 = vmatpush.msra.mxu0 %v2620
    %2818 = vmatpush.msra.mxu0 %v2616
    %2819 = vmatpush.msra.mxu0 %v2612
    %2820 = vmatpush.msra.mxu0 %v2608
    %2821 = vmatpush.msra.mxu0 %v2604
    %2822 = vmatpush.msra.mxu0 %v2600
    %2823 = vmatpush.msra.mxu0 %v2596
    %2824 = vmatpush.msra.mxu0 %v2592
    %2825 = vmatpush.msra.mxu0 %v2588
    %2826 = vmatpush.msra.mxu0 %v2584
    %2827 = vmatmul.f32.gmra.mxu0 %v2582
    %v2828 = vpop.f32.mrf.mxu0
    %v2829 = vadd.f32 %v2749, %v2828
    %2830 = vdwg.mxu0
    %2831 = vmatpush.msra.mxu0 %v2645
    %2832 = vmatpush.msra.mxu0 %v2641
    %2833 = vmatpush.msra.mxu0 %v2637
    %2834 = vmatpush.msra.mxu0 %v2633
    %2835 = vmatpush.msra.mxu0 %v2629
    %2836 = vmatpush.msra.mxu0 %v2625
    %2837 = vmatpush.msra.mxu0 %v2621
    %2838 = vmatpush.msra.mxu0 %v2617
    %2839 = vmatpush.msra.mxu0 %v2613
    %2840 = vmatpush.msra.mxu0 %v2609
    %2841 = vmatpush.msra.mxu0 %v2605
    %2842 = vmatpush.msra.mxu0 %v2601
    %2843 = vmatpush.msra.mxu0 %v2597
    %2844 = vmatpush.msra.mxu0 %v2593
    %2845 = vmatpush.msra.mxu0 %v2589
    %2846 = vmatpush.msra.mxu0 %v2585
    %2847 = vmatmul.f32.gmra.mxu0 %v2582
    %v2848 = vpop.f32.mrf.mxu0
    %v2849 = vadd.f32 %v2769, %v2848
    %2850 = vdwg.mxu0
    %2851 = vmatpush.msra.mxu0 %v2646
    %2852 = vmatpush.msra.mxu0 %v2642
    %2853 = vmatpush.msra.mxu0 %v2638
    %2854 = vmatpush.msra.mxu0 %v2634
    %2855 = vmatpush.msra.mxu0 %v2630
    %2856 = vmatpush.msra.mxu0 %v2626
    %2857 = vmatpush.msra.mxu0 %v2622
    %2858 = vmatpush.msra.mxu0 %v2618
    %2859 = vmatpush.msra.mxu0 %v2614
    %2860 = vmatpush.msra.mxu0 %v2610
    %2861 = vmatpush.msra.mxu0 %v2606
    %2862 = vmatpush.msra.mxu0 %v2602
    %2863 = vmatpush.msra.mxu0 %v2598
    %2864 = vmatpush.msra.mxu0 %v2594
    %2865 = vmatpush.msra.mxu0 %v2590
    %2866 = vmatpush.msra.mxu0 %v2586
    %2867 = vmatmul.f32.gmra.mxu0 %v2582
    %v2868 = vpop.f32.mrf.mxu0
    %v2869 = vadd.f32 %v2789, %v2868
    %2870 = vdwg.mxu0
    %v2871 = vld [vmem:[%s13] sm:$0xf]
    %v2873 = vperm.slane %v2871, 0
    %v2874 = vperm.slane %v2871, 1
    %v2875 = vperm.slane %v2871, 2
    %v2876 = vperm.slane %v2871, 3
    %v2881 = vadd.f32 %v2809, %v2873
    %v2882 = vadd.f32 %v2829, %v2874
    %v2883 = vadd.f32 %v2849, %v2875
    %v2884 = vadd.f32 %v2869, %v2876
    %v2885 = vmax.f32 %v2881, 0.0
    %v2886 = vmax.f32 %v2882, 0.0
    %v2887 = vmax.f32 %v2883, 0.0
    %v2888 = vmax.f32 %v2884, 0.0
    %v2889 = vld [vmem:[#allocation10] sm:$0xff]
    %v2890 = vld [vmem:[#allocation10 + $0x8] sm:$0xff]
    %v2891 = vld [vmem:[#allocation10 + $0x10] sm:$0xff]
    %v2892 = vld [vmem:[#allocation10 + $0x18] sm:$0xff]
    %v2893 = vld [vmem:[#allocation10 + $0x20] sm:$0xff]
    %v2894 = vld [vmem:[#allocation10 + $0x28] sm:$0xff]
    %v2895 = vld [vmem:[#allocation10 + $0x30] sm:$0xff]
    %v2896 = vld [vmem:[#allocation10 + $0x38] sm:$0xff]
    %v2897 = vld [vmem:[#allocation10 + $0x40] sm:$0xff]
    %v2898 = vld [vmem:[#allocation10 + $0x48] sm:$0xff]
    %v2899 = vld [vmem:[#allocation10 + $0x50] sm:$0xff]
    %v2900 = vld [vmem:[#allocation10 + $0x58] sm:$0xff]
    %v2901 = vld [vmem:[#allocation10 + $0x60] sm:$0xff]
    %v2902 = vld [vmem:[#allocation10 + $0x68] sm:$0xff]
    %v2903 = vld [vmem:[#allocation10 + $0x70] sm:$0xff]
    %v2904 = vld [vmem:[#allocation10 + $0x78] sm:$0xff]
    %v2905 = vld [vmem:[#allocation10 + $0x80] sm:$0xff]
    %v2906 = vld [vmem:[#allocation10 + $0x88] sm:$0xff]
    %v2907 = vld [vmem:[#allocation10 + $0x90] sm:$0xff]
    %v2908 = vld [vmem:[#allocation10 + $0x98] sm:$0xff]
    %v2909 = vld [vmem:[#allocation10 + $0xa0] sm:$0xff]
    %v2910 = vld [vmem:[#allocation10 + $0xa8] sm:$0xff]
    %v2911 = vld [vmem:[#allocation10 + $0xb0] sm:$0xff]
    %v2912 = vld [vmem:[#allocation10 + $0xb8] sm:$0xff]
    %v2913 = vld [vmem:[#allocation10 + $0xc0] sm:$0xff]
    %v2914 = vld [vmem:[#allocation10 + $0xc8] sm:$0xff]
    %v2915 = vld [vmem:[#allocation10 + $0xd0] sm:$0xff]
    %v2916 = vld [vmem:[#allocation10 + $0xd8] sm:$0xff]
    %v2917 = vld [vmem:[#allocation10 + $0xe0] sm:$0xff]
    %v2918 = vld [vmem:[#allocation10 + $0xe8] sm:$0xff]
    %v2919 = vld [vmem:[#allocation10 + $0xf0] sm:$0xff]
    %v2920 = vld [vmem:[#allocation10 + $0xf8] sm:$0xff]
    %v2921 = vld [vmem:[#allocation10 + $0x100] sm:$0xff]
    %v2922 = vld [vmem:[#allocation10 + $0x108] sm:$0xff]
    %v2923 = vld [vmem:[#allocation10 + $0x110] sm:$0xff]
    %v2924 = vld [vmem:[#allocation10 + $0x118] sm:$0xff]
    %v2925 = vld [vmem:[#allocation10 + $0x120] sm:$0xff]
    %v2926 = vld [vmem:[#allocation10 + $0x128] sm:$0xff]
    %v2927 = vld [vmem:[#allocation10 + $0x130] sm:$0xff]
    %v2928 = vld [vmem:[#allocation10 + $0x138] sm:$0xff]
    %v2929 = vld [vmem:[#allocation10 + $0x140] sm:$0xff]
    %v2930 = vld [vmem:[#allocation10 + $0x148] sm:$0xff]
    %v2931 = vld [vmem:[#allocation10 + $0x150] sm:$0xff]
    %v2932 = vld [vmem:[#allocation10 + $0x158] sm:$0xff]
    %v2933 = vld [vmem:[#allocation10 + $0x160] sm:$0xff]
    %v2934 = vld [vmem:[#allocation10 + $0x168] sm:$0xff]
    %v2935 = vld [vmem:[#allocation10 + $0x170] sm:$0xff]
    %v2936 = vld [vmem:[#allocation10 + $0x178] sm:$0xff]
    %v2937 = vld [vmem:[#allocation10 + $0x180] sm:$0xff]
    %v2938 = vld [vmem:[#allocation10 + $0x188] sm:$0xff]
    %v2939 = vld [vmem:[#allocation10 + $0x190] sm:$0xff]
    %v2940 = vld [vmem:[#allocation10 + $0x198] sm:$0xff]
    %v2941 = vld [vmem:[#allocation10 + $0x1a0] sm:$0xff]
    %v2942 = vld [vmem:[#allocation10 + $0x1a8] sm:$0xff]
    %v2943 = vld [vmem:[#allocation10 + $0x1b0] sm:$0xff]
    %v2944 = vld [vmem:[#allocation10 + $0x1b8] sm:$0xff]
    %v2945 = vld [vmem:[#allocation10 + $0x1c0] sm:$0xff]
    %v2946 = vld [vmem:[#allocation10 + $0x1c8] sm:$0xff]
    %v2947 = vld [vmem:[#allocation10 + $0x1d0] sm:$0xff]
    %v2948 = vld [vmem:[#allocation10 + $0x1d8] sm:$0xff]
    %v2949 = vld [vmem:[#allocation10 + $0x1e0] sm:$0xff]
    %v2950 = vld [vmem:[#allocation10 + $0x1e8] sm:$0xff]
    %v2951 = vld [vmem:[#allocation10 + $0x1f0] sm:$0xff]
    %v2952 = vld [vmem:[#allocation10 + $0x1f8] sm:$0xff]
    %v2953 = vld [vmem:[%s15] sm:$0x1]
    %v2955 = vperm.slane %v2953, 0
    %2957 = vmatpush.msra.mxu0 %v2904
    %2958 = vmatpush.msra.mxu0 %v2903
    %2959 = vmatpush.msra.mxu0 %v2902
    %2960 = vmatpush.msra.mxu0 %v2901
    %2961 = vmatpush.msra.mxu0 %v2900
    %2962 = vmatpush.msra.mxu0 %v2899
    %2963 = vmatpush.msra.mxu0 %v2898
    %2964 = vmatpush.msra.mxu0 %v2897
    %2965 = vmatpush.msra.mxu0 %v2896
    %2966 = vmatpush.msra.mxu0 %v2895
    %2967 = vmatpush.msra.mxu0 %v2894
    %2968 = vmatpush.msra.mxu0 %v2893
    %2969 = vmatpush.msra.mxu0 %v2892
    %2970 = vmatpush.msra.mxu0 %v2891
    %2971 = vmatpush.msra.mxu0 %v2890
    %2972 = vmatpush.msra.mxu0 %v2889
    %2973 = vmatmul.f32.gmra.mxu0 %v2885
    %v2974 = vpop.f32.mrf.mxu0
    %v2975 = vadd.f32 %v2955, %v2974
    %2976 = vdwg.mxu0
    %2977 = vmatpush.msra.mxu0 %v2920
    %2978 = vmatpush.msra.mxu0 %v2919
    %2979 = vmatpush.msra.mxu0 %v2918
    %2980 = vmatpush.msra.mxu0 %v2917
    %2981 = vmatpush.msra.mxu0 %v2916
    %2982 = vmatpush.msra.mxu0 %v2915
    %2983 = vmatpush.msra.mxu0 %v2914
    %2984 = vmatpush.msra.mxu0 %v2913
    %2985 = vmatpush.msra.mxu0 %v2912
    %2986 = vmatpush.msra.mxu0 %v2911
    %2987 = vmatpush.msra.mxu0 %v2910
    %2988 = vmatpush.msra.mxu0 %v2909
    %2989 = vmatpush.msra.mxu0 %v2908
    %2990 = vmatpush.msra.mxu0 %v2907
    %2991 = vmatpush.msra.mxu0 %v2906
    %2992 = vmatpush.msra.mxu0 %v2905
    %2993 = vmatmul.f32.gmra.mxu0 %v2886
    %v2994 = vpop.f32.mrf.mxu0
    %v2995 = vadd.f32 %v2975, %v2994
    %2996 = vdwg.mxu0
    %2997 = vmatpush.msra.mxu0 %v2936
    %2998 = vmatpush.msra.mxu0 %v2935
    %2999 = vmatpush.msra.mxu0 %v2934
    %3000 = vmatpush.msra.mxu0 %v2933
    %3001 = vmatpush.msra.mxu0 %v2932
    %3002 = vmatpush.msra.mxu0 %v2931
    %3003 = vmatpush.msra.mxu0 %v2930
    %3004 = vmatpush.msra.mxu0 %v2929
    %3005 = vmatpush.msra.mxu0 %v2928
    %3006 = vmatpush.msra.mxu0 %v2927
    %3007 = vmatpush.msra.mxu0 %v2926
    %3008 = vmatpush.msra.mxu0 %v2925
    %3009 = vmatpush.msra.mxu0 %v2924
    %3010 = vmatpush.msra.mxu0 %v2923
    %3011 = vmatpush.msra.mxu0 %v2922
    %3012 = vmatpush.msra.mxu0 %v2921
    %3013 = vmatmul.f32.gmra.mxu0 %v2887
    %v3014 = vpop.f32.mrf.mxu0
    %v3015 = vadd.f32 %v2995, %v3014
    %3016 = vdwg.mxu0
    %3017 = vmatpush.msra.mxu0 %v2952
    %3018 = vmatpush.msra.mxu0 %v2951
    %3019 = vmatpush.msra.mxu0 %v2950
    %3020 = vmatpush.msra.mxu0 %v2949
    %3021 = vmatpush.msra.mxu0 %v2948
    %3022 = vmatpush.msra.mxu0 %v2947
    %3023 = vmatpush.msra.mxu0 %v2946
    %3024 = vmatpush.msra.mxu0 %v2945
    %3025 = vmatpush.msra.mxu0 %v2944
    %3026 = vmatpush.msra.mxu0 %v2943
    %3027 = vmatpush.msra.mxu0 %v2942
    %3028 = vmatpush.msra.mxu0 %v2941
    %3029 = vmatpush.msra.mxu0 %v2940
    %3030 = vmatpush.msra.mxu0 %v2939
    %3031 = vmatpush.msra.mxu0 %v2938
    %3032 = vmatpush.msra.mxu0 %v2937
    %3033 = vmatmul.f32.gmra.mxu0 %v2888
    %v3034 = vpop.f32.mrf.mxu0
    %v3035 = vadd.f32 %v3015, %v3034
    %3036 = vdwg.mxu0
    %v3037 = vmax.f32 %v3035, 0.0
    %v3038 = vld [vmem:[%s3] sm:$0x3]
    %v3039 = vld [vmem:[#allocation11] sm:$0xff]
    %v3040 = vld [vmem:[#allocation11 + $0x8] sm:$0xff]
    %v3041 = vld [vmem:[#allocation11 + $0x10] sm:$0xff]
    %v3042 = vld [vmem:[#allocation11 + $0x18] sm:$0xff]
    %v3043 = vld [vmem:[#allocation11 + $0x20] sm:$0xff]
    %v3044 = vld [vmem:[#allocation11 + $0x28] sm:$0xff]
    %v3045 = vld [vmem:[#allocation11 + $0x30] sm:$0xff]
    %v3046 = vld [vmem:[#allocation11 + $0x38] sm:$0xff]
    %v3047 = vld [vmem:[#allocation11 + $0x40] sm:$0xff]
    %v3048 = vld [vmem:[#allocation11 + $0x48] sm:$0xff]
    %v3049 = vld [vmem:[#allocation11 + $0x50] sm:$0xff]
    %v3050 = vld [vmem:[#allocation11 + $0x58] sm:$0xff]
    %v3051 = vld [vmem:[#allocation11 + $0x60] sm:$0xff]
    %v3052 = vld [vmem:[#allocation11 + $0x68] sm:$0xff]
    %v3053 = vld [vmem:[#allocation11 + $0x70] sm:$0xff]
    %v3054 = vld [vmem:[#allocation11 + $0x78] sm:$0xff]
    %v3055 = vld [vmem:[#allocation11 + $0x80] sm:$0xff]
    %v3056 = vld [vmem:[#allocation11 + $0x88] sm:$0xff]
    %v3057 = vld [vmem:[#allocation11 + $0x90] sm:$0xff]
    %v3058 = vld [vmem:[#allocation11 + $0x98] sm:$0xff]
    %v3059 = vld [vmem:[#allocation11 + $0xa0] sm:$0xff]
    %v3060 = vld [vmem:[#allocation11 + $0xa8] sm:$0xff]
    %v3061 = vld [vmem:[#allocation11 + $0xb0] sm:$0xff]
    %v3062 = vld [vmem:[#allocation11 + $0xb8] sm:$0xff]
    %v3063 = vld [vmem:[#allocation11 + $0xc0] sm:$0xff]
    %v3064 = vld [vmem:[#allocation11 + $0xc8] sm:$0xff]
    %v3065 = vld [vmem:[#allocation11 + $0xd0] sm:$0xff]
    %v3066 = vld [vmem:[#allocation11 + $0xd8] sm:$0xff]
    %v3067 = vld [vmem:[#allocation11 + $0xe0] sm:$0xff]
    %v3068 = vld [vmem:[#allocation11 + $0xe8] sm:$0xff]
    %v3069 = vld [vmem:[#allocation11 + $0xf0] sm:$0xff]
    %v3070 = vld [vmem:[#allocation11 + $0xf8] sm:$0xff]
    %v3071 = vld [vmem:[#allocation11 + $0x100] sm:$0xff]
    %v3072 = vld [vmem:[#allocation11 + $0x108] sm:$0xff]
    %v3073 = vld [vmem:[#allocation11 + $0x110] sm:$0xff]
    %v3074 = vld [vmem:[#allocation11 + $0x118] sm:$0xff]
    %v3075 = vld [vmem:[#allocation11 + $0x120] sm:$0xff]
    %v3076 = vld [vmem:[#allocation11 + $0x128] sm:$0xff]
    %v3077 = vld [vmem:[#allocation11 + $0x130] sm:$0xff]
    %v3078 = vld [vmem:[#allocation11 + $0x138] sm:$0xff]
    %v3079 = vld [vmem:[#allocation11 + $0x140] sm:$0xff]
    %v3080 = vld [vmem:[#allocation11 + $0x148] sm:$0xff]
    %v3081 = vld [vmem:[#allocation11 + $0x150] sm:$0xff]
    %v3082 = vld [vmem:[#allocation11 + $0x158] sm:$0xff]
    %v3083 = vld [vmem:[#allocation11 + $0x160] sm:$0xff]
    %v3084 = vld [vmem:[#allocation11 + $0x168] sm:$0xff]
    %v3085 = vld [vmem:[#allocation11 + $0x170] sm:$0xff]
    %v3086 = vld [vmem:[#allocation11 + $0x178] sm:$0xff]
    %v3087 = vld [vmem:[#allocation11 + $0x180] sm:$0xff]
    %v3088 = vld [vmem:[#allocation11 + $0x188] sm:$0xff]
    %v3089 = vld [vmem:[#allocation11 + $0x190] sm:$0xff]
    %v3090 = vld [vmem:[#allocation11 + $0x198] sm:$0xff]
    %v3091 = vld [vmem:[#allocation11 + $0x1a0] sm:$0xff]
    %v3092 = vld [vmem:[#allocation11 + $0x1a8] sm:$0xff]
    %v3093 = vld [vmem:[#allocation11 + $0x1b0] sm:$0xff]
    %v3094 = vld [vmem:[#allocation11 + $0x1b8] sm:$0xff]
    %v3095 = vld [vmem:[#allocation11 + $0x1c0] sm:$0xff]
    %v3096 = vld [vmem:[#allocation11 + $0x1c8] sm:$0xff]
    %v3097 = vld [vmem:[#allocation11 + $0x1d0] sm:$0xff]
    %v3098 = vld [vmem:[#allocation11 + $0x1d8] sm:$0xff]
    %v3099 = vld [vmem:[#allocation11 + $0x1e0] sm:$0xff]
    %v3100 = vld [vmem:[#allocation11 + $0x1e8] sm:$0xff]
    %v3101 = vld [vmem:[#allocation11 + $0x1f0] sm:$0xff]
    %v3102 = vld [vmem:[#allocation11 + $0x1f8] sm:$0xff]
    %v3103 = vld [vmem:[%s17] sm:$0xf]
    %v3105 = vperm.slane %v3103, 0
    %v3106 = vperm.slane %v3103, 1
    %v3107 = vperm.slane %v3103, 2
    %v3108 = vperm.slane %v3103, 3
    %3113 = vmatpush.msra.mxu0 %v3099
    %3114 = vmatpush.msra.mxu0 %v3095
    %3115 = vmatpush.msra.mxu0 %v3091
    %3116 = vmatpush.msra.mxu0 %v3087
    %3117 = vmatpush.msra.mxu0 %v3083
    %3118 = vmatpush.msra.mxu0 %v3079
    %3119 = vmatpush.msra.mxu0 %v3075
    %3120 = vmatpush.msra.mxu0 %v3071
    %3121 = vmatpush.msra.mxu0 %v3067
    %3122 = vmatpush.msra.mxu0 %v3063
    %3123 = vmatpush.msra.mxu0 %v3059
    %3124 = vmatpush.msra.mxu0 %v3055
    %3125 = vmatpush.msra.mxu0 %v3051
    %3126 = vmatpush.msra.mxu0 %v3047
    %3127 = vmatpush.msra.mxu0 %v3043
    %3128 = vmatpush.msra.mxu0 %v3039
    %3129 = vmatmul.f32.gmra.mxu0 %v3038
    %v3130 = vpop.f32.mrf.mxu0
    %v3131 = vadd.f32 %v3105, %v3130
    %3132 = vdwg.mxu0
    %3133 = vmatpush.msra.mxu0 %v3100
    %3134 = vmatpush.msra.mxu0 %v3096
    %3135 = vmatpush.msra.mxu0 %v3092
    %3136 = vmatpush.msra.mxu0 %v3088
    %3137 = vmatpush.msra.mxu0 %v3084
    %3138 = vmatpush.msra.mxu0 %v3080
    %3139 = vmatpush.msra.mxu0 %v3076
    %3140 = vmatpush.msra.mxu0 %v3072
    %3141 = vmatpush.msra.mxu0 %v3068
    %3142 = vmatpush.msra.mxu0 %v3064
    %3143 = vmatpush.msra.mxu0 %v3060
    %3144 = vmatpush.msra.mxu0 %v3056
    %3145 = vmatpush.msra.mxu0 %v3052
    %3146 = vmatpush.msra.mxu0 %v3048
    %3147 = vmatpush.msra.mxu0 %v3044
    %3148 = vmatpush.msra.mxu0 %v3040
    %3149 = vmatmul.f32.gmra.mxu0 %v3038
    %v3150 = vpop.f32.mrf.mxu0
    %v3151 = vadd.f32 %v3106, %v3150
    %3152 = vdwg.mxu0
    %3153 = vmatpush.msra.mxu0 %v3101
    %3154 = vmatpush.msra.mxu0 %v3097
    %3155 = vmatpush.msra.mxu0 %v3093
    %3156 = vmatpush.msra.mxu0 %v3089
    %3157 = vmatpush.msra.mxu0 %v3085
    %3158 = vmatpush.msra.mxu0 %v3081
    %3159 = vmatpush.msra.mxu0 %v3077
    %3160 = vmatpush.msra.mxu0 %v3073
    %3161 = vmatpush.msra.mxu0 %v3069
    %3162 = vmatpush.msra.mxu0 %v3065
    %3163 = vmatpush.msra.mxu0 %v3061
    %3164 = vmatpush.msra.mxu0 %v3057
    %3165 = vmatpush.msra.mxu0 %v3053
    %3166 = vmatpush.msra.mxu0 %v3049
    %3167 = vmatpush.msra.mxu0 %v3045
    %3168 = vmatpush.msra.mxu0 %v3041
    %3169 = vmatmul.f32.gmra.mxu0 %v3038
    %v3170 = vpop.f32.mrf.mxu0
    %v3171 = vadd.f32 %v3107, %v3170
    %3172 = vdwg.mxu0
    %3173 = vmatpush.msra.mxu0 %v3102
    %3174 = vmatpush.msra.mxu0 %v3098
    %3175 = vmatpush.msra.mxu0 %v3094
    %3176 = vmatpush.msra.mxu0 %v3090
    %3177 = vmatpush.msra.mxu0 %v3086
    %3178 = vmatpush.msra.mxu0 %v3082
    %3179 = vmatpush.msra.mxu0 %v3078
    %3180 = vmatpush.msra.mxu0 %v3074
    %3181 = vmatpush.msra.mxu0 %v3070
    %3182 = vmatpush.msra.mxu0 %v3066
    %3183 = vmatpush.msra.mxu0 %v3062
    %3184 = vmatpush.msra.mxu0 %v3058
    %3185 = vmatpush.msra.mxu0 %v3054
    %3186 = vmatpush.msra.mxu0 %v3050
    %3187 = vmatpush.msra.mxu0 %v3046
    %3188 = vmatpush.msra.mxu0 %v3042
    %3189 = vmatmul.f32.gmra.mxu0 %v3038
    %v3190 = vpop.f32.mrf.mxu0
    %v3191 = vadd.f32 %v3108, %v3190
    %3192 = vdwg.mxu0
    %v3193 = vmax.f32 %v3131, 0.0
    %v3194 = vmax.f32 %v3151, 0.0
    %v3195 = vmax.f32 %v3171, 0.0
    %v3196 = vmax.f32 %v3191, 0.0
    %v3197 = vld [vmem:[#allocation13] sm:$0xff]
    %v3198 = vld [vmem:[#allocation13 + $0x8] sm:$0xff]
    %v3199 = vld [vmem:[#allocation13 + $0x10] sm:$0xff]
    %v3200 = vld [vmem:[#allocation13 + $0x18] sm:$0xff]
    %v3201 = vld [vmem:[#allocation13 + $0x20] sm:$0xff]
    %v3202 = vld [vmem:[#allocation13 + $0x28] sm:$0xff]
    %v3203 = vld [vmem:[#allocation13 + $0x30] sm:$0xff]
    %v3204 = vld [vmem:[#allocation13 + $0x38] sm:$0xff]
    %v3205 = vld [vmem:[#allocation13 + $0x40] sm:$0xff]
    %v3206 = vld [vmem:[#allocation13 + $0x48] sm:$0xff]
    %v3207 = vld [vmem:[#allocation13 + $0x50] sm:$0xff]
    %v3208 = vld [vmem:[#allocation13 + $0x58] sm:$0xff]
    %v3209 = vld [vmem:[#allocation13 + $0x60] sm:$0xff]
    %v3210 = vld [vmem:[#allocation13 + $0x68] sm:$0xff]
    %v3211 = vld [vmem:[#allocation13 + $0x70] sm:$0xff]
    %v3212 = vld [vmem:[#allocation13 + $0x78] sm:$0xff]
    %v3213 = vld [vmem:[#allocation13 + $0x80] sm:$0xff]
    %v3214 = vld [vmem:[#allocation13 + $0x88] sm:$0xff]
    %v3215 = vld [vmem:[#allocation13 + $0x90] sm:$0xff]
    %v3216 = vld [vmem:[#allocation13 + $0x98] sm:$0xff]
    %v3217 = vld [vmem:[#allocation13 + $0xa0] sm:$0xff]
    %v3218 = vld [vmem:[#allocation13 + $0xa8] sm:$0xff]
    %v3219 = vld [vmem:[#allocation13 + $0xb0] sm:$0xff]
    %v3220 = vld [vmem:[#allocation13 + $0xb8] sm:$0xff]
    %v3221 = vld [vmem:[#allocation13 + $0xc0] sm:$0xff]
    %v3222 = vld [vmem:[#allocation13 + $0xc8] sm:$0xff]
    %v3223 = vld [vmem:[#allocation13 + $0xd0] sm:$0xff]
    %v3224 = vld [vmem:[#allocation13 + $0xd8] sm:$0xff]
    %v3225 = vld [vmem:[#allocation13 + $0xe0] sm:$0xff]
    %v3226 = vld [vmem:[#allocation13 + $0xe8] sm:$0xff]
    %v3227 = vld [vmem:[#allocation13 + $0xf0] sm:$0xff]
    %v3228 = vld [vmem:[#allocation13 + $0xf8] sm:$0xff]
    %v3229 = vld [vmem:[#allocation13 + $0x100] sm:$0xff]
    %v3230 = vld [vmem:[#allocation13 + $0x108] sm:$0xff]
    %v3231 = vld [vmem:[#allocation13 + $0x110] sm:$0xff]
    %v3232 = vld [vmem:[#allocation13 + $0x118] sm:$0xff]
    %v3233 = vld [vmem:[#allocation13 + $0x120] sm:$0xff]
    %v3234 = vld [vmem:[#allocation13 + $0x128] sm:$0xff]
    %v3235 = vld [vmem:[#allocation13 + $0x130] sm:$0xff]
    %v3236 = vld [vmem:[#allocation13 + $0x138] sm:$0xff]
    %v3237 = vld [vmem:[#allocation13 + $0x140] sm:$0xff]
    %v3238 = vld [vmem:[#allocation13 + $0x148] sm:$0xff]
    %v3239 = vld [vmem:[#allocation13 + $0x150] sm:$0xff]
    %v3240 = vld [vmem:[#allocation13 + $0x158] sm:$0xff]
    %v3241 = vld [vmem:[#allocation13 + $0x160] sm:$0xff]
    %v3242 = vld [vmem:[#allocation13 + $0x168] sm:$0xff]
    %v3243 = vld [vmem:[#allocation13 + $0x170] sm:$0xff]
    %v3244 = vld [vmem:[#allocation13 + $0x178] sm:$0xff]
    %v3245 = vld [vmem:[#allocation13 + $0x180] sm:$0xff]
    %v3246 = vld [vmem:[#allocation13 + $0x188] sm:$0xff]
    %v3247 = vld [vmem:[#allocation13 + $0x190] sm:$0xff]
    %v3248 = vld [vmem:[#allocation13 + $0x198] sm:$0xff]
    %v3249 = vld [vmem:[#allocation13 + $0x1a0] sm:$0xff]
    %v3250 = vld [vmem:[#allocation13 + $0x1a8] sm:$0xff]
    %v3251 = vld [vmem:[#allocation13 + $0x1b0] sm:$0xff]
    %v3252 = vld [vmem:[#allocation13 + $0x1b8] sm:$0xff]
    %v3253 = vld [vmem:[#allocation13 + $0x1c0] sm:$0xff]
    %v3254 = vld [vmem:[#allocation13 + $0x1c8] sm:$0xff]
    %v3255 = vld [vmem:[#allocation13 + $0x1d0] sm:$0xff]
    %v3256 = vld [vmem:[#allocation13 + $0x1d8] sm:$0xff]
    %v3257 = vld [vmem:[#allocation13 + $0x1e0] sm:$0xff]
    %v3258 = vld [vmem:[#allocation13 + $0x1e8] sm:$0xff]
    %v3259 = vld [vmem:[#allocation13 + $0x1f0] sm:$0xff]
    %v3260 = vld [vmem:[#allocation13 + $0x1f8] sm:$0xff]
    %v3261 = vld [vmem:[%s19] sm:$0x1]
    %v3263 = vperm.slane %v3261, 0
    %3265 = vmatpush.msra.mxu0 %v3212
    %3266 = vmatpush.msra.mxu0 %v3211
    %3267 = vmatpush.msra.mxu0 %v3210
    %3268 = vmatpush.msra.mxu0 %v3209
    %3269 = vmatpush.msra.mxu0 %v3208
    %3270 = vmatpush.msra.mxu0 %v3207
    %3271 = vmatpush.msra.mxu0 %v3206
    %3272 = vmatpush.msra.mxu0 %v3205
    %3273 = vmatpush.msra.mxu0 %v3204
    %3274 = vmatpush.msra.mxu0 %v3203
    %3275 = vmatpush.msra.mxu0 %v3202
    %3276 = vmatpush.msra.mxu0 %v3201
    %3277 = vmatpush.msra.mxu0 %v3200
    %3278 = vmatpush.msra.mxu0 %v3199
    %3279 = vmatpush.msra.mxu0 %v3198
    %3280 = vmatpush.msra.mxu0 %v3197
    %3281 = vmatmul.f32.gmra.mxu0 %v3193
    %v3282 = vpop.f32.mrf.mxu0
    %v3283 = vadd.f32 %v3263, %v3282
    %3284 = vdwg.mxu0
    %3285 = vmatpush.msra.mxu0 %v3228
    %3286 = vmatpush.msra.mxu0 %v3227
    %3287 = vmatpush.msra.mxu0 %v3226
    %3288 = vmatpush.msra.mxu0 %v3225
    %3289 = vmatpush.msra.mxu0 %v3224
    %3290 = vmatpush.msra.mxu0 %v3223
    %3291 = vmatpush.msra.mxu0 %v3222
    %3292 = vmatpush.msra.mxu0 %v3221
    %3293 = vmatpush.msra.mxu0 %v3220
    %3294 = vmatpush.msra.mxu0 %v3219
    %3295 = vmatpush.msra.mxu0 %v3218
    %3296 = vmatpush.msra.mxu0 %v3217
    %3297 = vmatpush.msra.mxu0 %v3216
    %3298 = vmatpush.msra.mxu0 %v3215
    %3299 = vmatpush.msra.mxu0 %v3214
    %3300 = vmatpush.msra.mxu0 %v3213
    %3301 = vmatmul.f32.gmra.mxu0 %v3194
    %v3302 = vpop.f32.mrf.mxu0
    %v3303 = vadd.f32 %v3283, %v3302
    %3304 = vdwg.mxu0
    %3305 = vmatpush.msra.mxu0 %v3244
    %3306 = vmatpush.msra.mxu0 %v3243
    %3307 = vmatpush.msra.mxu0 %v3242
    %3308 = vmatpush.msra.mxu0 %v3241
    %3309 = vmatpush.msra.mxu0 %v3240
    %3310 = vmatpush.msra.mxu0 %v3239
    %3311 = vmatpush.msra.mxu0 %v3238
    %3312 = vmatpush.msra.mxu0 %v3237
    %3313 = vmatpush.msra.mxu0 %v3236
    %3314 = vmatpush.msra.mxu0 %v3235
    %3315 = vmatpush.msra.mxu0 %v3234
    %3316 = vmatpush.msra.mxu0 %v3233
    %3317 = vmatpush.msra.mxu0 %v3232
    %3318 = vmatpush.msra.mxu0 %v3231
    %3319 = vmatpush.msra.mxu0 %v3230
    %3320 = vmatpush.msra.mxu0 %v3229
    %3321 = vmatmul.f32.gmra.mxu0 %v3195
    %v3322 = vpop.f32.mrf.mxu0
    %v3323 = vadd.f32 %v3303, %v3322
    %3324 = vdwg.mxu0
    %3325 = vmatpush.msra.mxu0 %v3260
    %3326 = vmatpush.msra.mxu0 %v3259
    %3327 = vmatpush.msra.mxu0 %v3258
    %3328 = vmatpush.msra.mxu0 %v3257
    %3329 = vmatpush.msra.mxu0 %v3256
    %3330 = vmatpush.msra.mxu0 %v3255
    %3331 = vmatpush.msra.mxu0 %v3254
    %3332 = vmatpush.msra.mxu0 %v3253
    %3333 = vmatpush.msra.mxu0 %v3252
    %3334 = vmatpush.msra.mxu0 %v3251
    %3335 = vmatpush.msra.mxu0 %v3250
    %3336 = vmatpush.msra.mxu0 %v3249
    %3337 = vmatpush.msra.mxu0 %v3248
    %3338 = vmatpush.msra.mxu0 %v3247
    %3339 = vmatpush.msra.mxu0 %v3246
    %3340 = vmatpush.msra.mxu0 %v3245
    %3341 = vmatmul.f32.gmra.mxu0 %v3196
    %v3342 = vpop.f32.mrf.mxu0
    %v3343 = vadd.f32 %v3323, %v3342
    %3344 = vdwg.mxu0
    %v3345 = vmax.f32 %v3343, 0.0
    %v3346 = vld [vmem:[#allocation14] sm:$0xff]
    %v3347 = vld [vmem:[#allocation14 + $0x8] sm:$0xff]
    %v3348 = vld [vmem:[#allocation14 + $0x10] sm:$0xff]
    %v3349 = vld [vmem:[#allocation14 + $0x18] sm:$0xff]
    %v3350 = vld [vmem:[#allocation14 + $0x20] sm:$0xff]
    %v3351 = vld [vmem:[#allocation14 + $0x28] sm:$0xff]
    %v3352 = vld [vmem:[#allocation14 + $0x30] sm:$0xff]
    %v3353 = vld [vmem:[#allocation14 + $0x38] sm:$0xff]
    %v3354 = vld [vmem:[#allocation14 + $0x40] sm:$0xff]
    %v3355 = vld [vmem:[#allocation14 + $0x48] sm:$0xff]
    %v3356 = vld [vmem:[#allocation14 + $0x50] sm:$0xff]
    %v3357 = vld [vmem:[#allocation14 + $0x58] sm:$0xff]
    %v3358 = vld [vmem:[#allocation14 + $0x60] sm:$0xff]
    %v3359 = vld [vmem:[#allocation14 + $0x68] sm:$0xff]
    %v3360 = vld [vmem:[#allocation14 + $0x70] sm:$0xff]
    %v3361 = vld [vmem:[#allocation14 + $0x78] sm:$0xff]
    %3362 = vmatpush.msra.mxu0 %v3361
    %3363 = vmatpush.msra.mxu0 %v3360
    %3364 = vmatpush.msra.mxu0 %v3359
    %3365 = vmatpush.msra.mxu0 %v3358
    %3366 = vmatpush.msra.mxu0 %v3357
    %3367 = vmatpush.msra.mxu0 %v3356
    %3368 = vmatpush.msra.mxu0 %v3355
    %3369 = vmatpush.msra.mxu0 %v3354
    %3370 = vmatpush.msra.mxu0 %v3353
    %3371 = vmatpush.msra.mxu0 %v3352
    %3372 = vmatpush.msra.mxu0 %v3351
    %3373 = vmatpush.msra.mxu0 %v3350
    %3374 = vmatpush.msra.mxu0 %v3349
    %3375 = vmatpush.msra.mxu0 %v3348
    %3376 = vmatpush.msra.mxu0 %v3347
    %3377 = vmatpush.msra.mxu0 %v3346
    %3378 = vmatmul.f32.gmra.mxu0 %v3037
    %v3379 = vpop.f32.mrf.mxu0
    %v3380 = vadd.f32 0.0, %v3379
    %3381 = vdwg.mxu0
    %v3382 = vld [vmem:[#allocation16] sm:$0xff]
    %v3383 = vld [vmem:[#allocation16 + $0x8] sm:$0xff]
    %v3384 = vld [vmem:[#allocation16 + $0x10] sm:$0xff]
    %v3385 = vld [vmem:[#allocation16 + $0x18] sm:$0xff]
    %v3386 = vld [vmem:[#allocation16 + $0x20] sm:$0xff]
    %v3387 = vld [vmem:[#allocation16 + $0x28] sm:$0xff]
    %v3388 = vld [vmem:[#allocation16 + $0x30] sm:$0xff]
    %v3389 = vld [vmem:[#allocation16 + $0x38] sm:$0xff]
    %v3390 = vld [vmem:[#allocation16 + $0x40] sm:$0xff]
    %v3391 = vld [vmem:[#allocation16 + $0x48] sm:$0xff]
    %v3392 = vld [vmem:[#allocation16 + $0x50] sm:$0xff]
    %v3393 = vld [vmem:[#allocation16 + $0x58] sm:$0xff]
    %v3394 = vld [vmem:[#allocation16 + $0x60] sm:$0xff]
    %v3395 = vld [vmem:[#allocation16 + $0x68] sm:$0xff]
    %v3396 = vld [vmem:[#allocation16 + $0x70] sm:$0xff]
    %v3397 = vld [vmem:[#allocation16 + $0x78] sm:$0xff]
    %3398 = vmatpush.msra.mxu0 %v3397
    %3399 = vmatpush.msra.mxu0 %v3396
    %3400 = vmatpush.msra.mxu0 %v3395
    %3401 = vmatpush.msra.mxu0 %v3394
    %3402 = vmatpush.msra.mxu0 %v3393
    %3403 = vmatpush.msra.mxu0 %v3392
    %3404 = vmatpush.msra.mxu0 %v3391
    %3405 = vmatpush.msra.mxu0 %v3390
    %3406 = vmatpush.msra.mxu0 %v3389
    %3407 = vmatpush.msra.mxu0 %v3388
    %3408 = vmatpush.msra.mxu0 %v3387
    %3409 = vmatpush.msra.mxu0 %v3386
    %3410 = vmatpush.msra.mxu0 %v3385
    %3411 = vmatpush.msra.mxu0 %v3384
    %3412 = vmatpush.msra.mxu0 %v3383
    %3413 = vmatpush.msra.mxu0 %v3382
    %3414 = vmatmul.f32.gmra.mxu0 %v3380
    %v3415 = vpop.f32.mrf.mxu0
    %v3416 = vadd.f32 0.0, %v3415
    %3417 = vdwg.mxu0
    %v3418 = vmul.f32 %v3345, %v3416
    %v3419 = vadd.f32 %v3345, %v3416
    %v3420 = vadd.f32 %v3345, %v3037
    %v3421 = vmul.f32 %v3345, %v3037
    %v3422 = vld [vmem:[%s23] sm:$0x3]
    %v3423 = vld [vmem:[#allocation17] sm:$0xff]
    %v3424 = vld [vmem:[#allocation17 + $0x8] sm:$0xff]
    %v3425 = vld [vmem:[#allocation17 + $0x10] sm:$0xff]
    %v3426 = vld [vmem:[#allocation17 + $0x18] sm:$0xff]
    %v3427 = vld [vmem:[#allocation17 + $0x20] sm:$0xff]
    %v3428 = vld [vmem:[#allocation17 + $0x28] sm:$0xff]
    %v3429 = vld [vmem:[#allocation17 + $0x30] sm:$0xff]
    %v3430 = vld [vmem:[#allocation17 + $0x38] sm:$0xff]
    %v3431 = vld [vmem:[#allocation17 + $0x40] sm:$0xff]
    %v3432 = vld [vmem:[#allocation17 + $0x48] sm:$0xff]
    %v3433 = vld [vmem:[#allocation17 + $0x50] sm:$0xff]
    %v3434 = vld [vmem:[#allocation17 + $0x58] sm:$0xff]
    %v3435 = vld [vmem:[#allocation17 + $0x60] sm:$0xff]
    %v3436 = vld [vmem:[#allocation17 + $0x68] sm:$0xff]
    %v3437 = vld [vmem:[#allocation17 + $0x70] sm:$0xff]
    %v3438 = vld [vmem:[#allocation17 + $0x78] sm:$0xff]
    %v3439 = vld [vmem:[#allocation17 + $0x80] sm:$0xff]
    %v3440 = vld [vmem:[#allocation17 + $0x88] sm:$0xff]
    %v3441 = vld [vmem:[#allocation17 + $0x90] sm:$0xff]
    %v3442 = vld [vmem:[#allocation17 + $0x98] sm:$0xff]
    %v3443 = vld [vmem:[#allocation17 + $0xa0] sm:$0xff]
    %v3444 = vld [vmem:[#allocation17 + $0xa8] sm:$0xff]
    %v3445 = vld [vmem:[#allocation17 + $0xb0] sm:$0xff]
    %v3446 = vld [vmem:[#allocation17 + $0xb8] sm:$0xff]
    %v3447 = vld [vmem:[#allocation17 + $0xc0] sm:$0xff]
    %v3448 = vld [vmem:[#allocation17 + $0xc8] sm:$0xff]
    %v3449 = vld [vmem:[#allocation17 + $0xd0] sm:$0xff]
    %v3450 = vld [vmem:[#allocation17 + $0xd8] sm:$0xff]
    %v3451 = vld [vmem:[#allocation17 + $0xe0] sm:$0xff]
    %v3452 = vld [vmem:[#allocation17 + $0xe8] sm:$0xff]
    %v3453 = vld [vmem:[#allocation17 + $0xf0] sm:$0xff]
    %v3454 = vld [vmem:[#allocation17 + $0xf8] sm:$0xff]
    %3455 = vmatpush.msra.mxu0 %v3453
    %3456 = vmatpush.msra.mxu0 %v3451
    %3457 = vmatpush.msra.mxu0 %v3449
    %3458 = vmatpush.msra.mxu0 %v3447
    %3459 = vmatpush.msra.mxu0 %v3445
    %3460 = vmatpush.msra.mxu0 %v3443
    %3461 = vmatpush.msra.mxu0 %v3441
    %3462 = vmatpush.msra.mxu0 %v3439
    %3463 = vmatpush.msra.mxu0 %v3437
    %3464 = vmatpush.msra.mxu0 %v3435
    %3465 = vmatpush.msra.mxu0 %v3433
    %3466 = vmatpush.msra.mxu0 %v3431
    %3467 = vmatpush.msra.mxu0 %v3429
    %3468 = vmatpush.msra.mxu0 %v3427
    %3469 = vmatpush.msra.mxu0 %v3425
    %3470 = vmatpush.msra.mxu0 %v3423
    %3471 = vmatmul.f32.gmra.mxu0 %v3418
    %v3472 = vpop.f32.mrf.mxu0
    %v3473 = vadd.f32 0.0, %v3472
    %3474 = vdwg.mxu0
    %3475 = vmatpush.msra.mxu0 %v3454
    %3476 = vmatpush.msra.mxu0 %v3452
    %3477 = vmatpush.msra.mxu0 %v3450
    %3478 = vmatpush.msra.mxu0 %v3448
    %3479 = vmatpush.msra.mxu0 %v3446
    %3480 = vmatpush.msra.mxu0 %v3444
    %3481 = vmatpush.msra.mxu0 %v3442
    %3482 = vmatpush.msra.mxu0 %v3440
    %3483 = vmatpush.msra.mxu0 %v3438
    %3484 = vmatpush.msra.mxu0 %v3436
    %3485 = vmatpush.msra.mxu0 %v3434
    %3486 = vmatpush.msra.mxu0 %v3432
    %3487 = vmatpush.msra.mxu0 %v3430
    %3488 = vmatpush.msra.mxu0 %v3428
    %3489 = vmatpush.msra.mxu0 %v3426
    %3490 = vmatpush.msra.mxu0 %v3424
    %3491 = vmatmul.f32.gmra.mxu0 %v3418
    %v3492 = vpop.f32.mrf.mxu0
    %v3493 = vadd.f32 0.0, %v3492
    %3494 = vdwg.mxu0
    %v3496 = vperm.slane %v3422, 0
    %v3497 = vperm.slane %v3422, 1
    %v3500 = vadd.f32 %v3496, %v3473
    %v3501 = vadd.f32 %v3497, %v3493
    %s3502 = scalar_lea.vmem [#allocation17], 256
    %v3503 = vld [vmem:[%s3502] sm:$0xff]
    %v3504 = vld [vmem:[%s3502 + $0x8] sm:$0xff]
    %v3505 = vld [vmem:[%s3502 + $0x10] sm:$0xff]
    %v3506 = vld [vmem:[%s3502 + $0x18] sm:$0xff]
    %v3507 = vld [vmem:[%s3502 + $0x20] sm:$0xff]
    %v3508 = vld [vmem:[%s3502 + $0x28] sm:$0xff]
    %v3509 = vld [vmem:[%s3502 + $0x30] sm:$0xff]
    %v3510 = vld [vmem:[%s3502 + $0x38] sm:$0xff]
    %v3511 = vld [vmem:[%s3502 + $0x40] sm:$0xff]
    %v3512 = vld [vmem:[%s3502 + $0x48] sm:$0xff]
    %v3513 = vld [vmem:[%s3502 + $0x50] sm:$0xff]
    %v3514 = vld [vmem:[%s3502 + $0x58] sm:$0xff]
    %v3515 = vld [vmem:[%s3502 + $0x60] sm:$0xff]
    %v3516 = vld [vmem:[%s3502 + $0x68] sm:$0xff]
    %v3517 = vld [vmem:[%s3502 + $0x70] sm:$0xff]
    %v3518 = vld [vmem:[%s3502 + $0x78] sm:$0xff]
    %v3519 = vld [vmem:[%s3502 + $0x80] sm:$0xff]
    %v3520 = vld [vmem:[%s3502 + $0x88] sm:$0xff]
    %v3521 = vld [vmem:[%s3502 + $0x90] sm:$0xff]
    %v3522 = vld [vmem:[%s3502 + $0x98] sm:$0xff]
    %v3523 = vld [vmem:[%s3502 + $0xa0] sm:$0xff]
    %v3524 = vld [vmem:[%s3502 + $0xa8] sm:$0xff]
    %v3525 = vld [vmem:[%s3502 + $0xb0] sm:$0xff]
    %v3526 = vld [vmem:[%s3502 + $0xb8] sm:$0xff]
    %v3527 = vld [vmem:[%s3502 + $0xc0] sm:$0xff]
    %v3528 = vld [vmem:[%s3502 + $0xc8] sm:$0xff]
    %v3529 = vld [vmem:[%s3502 + $0xd0] sm:$0xff]
    %v3530 = vld [vmem:[%s3502 + $0xd8] sm:$0xff]
    %v3531 = vld [vmem:[%s3502 + $0xe0] sm:$0xff]
    %v3532 = vld [vmem:[%s3502 + $0xe8] sm:$0xff]
    %v3533 = vld [vmem:[%s3502 + $0xf0] sm:$0xff]
    %v3534 = vld [vmem:[%s3502 + $0xf8] sm:$0xff]
    %3535 = vmatpush.msra.mxu0 %v3533
    %3536 = vmatpush.msra.mxu0 %v3531
    %3537 = vmatpush.msra.mxu0 %v3529
    %3538 = vmatpush.msra.mxu0 %v3527
    %3539 = vmatpush.msra.mxu0 %v3525
    %3540 = vmatpush.msra.mxu0 %v3523
    %3541 = vmatpush.msra.mxu0 %v3521
    %3542 = vmatpush.msra.mxu0 %v3519
    %3543 = vmatpush.msra.mxu0 %v3517
    %3544 = vmatpush.msra.mxu0 %v3515
    %3545 = vmatpush.msra.mxu0 %v3513
    %3546 = vmatpush.msra.mxu0 %v3511
    %3547 = vmatpush.msra.mxu0 %v3509
    %3548 = vmatpush.msra.mxu0 %v3507
    %3549 = vmatpush.msra.mxu0 %v3505
    %3550 = vmatpush.msra.mxu0 %v3503
    %3551 = vmatmul.f32.gmra.mxu0 %v3419
    %v3552 = vpop.f32.mrf.mxu0
    %v3553 = vadd.f32 0.0, %v3552
    %3554 = vdwg.mxu0
    %3555 = vmatpush.msra.mxu0 %v3534
    %3556 = vmatpush.msra.mxu0 %v3532
    %3557 = vmatpush.msra.mxu0 %v3530
    %3558 = vmatpush.msra.mxu0 %v3528
    %3559 = vmatpush.msra.mxu0 %v3526
    %3560 = vmatpush.msra.mxu0 %v3524
    %3561 = vmatpush.msra.mxu0 %v3522
    %3562 = vmatpush.msra.mxu0 %v3520
    %3563 = vmatpush.msra.mxu0 %v3518
    %3564 = vmatpush.msra.mxu0 %v3516
    %3565 = vmatpush.msra.mxu0 %v3514
    %3566 = vmatpush.msra.mxu0 %v3512
    %3567 = vmatpush.msra.mxu0 %v3510
    %3568 = vmatpush.msra.mxu0 %v3508
    %3569 = vmatpush.msra.mxu0 %v3506
    %3570 = vmatpush.msra.mxu0 %v3504
    %3571 = vmatmul.f32.gmra.mxu0 %v3419
    %v3572 = vpop.f32.mrf.mxu0
    %v3573 = vadd.f32 0.0, %v3572
    %3574 = vdwg.mxu0
    %v3575 = vadd.f32 %v3500, %v3553
    %v3576 = vadd.f32 %v3501, %v3573
    %s3577 = scalar_lea.vmem [#allocation17], 512
    %v3578 = vld [vmem:[%s3577] sm:$0xff]
    %v3579 = vld [vmem:[%s3577 + $0x8] sm:$0xff]
    %v3580 = vld [vmem:[%s3577 + $0x10] sm:$0xff]
    %v3581 = vld [vmem:[%s3577 + $0x18] sm:$0xff]
    %v3582 = vld [vmem:[%s3577 + $0x20] sm:$0xff]
    %v3583 = vld [vmem:[%s3577 + $0x28] sm:$0xff]
    %v3584 = vld [vmem:[%s3577 + $0x30] sm:$0xff]
    %v3585 = vld [vmem:[%s3577 + $0x38] sm:$0xff]
    %v3586 = vld [vmem:[%s3577 + $0x40] sm:$0xff]
    %v3587 = vld [vmem:[%s3577 + $0x48] sm:$0xff]
    %v3588 = vld [vmem:[%s3577 + $0x50] sm:$0xff]
    %v3589 = vld [vmem:[%s3577 + $0x58] sm:$0xff]
    %v3590 = vld [vmem:[%s3577 + $0x60] sm:$0xff]
    %v3591 = vld [vmem:[%s3577 + $0x68] sm:$0xff]
    %v3592 = vld [vmem:[%s3577 + $0x70] sm:$0xff]
    %v3593 = vld [vmem:[%s3577 + $0x78] sm:$0xff]
    %v3594 = vld [vmem:[%s3577 + $0x80] sm:$0xff]
    %v3595 = vld [vmem:[%s3577 + $0x88] sm:$0xff]
    %v3596 = vld [vmem:[%s3577 + $0x90] sm:$0xff]
    %v3597 = vld [vmem:[%s3577 + $0x98] sm:$0xff]
    %v3598 = vld [vmem:[%s3577 + $0xa0] sm:$0xff]
    %v3599 = vld [vmem:[%s3577 + $0xa8] sm:$0xff]
    %v3600 = vld [vmem:[%s3577 + $0xb0] sm:$0xff]
    %v3601 = vld [vmem:[%s3577 + $0xb8] sm:$0xff]
    %v3602 = vld [vmem:[%s3577 + $0xc0] sm:$0xff]
    %v3603 = vld [vmem:[%s3577 + $0xc8] sm:$0xff]
    %v3604 = vld [vmem:[%s3577 + $0xd0] sm:$0xff]
    %v3605 = vld [vmem:[%s3577 + $0xd8] sm:$0xff]
    %v3606 = vld [vmem:[%s3577 + $0xe0] sm:$0xff]
    %v3607 = vld [vmem:[%s3577 + $0xe8] sm:$0xff]
    %v3608 = vld [vmem:[%s3577 + $0xf0] sm:$0xff]
    %v3609 = vld [vmem:[%s3577 + $0xf8] sm:$0xff]
    %3610 = vmatpush.msra.mxu0 %v3608
    %3611 = vmatpush.msra.mxu0 %v3606
    %3612 = vmatpush.msra.mxu0 %v3604
    %3613 = vmatpush.msra.mxu0 %v3602
    %3614 = vmatpush.msra.mxu0 %v3600
    %3615 = vmatpush.msra.mxu0 %v3598
    %3616 = vmatpush.msra.mxu0 %v3596
    %3617 = vmatpush.msra.mxu0 %v3594
    %3618 = vmatpush.msra.mxu0 %v3592
    %3619 = vmatpush.msra.mxu0 %v3590
    %3620 = vmatpush.msra.mxu0 %v3588
    %3621 = vmatpush.msra.mxu0 %v3586
    %3622 = vmatpush.msra.mxu0 %v3584
    %3623 = vmatpush.msra.mxu0 %v3582
    %3624 = vmatpush.msra.mxu0 %v3580
    %3625 = vmatpush.msra.mxu0 %v3578
    %3626 = vmatmul.f32.gmra.mxu0 %v3416
    %v3627 = vpop.f32.mrf.mxu0
    %v3628 = vadd.f32 0.0, %v3627
    %3629 = vdwg.mxu0
    %3630 = vmatpush.msra.mxu0 %v3609
    %3631 = vmatpush.msra.mxu0 %v3607
    %3632 = vmatpush.msra.mxu0 %v3605
    %3633 = vmatpush.msra.mxu0 %v3603
    %3634 = vmatpush.msra.mxu0 %v3601
    %3635 = vmatpush.msra.mxu0 %v3599
    %3636 = vmatpush.msra.mxu0 %v3597
    %3637 = vmatpush.msra.mxu0 %v3595
    %3638 = vmatpush.msra.mxu0 %v3593
    %3639 = vmatpush.msra.mxu0 %v3591
    %3640 = vmatpush.msra.mxu0 %v3589
    %3641 = vmatpush.msra.mxu0 %v3587
    %3642 = vmatpush.msra.mxu0 %v3585
    %3643 = vmatpush.msra.mxu0 %v3583
    %3644 = vmatpush.msra.mxu0 %v3581
    %3645 = vmatpush.msra.mxu0 %v3579
    %3646 = vmatmul.f32.gmra.mxu0 %v3416
    %v3647 = vpop.f32.mrf.mxu0
    %v3648 = vadd.f32 0.0, %v3647
    %3649 = vdwg.mxu0
    %v3650 = vadd.f32 %v3575, %v3628
    %v3651 = vadd.f32 %v3576, %v3648
    %s3652 = scalar_lea.vmem [#allocation17], 768
    %v3653 = vld [vmem:[%s3652] sm:$0xff]
    %v3654 = vld [vmem:[%s3652 + $0x8] sm:$0xff]
    %v3655 = vld [vmem:[%s3652 + $0x10] sm:$0xff]
    %v3656 = vld [vmem:[%s3652 + $0x18] sm:$0xff]
    %v3657 = vld [vmem:[%s3652 + $0x20] sm:$0xff]
    %v3658 = vld [vmem:[%s3652 + $0x28] sm:$0xff]
    %v3659 = vld [vmem:[%s3652 + $0x30] sm:$0xff]
    %v3660 = vld [vmem:[%s3652 + $0x38] sm:$0xff]
    %v3661 = vld [vmem:[%s3652 + $0x40] sm:$0xff]
    %v3662 = vld [vmem:[%s3652 + $0x48] sm:$0xff]
    %v3663 = vld [vmem:[%s3652 + $0x50] sm:$0xff]
    %v3664 = vld [vmem:[%s3652 + $0x58] sm:$0xff]
    %v3665 = vld [vmem:[%s3652 + $0x60] sm:$0xff]
    %v3666 = vld [vmem:[%s3652 + $0x68] sm:$0xff]
    %v3667 = vld [vmem:[%s3652 + $0x70] sm:$0xff]
    %v3668 = vld [vmem:[%s3652 + $0x78] sm:$0xff]
    %v3669 = vld [vmem:[%s3652 + $0x80] sm:$0xff]
    %v3670 = vld [vmem:[%s3652 + $0x88] sm:$0xff]
    %v3671 = vld [vmem:[%s3652 + $0x90] sm:$0xff]
    %v3672 = vld [vmem:[%s3652 + $0x98] sm:$0xff]
    %v3673 = vld [vmem:[%s3652 + $0xa0] sm:$0xff]
    %v3674 = vld [vmem:[%s3652 + $0xa8] sm:$0xff]
    %v3675 = vld [vmem:[%s3652 + $0xb0] sm:$0xff]
    %v3676 = vld [vmem:[%s3652 + $0xb8] sm:$0xff]
    %v3677 = vld [vmem:[%s3652 + $0xc0] sm:$0xff]
    %v3678 = vld [vmem:[%s3652 + $0xc8] sm:$0xff]
    %v3679 = vld [vmem:[%s3652 + $0xd0] sm:$0xff]
    %v3680 = vld [vmem:[%s3652 + $0xd8] sm:$0xff]
    %v3681 = vld [vmem:[%s3652 + $0xe0] sm:$0xff]
    %v3682 = vld [vmem:[%s3652 + $0xe8] sm:$0xff]
    %v3683 = vld [vmem:[%s3652 + $0xf0] sm:$0xff]
    %v3684 = vld [vmem:[%s3652 + $0xf8] sm:$0xff]
    %3685 = vmatpush.msra.mxu0 %v3683
    %3686 = vmatpush.msra.mxu0 %v3681
    %3687 = vmatpush.msra.mxu0 %v3679
    %3688 = vmatpush.msra.mxu0 %v3677
    %3689 = vmatpush.msra.mxu0 %v3675
    %3690 = vmatpush.msra.mxu0 %v3673
    %3691 = vmatpush.msra.mxu0 %v3671
    %3692 = vmatpush.msra.mxu0 %v3669
    %3693 = vmatpush.msra.mxu0 %v3667
    %3694 = vmatpush.msra.mxu0 %v3665
    %3695 = vmatpush.msra.mxu0 %v3663
    %3696 = vmatpush.msra.mxu0 %v3661
    %3697 = vmatpush.msra.mxu0 %v3659
    %3698 = vmatpush.msra.mxu0 %v3657
    %3699 = vmatpush.msra.mxu0 %v3655
    %3700 = vmatpush.msra.mxu0 %v3653
    %3701 = vmatmul.f32.gmra.mxu0 %v3380
    %v3702 = vpop.f32.mrf.mxu0
    %v3703 = vadd.f32 0.0, %v3702
    %3704 = vdwg.mxu0
    %3705 = vmatpush.msra.mxu0 %v3684
    %3706 = vmatpush.msra.mxu0 %v3682
    %3707 = vmatpush.msra.mxu0 %v3680
    %3708 = vmatpush.msra.mxu0 %v3678
    %3709 = vmatpush.msra.mxu0 %v3676
    %3710 = vmatpush.msra.mxu0 %v3674
    %3711 = vmatpush.msra.mxu0 %v3672
    %3712 = vmatpush.msra.mxu0 %v3670
    %3713 = vmatpush.msra.mxu0 %v3668
    %3714 = vmatpush.msra.mxu0 %v3666
    %3715 = vmatpush.msra.mxu0 %v3664
    %3716 = vmatpush.msra.mxu0 %v3662
    %3717 = vmatpush.msra.mxu0 %v3660
    %3718 = vmatpush.msra.mxu0 %v3658
    %3719 = vmatpush.msra.mxu0 %v3656
    %3720 = vmatpush.msra.mxu0 %v3654
    %3721 = vmatmul.f32.gmra.mxu0 %v3380
    %v3722 = vpop.f32.mrf.mxu0
    %v3723 = vadd.f32 0.0, %v3722
    %3724 = vdwg.mxu0
    %v3725 = vadd.f32 %v3650, %v3703
    %v3726 = vadd.f32 %v3651, %v3723
    %s3727 = scalar_lea.vmem [#allocation17], 1024
    %v3728 = vld [vmem:[%s3727] sm:$0xff]
    %v3729 = vld [vmem:[%s3727 + $0x8] sm:$0xff]
    %v3730 = vld [vmem:[%s3727 + $0x10] sm:$0xff]
    %v3731 = vld [vmem:[%s3727 + $0x18] sm:$0xff]
    %v3732 = vld [vmem:[%s3727 + $0x20] sm:$0xff]
    %v3733 = vld [vmem:[%s3727 + $0x28] sm:$0xff]
    %v3734 = vld [vmem:[%s3727 + $0x30] sm:$0xff]
    %v3735 = vld [vmem:[%s3727 + $0x38] sm:$0xff]
    %v3736 = vld [vmem:[%s3727 + $0x40] sm:$0xff]
    %v3737 = vld [vmem:[%s3727 + $0x48] sm:$0xff]
    %v3738 = vld [vmem:[%s3727 + $0x50] sm:$0xff]
    %v3739 = vld [vmem:[%s3727 + $0x58] sm:$0xff]
    %v3740 = vld [vmem:[%s3727 + $0x60] sm:$0xff]
    %v3741 = vld [vmem:[%s3727 + $0x68] sm:$0xff]
    %v3742 = vld [vmem:[%s3727 + $0x70] sm:$0xff]
    %v3743 = vld [vmem:[%s3727 + $0x78] sm:$0xff]
    %v3744 = vld [vmem:[%s3727 + $0x80] sm:$0xff]
    %v3745 = vld [vmem:[%s3727 + $0x88] sm:$0xff]
    %v3746 = vld [vmem:[%s3727 + $0x90] sm:$0xff]
    %v3747 = vld [vmem:[%s3727 + $0x98] sm:$0xff]
    %v3748 = vld [vmem:[%s3727 + $0xa0] sm:$0xff]
    %v3749 = vld [vmem:[%s3727 + $0xa8] sm:$0xff]
    %v3750 = vld [vmem:[%s3727 + $0xb0] sm:$0xff]
    %v3751 = vld [vmem:[%s3727 + $0xb8] sm:$0xff]
    %v3752 = vld [vmem:[%s3727 + $0xc0] sm:$0xff]
    %v3753 = vld [vmem:[%s3727 + $0xc8] sm:$0xff]
    %v3754 = vld [vmem:[%s3727 + $0xd0] sm:$0xff]
    %v3755 = vld [vmem:[%s3727 + $0xd8] sm:$0xff]
    %v3756 = vld [vmem:[%s3727 + $0xe0] sm:$0xff]
    %v3757 = vld [vmem:[%s3727 + $0xe8] sm:$0xff]
    %v3758 = vld [vmem:[%s3727 + $0xf0] sm:$0xff]
    %v3759 = vld [vmem:[%s3727 + $0xf8] sm:$0xff]
    %3760 = vmatpush.msra.mxu0 %v3758
    %3761 = vmatpush.msra.mxu0 %v3756
    %3762 = vmatpush.msra.mxu0 %v3754
    %3763 = vmatpush.msra.mxu0 %v3752
    %3764 = vmatpush.msra.mxu0 %v3750
    %3765 = vmatpush.msra.mxu0 %v3748
    %3766 = vmatpush.msra.mxu0 %v3746
    %3767 = vmatpush.msra.mxu0 %v3744
    %3768 = vmatpush.msra.mxu0 %v3742
    %3769 = vmatpush.msra.mxu0 %v3740
    %3770 = vmatpush.msra.mxu0 %v3738
    %3771 = vmatpush.msra.mxu0 %v3736
    %3772 = vmatpush.msra.mxu0 %v3734
    %3773 = vmatpush.msra.mxu0 %v3732
    %3774 = vmatpush.msra.mxu0 %v3730
    %3775 = vmatpush.msra.mxu0 %v3728
    %3776 = vmatmul.f32.gmra.mxu0 %v3037
    %v3777 = vpop.f32.mrf.mxu0
    %v3778 = vadd.f32 0.0, %v3777
    %3779 = vdwg.mxu0
    %3780 = vmatpush.msra.mxu0 %v3759
    %3781 = vmatpush.msra.mxu0 %v3757
    %3782 = vmatpush.msra.mxu0 %v3755
    %3783 = vmatpush.msra.mxu0 %v3753
    %3784 = vmatpush.msra.mxu0 %v3751
    %3785 = vmatpush.msra.mxu0 %v3749
    %3786 = vmatpush.msra.mxu0 %v3747
    %3787 = vmatpush.msra.mxu0 %v3745
    %3788 = vmatpush.msra.mxu0 %v3743
    %3789 = vmatpush.msra.mxu0 %v3741
    %3790 = vmatpush.msra.mxu0 %v3739
    %3791 = vmatpush.msra.mxu0 %v3737
    %3792 = vmatpush.msra.mxu0 %v3735
    %3793 = vmatpush.msra.mxu0 %v3733
    %3794 = vmatpush.msra.mxu0 %v3731
    %3795 = vmatpush.msra.mxu0 %v3729
    %3796 = vmatmul.f32.gmra.mxu0 %v3037
    %v3797 = vpop.f32.mrf.mxu0
    %v3798 = vadd.f32 0.0, %v3797
    %3799 = vdwg.mxu0
    %v3800 = vadd.f32 %v3725, %v3778
    %v3801 = vadd.f32 %v3726, %v3798
    %s3802 = scalar_lea.vmem [#allocation17], 1280
    %v3803 = vld [vmem:[%s3802] sm:$0xff]
    %v3804 = vld [vmem:[%s3802 + $0x8] sm:$0xff]
    %v3805 = vld [vmem:[%s3802 + $0x10] sm:$0xff]
    %v3806 = vld [vmem:[%s3802 + $0x18] sm:$0xff]
    %v3807 = vld [vmem:[%s3802 + $0x20] sm:$0xff]
    %v3808 = vld [vmem:[%s3802 + $0x28] sm:$0xff]
    %v3809 = vld [vmem:[%s3802 + $0x30] sm:$0xff]
    %v3810 = vld [vmem:[%s3802 + $0x38] sm:$0xff]
    %v3811 = vld [vmem:[%s3802 + $0x40] sm:$0xff]
    %v3812 = vld [vmem:[%s3802 + $0x48] sm:$0xff]
    %v3813 = vld [vmem:[%s3802 + $0x50] sm:$0xff]
    %v3814 = vld [vmem:[%s3802 + $0x58] sm:$0xff]
    %v3815 = vld [vmem:[%s3802 + $0x60] sm:$0xff]
    %v3816 = vld [vmem:[%s3802 + $0x68] sm:$0xff]
    %v3817 = vld [vmem:[%s3802 + $0x70] sm:$0xff]
    %v3818 = vld [vmem:[%s3802 + $0x78] sm:$0xff]
    %v3819 = vld [vmem:[%s3802 + $0x80] sm:$0xff]
    %v3820 = vld [vmem:[%s3802 + $0x88] sm:$0xff]
    %v3821 = vld [vmem:[%s3802 + $0x90] sm:$0xff]
    %v3822 = vld [vmem:[%s3802 + $0x98] sm:$0xff]
    %v3823 = vld [vmem:[%s3802 + $0xa0] sm:$0xff]
    %v3824 = vld [vmem:[%s3802 + $0xa8] sm:$0xff]
    %v3825 = vld [vmem:[%s3802 + $0xb0] sm:$0xff]
    %v3826 = vld [vmem:[%s3802 + $0xb8] sm:$0xff]
    %v3827 = vld [vmem:[%s3802 + $0xc0] sm:$0xff]
    %v3828 = vld [vmem:[%s3802 + $0xc8] sm:$0xff]
    %v3829 = vld [vmem:[%s3802 + $0xd0] sm:$0xff]
    %v3830 = vld [vmem:[%s3802 + $0xd8] sm:$0xff]
    %v3831 = vld [vmem:[%s3802 + $0xe0] sm:$0xff]
    %v3832 = vld [vmem:[%s3802 + $0xe8] sm:$0xff]
    %v3833 = vld [vmem:[%s3802 + $0xf0] sm:$0xff]
    %v3834 = vld [vmem:[%s3802 + $0xf8] sm:$0xff]
    %3835 = vmatpush.msra.mxu0 %v3833
    %3836 = vmatpush.msra.mxu0 %v3831
    %3837 = vmatpush.msra.mxu0 %v3829
    %3838 = vmatpush.msra.mxu0 %v3827
    %3839 = vmatpush.msra.mxu0 %v3825
    %3840 = vmatpush.msra.mxu0 %v3823
    %3841 = vmatpush.msra.mxu0 %v3821
    %3842 = vmatpush.msra.mxu0 %v3819
    %3843 = vmatpush.msra.mxu0 %v3817
    %3844 = vmatpush.msra.mxu0 %v3815
    %3845 = vmatpush.msra.mxu0 %v3813
    %3846 = vmatpush.msra.mxu0 %v3811
    %3847 = vmatpush.msra.mxu0 %v3809
    %3848 = vmatpush.msra.mxu0 %v3807
    %3849 = vmatpush.msra.mxu0 %v3805
    %3850 = vmatpush.msra.mxu0 %v3803
    %3851 = vmatmul.f32.gmra.mxu0 %v3345
    %v3852 = vpop.f32.mrf.mxu0
    %v3853 = vadd.f32 0.0, %v3852
    %3854 = vdwg.mxu0
    %3855 = vmatpush.msra.mxu0 %v3834
    %3856 = vmatpush.msra.mxu0 %v3832
    %3857 = vmatpush.msra.mxu0 %v3830
    %3858 = vmatpush.msra.mxu0 %v3828
    %3859 = vmatpush.msra.mxu0 %v3826
    %3860 = vmatpush.msra.mxu0 %v3824
    %3861 = vmatpush.msra.mxu0 %v3822
    %3862 = vmatpush.msra.mxu0 %v3820
    %3863 = vmatpush.msra.mxu0 %v3818
    %3864 = vmatpush.msra.mxu0 %v3816
    %3865 = vmatpush.msra.mxu0 %v3814
    %3866 = vmatpush.msra.mxu0 %v3812
    %3867 = vmatpush.msra.mxu0 %v3810
    %3868 = vmatpush.msra.mxu0 %v3808
    %3869 = vmatpush.msra.mxu0 %v3806
    %3870 = vmatpush.msra.mxu0 %v3804
    %3871 = vmatmul.f32.gmra.mxu0 %v3345
    %v3872 = vpop.f32.mrf.mxu0
    %v3873 = vadd.f32 0.0, %v3872
    %3874 = vdwg.mxu0
    %v3875 = vadd.f32 %v3800, %v3853
    %v3876 = vadd.f32 %v3801, %v3873
    %s3877 = scalar_lea.vmem [#allocation17], 1536
    %v3878 = vld [vmem:[%s3877] sm:$0xff]
    %v3879 = vld [vmem:[%s3877 + $0x8] sm:$0xff]
    %v3880 = vld [vmem:[%s3877 + $0x10] sm:$0xff]
    %v3881 = vld [vmem:[%s3877 + $0x18] sm:$0xff]
    %v3882 = vld [vmem:[%s3877 + $0x20] sm:$0xff]
    %v3883 = vld [vmem:[%s3877 + $0x28] sm:$0xff]
    %v3884 = vld [vmem:[%s3877 + $0x30] sm:$0xff]
    %v3885 = vld [vmem:[%s3877 + $0x38] sm:$0xff]
    %v3886 = vld [vmem:[%s3877 + $0x40] sm:$0xff]
    %v3887 = vld [vmem:[%s3877 + $0x48] sm:$0xff]
    %v3888 = vld [vmem:[%s3877 + $0x50] sm:$0xff]
    %v3889 = vld [vmem:[%s3877 + $0x58] sm:$0xff]
    %v3890 = vld [vmem:[%s3877 + $0x60] sm:$0xff]
    %v3891 = vld [vmem:[%s3877 + $0x68] sm:$0xff]
    %v3892 = vld [vmem:[%s3877 + $0x70] sm:$0xff]
    %v3893 = vld [vmem:[%s3877 + $0x78] sm:$0xff]
    %v3894 = vld [vmem:[%s3877 + $0x80] sm:$0xff]
    %v3895 = vld [vmem:[%s3877 + $0x88] sm:$0xff]
    %v3896 = vld [vmem:[%s3877 + $0x90] sm:$0xff]
    %v3897 = vld [vmem:[%s3877 + $0x98] sm:$0xff]
    %v3898 = vld [vmem:[%s3877 + $0xa0] sm:$0xff]
    %v3899 = vld [vmem:[%s3877 + $0xa8] sm:$0xff]
    %v3900 = vld [vmem:[%s3877 + $0xb0] sm:$0xff]
    %v3901 = vld [vmem:[%s3877 + $0xb8] sm:$0xff]
    %v3902 = vld [vmem:[%s3877 + $0xc0] sm:$0xff]
    %v3903 = vld [vmem:[%s3877 + $0xc8] sm:$0xff]
    %v3904 = vld [vmem:[%s3877 + $0xd0] sm:$0xff]
    %v3905 = vld [vmem:[%s3877 + $0xd8] sm:$0xff]
    %v3906 = vld [vmem:[%s3877 + $0xe0] sm:$0xff]
    %v3907 = vld [vmem:[%s3877 + $0xe8] sm:$0xff]
    %v3908 = vld [vmem:[%s3877 + $0xf0] sm:$0xff]
    %v3909 = vld [vmem:[%s3877 + $0xf8] sm:$0xff]
    %3910 = vmatpush.msra.mxu0 %v3908
    %3911 = vmatpush.msra.mxu0 %v3906
    %3912 = vmatpush.msra.mxu0 %v3904
    %3913 = vmatpush.msra.mxu0 %v3902
    %3914 = vmatpush.msra.mxu0 %v3900
    %3915 = vmatpush.msra.mxu0 %v3898
    %3916 = vmatpush.msra.mxu0 %v3896
    %3917 = vmatpush.msra.mxu0 %v3894
    %3918 = vmatpush.msra.mxu0 %v3892
    %3919 = vmatpush.msra.mxu0 %v3890
    %3920 = vmatpush.msra.mxu0 %v3888
    %3921 = vmatpush.msra.mxu0 %v3886
    %3922 = vmatpush.msra.mxu0 %v3884
    %3923 = vmatpush.msra.mxu0 %v3882
    %3924 = vmatpush.msra.mxu0 %v3880
    %3925 = vmatpush.msra.mxu0 %v3878
    %3926 = vmatmul.f32.gmra.mxu0 %v3420
    %v3927 = vpop.f32.mrf.mxu0
    %v3928 = vadd.f32 0.0, %v3927
    %3929 = vdwg.mxu0
    %3930 = vmatpush.msra.mxu0 %v3909
    %3931 = vmatpush.msra.mxu0 %v3907
    %3932 = vmatpush.msra.mxu0 %v3905
    %3933 = vmatpush.msra.mxu0 %v3903
    %3934 = vmatpush.msra.mxu0 %v3901
    %3935 = vmatpush.msra.mxu0 %v3899
    %3936 = vmatpush.msra.mxu0 %v3897
    %3937 = vmatpush.msra.mxu0 %v3895
    %3938 = vmatpush.msra.mxu0 %v3893
    %3939 = vmatpush.msra.mxu0 %v3891
    %3940 = vmatpush.msra.mxu0 %v3889
    %3941 = vmatpush.msra.mxu0 %v3887
    %3942 = vmatpush.msra.mxu0 %v3885
    %3943 = vmatpush.msra.mxu0 %v3883
    %3944 = vmatpush.msra.mxu0 %v3881
    %3945 = vmatpush.msra.mxu0 %v3879
    %3946 = vmatmul.f32.gmra.mxu0 %v3420
    %v3947 = vpop.f32.mrf.mxu0
    %v3948 = vadd.f32 0.0, %v3947
    %3949 = vdwg.mxu0
    %v3950 = vadd.f32 %v3875, %v3928
    %v3951 = vadd.f32 %v3876, %v3948
    %s3952 = scalar_lea.vmem [#allocation17], 1792
    %v3953 = vld [vmem:[%s3952] sm:$0xff]
    %v3954 = vld [vmem:[%s3952 + $0x8] sm:$0xff]
    %v3955 = vld [vmem:[%s3952 + $0x10] sm:$0xff]
    %v3956 = vld [vmem:[%s3952 + $0x18] sm:$0xff]
    %v3957 = vld [vmem:[%s3952 + $0x20] sm:$0xff]
    %v3958 = vld [vmem:[%s3952 + $0x28] sm:$0xff]
    %v3959 = vld [vmem:[%s3952 + $0x30] sm:$0xff]
    %v3960 = vld [vmem:[%s3952 + $0x38] sm:$0xff]
    %v3961 = vld [vmem:[%s3952 + $0x40] sm:$0xff]
    %v3962 = vld [vmem:[%s3952 + $0x48] sm:$0xff]
    %v3963 = vld [vmem:[%s3952 + $0x50] sm:$0xff]
    %v3964 = vld [vmem:[%s3952 + $0x58] sm:$0xff]
    %v3965 = vld [vmem:[%s3952 + $0x60] sm:$0xff]
    %v3966 = vld [vmem:[%s3952 + $0x68] sm:$0xff]
    %v3967 = vld [vmem:[%s3952 + $0x70] sm:$0xff]
    %v3968 = vld [vmem:[%s3952 + $0x78] sm:$0xff]
    %v3969 = vld [vmem:[%s3952 + $0x80] sm:$0xff]
    %v3970 = vld [vmem:[%s3952 + $0x88] sm:$0xff]
    %v3971 = vld [vmem:[%s3952 + $0x90] sm:$0xff]
    %v3972 = vld [vmem:[%s3952 + $0x98] sm:$0xff]
    %v3973 = vld [vmem:[%s3952 + $0xa0] sm:$0xff]
    %v3974 = vld [vmem:[%s3952 + $0xa8] sm:$0xff]
    %v3975 = vld [vmem:[%s3952 + $0xb0] sm:$0xff]
    %v3976 = vld [vmem:[%s3952 + $0xb8] sm:$0xff]
    %v3977 = vld [vmem:[%s3952 + $0xc0] sm:$0xff]
    %v3978 = vld [vmem:[%s3952 + $0xc8] sm:$0xff]
    %v3979 = vld [vmem:[%s3952 + $0xd0] sm:$0xff]
    %v3980 = vld [vmem:[%s3952 + $0xd8] sm:$0xff]
    %v3981 = vld [vmem:[%s3952 + $0xe0] sm:$0xff]
    %v3982 = vld [vmem:[%s3952 + $0xe8] sm:$0xff]
    %v3983 = vld [vmem:[%s3952 + $0xf0] sm:$0xff]
    %v3984 = vld [vmem:[%s3952 + $0xf8] sm:$0xff]
    %3985 = vmatpush.msra.mxu0 %v3983
    %3986 = vmatpush.msra.mxu0 %v3981
    %3987 = vmatpush.msra.mxu0 %v3979
    %3988 = vmatpush.msra.mxu0 %v3977
    %3989 = vmatpush.msra.mxu0 %v3975
    %3990 = vmatpush.msra.mxu0 %v3973
    %3991 = vmatpush.msra.mxu0 %v3971
    %3992 = vmatpush.msra.mxu0 %v3969
    %3993 = vmatpush.msra.mxu0 %v3967
    %3994 = vmatpush.msra.mxu0 %v3965
    %3995 = vmatpush.msra.mxu0 %v3963
    %3996 = vmatpush.msra.mxu0 %v3961
    %3997 = vmatpush.msra.mxu0 %v3959
    %3998 = vmatpush.msra.mxu0 %v3957
    %3999 = vmatpush.msra.mxu0 %v3955
    %4000 = vmatpush.msra.mxu0 %v3953
    %4001 = vmatmul.f32.gmra.mxu0 %v3421
    %v4002 = vpop.f32.mrf.mxu0
    %v4003 = vadd.f32 0.0, %v4002
    %4004 = vdwg.mxu0
    %4005 = vmatpush.msra.mxu0 %v3984
    %4006 = vmatpush.msra.mxu0 %v3982
    %4007 = vmatpush.msra.mxu0 %v3980
    %4008 = vmatpush.msra.mxu0 %v3978
    %4009 = vmatpush.msra.mxu0 %v3976
    %4010 = vmatpush.msra.mxu0 %v3974
    %4011 = vmatpush.msra.mxu0 %v3972
    %4012 = vmatpush.msra.mxu0 %v3970
    %4013 = vmatpush.msra.mxu0 %v3968
    %4014 = vmatpush.msra.mxu0 %v3966
    %4015 = vmatpush.msra.mxu0 %v3964
    %4016 = vmatpush.msra.mxu0 %v3962
    %4017 = vmatpush.msra.mxu0 %v3960
    %4018 = vmatpush.msra.mxu0 %v3958
    %4019 = vmatpush.msra.mxu0 %v3956
    %4020 = vmatpush.msra.mxu0 %v3954
    %4021 = vmatmul.f32.gmra.mxu0 %v3421
    %v4022 = vpop.f32.mrf.mxu0
    %v4023 = vadd.f32 0.0, %v4022
    %4024 = vdwg.mxu0
    %v4025 = vadd.f32 %v3950, %v4003
    %v4026 = vadd.f32 %v3951, %v4023
    %vm4027 = vcmp.gt.f32.partialorder %v4025, 0.0
    %vm4028 = vcmp.gt.f32.partialorder %v4026, 0.0
    %v4029 = vmul.f32 %v4025, 0.1
    %v4030 = vmul.f32 %v4026, 0.1
    %v4031 = vsel %vm4027, %v4025, %v4029
    %v4032 = vsel %vm4028, %v4026, %v4030
    %v4033 = vld [vmem:[#allocation19] sm:$0xff]
    %v4034 = vld [vmem:[#allocation19 + $0x8] sm:$0xff]
    %v4035 = vld [vmem:[#allocation19 + $0x10] sm:$0xff]
    %v4036 = vld [vmem:[#allocation19 + $0x18] sm:$0xff]
    %v4037 = vld [vmem:[#allocation19 + $0x20] sm:$0xff]
    %v4038 = vld [vmem:[#allocation19 + $0x28] sm:$0xff]
    %v4039 = vld [vmem:[#allocation19 + $0x30] sm:$0xff]
    %v4040 = vld [vmem:[#allocation19 + $0x38] sm:$0xff]
    %v4041 = vld [vmem:[#allocation19 + $0x40] sm:$0xff]
    %v4042 = vld [vmem:[#allocation19 + $0x48] sm:$0xff]
    %v4043 = vld [vmem:[#allocation19 + $0x50] sm:$0xff]
    %v4044 = vld [vmem:[#allocation19 + $0x58] sm:$0xff]
    %v4045 = vld [vmem:[#allocation19 + $0x60] sm:$0xff]
    %v4046 = vld [vmem:[#allocation19 + $0x68] sm:$0xff]
    %v4047 = vld [vmem:[#allocation19 + $0x70] sm:$0xff]
    %v4048 = vld [vmem:[#allocation19 + $0x78] sm:$0xff]
    %v4049 = vld [vmem:[#allocation19 + $0x80] sm:$0xff]
    %v4050 = vld [vmem:[#allocation19 + $0x88] sm:$0xff]
    %v4051 = vld [vmem:[#allocation19 + $0x90] sm:$0xff]
    %v4052 = vld [vmem:[#allocation19 + $0x98] sm:$0xff]
    %v4053 = vld [vmem:[#allocation19 + $0xa0] sm:$0xff]
    %v4054 = vld [vmem:[#allocation19 + $0xa8] sm:$0xff]
    %v4055 = vld [vmem:[#allocation19 + $0xb0] sm:$0xff]
    %v4056 = vld [vmem:[#allocation19 + $0xb8] sm:$0xff]
    %v4057 = vld [vmem:[#allocation19 + $0xc0] sm:$0xff]
    %v4058 = vld [vmem:[#allocation19 + $0xc8] sm:$0xff]
    %v4059 = vld [vmem:[#allocation19 + $0xd0] sm:$0xff]
    %v4060 = vld [vmem:[#allocation19 + $0xd8] sm:$0xff]
    %v4061 = vld [vmem:[#allocation19 + $0xe0] sm:$0xff]
    %v4062 = vld [vmem:[#allocation19 + $0xe8] sm:$0xff]
    %v4063 = vld [vmem:[#allocation19 + $0xf0] sm:$0xff]
    %v4064 = vld [vmem:[#allocation19 + $0xf8] sm:$0xff]
    %v4065 = vld [vmem:[%s25] sm:$0x1]
    %v4067 = vperm.slane %v4065, 0
    %4069 = vmatpush.msra.mxu0 %v4048
    %4070 = vmatpush.msra.mxu0 %v4047
    %4071 = vmatpush.msra.mxu0 %v4046
    %4072 = vmatpush.msra.mxu0 %v4045
    %4073 = vmatpush.msra.mxu0 %v4044
    %4074 = vmatpush.msra.mxu0 %v4043
    %4075 = vmatpush.msra.mxu0 %v4042
    %4076 = vmatpush.msra.mxu0 %v4041
    %4077 = vmatpush.msra.mxu0 %v4040
    %4078 = vmatpush.msra.mxu0 %v4039
    %4079 = vmatpush.msra.mxu0 %v4038
    %4080 = vmatpush.msra.mxu0 %v4037
    %4081 = vmatpush.msra.mxu0 %v4036
    %4082 = vmatpush.msra.mxu0 %v4035
    %4083 = vmatpush.msra.mxu0 %v4034
    %4084 = vmatpush.msra.mxu0 %v4033
    %4085 = vmatmul.f32.gmra.mxu0 %v4031
    %v4086 = vpop.f32.mrf.mxu0
    %v4087 = vadd.f32 %v4067, %v4086
    %4088 = vdwg.mxu0
    %4089 = vmatpush.msra.mxu0 %v4064
    %4090 = vmatpush.msra.mxu0 %v4063
    %4091 = vmatpush.msra.mxu0 %v4062
    %4092 = vmatpush.msra.mxu0 %v4061
    %4093 = vmatpush.msra.mxu0 %v4060
    %4094 = vmatpush.msra.mxu0 %v4059
    %4095 = vmatpush.msra.mxu0 %v4058
    %4096 = vmatpush.msra.mxu0 %v4057
    %4097 = vmatpush.msra.mxu0 %v4056
    %4098 = vmatpush.msra.mxu0 %v4055
    %4099 = vmatpush.msra.mxu0 %v4054
    %4100 = vmatpush.msra.mxu0 %v4053
    %4101 = vmatpush.msra.mxu0 %v4052
    %4102 = vmatpush.msra.mxu0 %v4051
    %4103 = vmatpush.msra.mxu0 %v4050
    %4104 = vmatpush.msra.mxu0 %v4049
    %4105 = vmatmul.f32.gmra.mxu0 %v4032
    %v4106 = vpop.f32.mrf.mxu0
    %v4107 = vadd.f32 %v4087, %v4106
    %4108 = vdwg.mxu0
    %vm4109 = vcmp.gt.f32.partialorder %v4107, 0.0
    %v4110 = vmul.f32 %v4107, 0.1
    %v4111 = vsel %vm4109, %v4107, %v4110
    %v4112 = vld [vmem:[%s26] sm:$0xff]
    %v4113 = vld [vmem:[%s26 + $0x8] sm:$0xff]
    %v4114 = vld [vmem:[%s26 + $0x10] sm:$0xff]
    %v4115 = vld [vmem:[%s26 + $0x18] sm:$0xff]
    %v4116 = vld [vmem:[%s26 + $0x20] sm:$0xff]
    %v4117 = vld [vmem:[%s26 + $0x28] sm:$0xff]
    %v4118 = vld [vmem:[%s26 + $0x30] sm:$0xff]
    %v4119 = vld [vmem:[%s26 + $0x38] sm:$0xff]
    %v4120 = vld [vmem:[%s26 + $0x40] sm:$0xff]
    %v4121 = vld [vmem:[%s26 + $0x48] sm:$0xff]
    %v4122 = vld [vmem:[%s26 + $0x50] sm:$0xff]
    %v4123 = vld [vmem:[%s26 + $0x58] sm:$0xff]
    %v4124 = vld [vmem:[%s26 + $0x60] sm:$0xff]
    %v4125 = vld [vmem:[%s26 + $0x68] sm:$0xff]
    %v4126 = vld [vmem:[%s26 + $0x70] sm:$0xff]
    %v4127 = vld [vmem:[%s26 + $0x78] sm:$0xff]
    %v4128 = vld [vmem:[#allocation2] sm:$0x1]
    %v4130 = vperm.slane %v4128, 0
    %4132 = vmatpush.msra.mxu0 %v4127
    %4133 = vmatpush.msra.mxu0 %v4126
    %4134 = vmatpush.msra.mxu0 %v4125
    %4135 = vmatpush.msra.mxu0 %v4124
    %4136 = vmatpush.msra.mxu0 %v4123
    %4137 = vmatpush.msra.mxu0 %v4122
    %4138 = vmatpush.msra.mxu0 %v4121
    %4139 = vmatpush.msra.mxu0 %v4120
    %4140 = vmatpush.msra.mxu0 %v4119
    %4141 = vmatpush.msra.mxu0 %v4118
    %4142 = vmatpush.msra.mxu0 %v4117
    %4143 = vmatpush.msra.mxu0 %v4116
    %4144 = vmatpush.msra.mxu0 %v4115
    %4145 = vmatpush.msra.mxu0 %v4114
    %4146 = vmatpush.msra.mxu0 %v4113
    %4147 = vmatpush.msra.mxu0 %v4112
    %4148 = vmatmul.f32.gmra.mxu0 %v4111
    %v4149 = vpop.f32.mrf.mxu0
    %v4150 = vadd.f32 %v4130, %v4149
    %4151 = vdwg.mxu0
    %vm4152 = vcmask 1024
    %4153 = vst.msk [vmem:[%s28] sm:$0x3] %vm4152, %v4150
    // Predicated region
    $region158: #{deepkgi_forward.1} parent=1 // pred_check
      _
    $region159: #{deepkgi_forward.1} parent=1 // pred_check_branch
      %4155 = sbr.rel (0) target = $region161
    $region160: #{deepkgi_forward.1} parent=1 // pred_region
      _
    $region161: #{deepkgi_forward.1} parent=1 // pred_fallthru
      _
    // Predicated region
    $region162: #{deepkgi_forward.1} parent=1 // pred_check
      _
    $region163: #{deepkgi_forward.1} parent=1 // pred_check_branch
      %4157 = sbr.rel (0) target = $region165
    $region164: #{deepkgi_forward.1} parent=1 // pred_region
      _
    $region165: #{deepkgi_forward.1} parent=1 // pred_fallthru
      _
    %4158 = vsyncpa [#allocation4], 1
    %4159 = vsyncpa [#allocation6], 1
    %4160 = vsyncpa [#allocation9], 1
    %4161 = vsyncpa [#allocation12], 1
    %4162 = vsyncpa [#allocation15], 1
    %4163 = vsyncpa [#allocation18], 1

</llo_original>
